<compile_context>
chip_gen: v6e
topology: v6e:2x2x1
jax: 0.10.0
libtpu: 0.0.40
codegen_flags: <defaults>
</compile_context>

<pallas_src>
import jax
import jax.numpy as jnp
import numpy as np
from jax import lax
from jax.experimental import pallas as pl
from jax.experimental.pallas import tpu as pltpu


KSIZE = 25        # conv kernel size (from the module)
CONV_OUT = 256    # conv output channels (from the module)
N_POS = 10        # conv output spatial positions (forced by Linear(256*10, ...))


# ----------------------------------------------------------------------------
# Fused Pallas kernel: conv (as 25 windowed matmuls) + flatten + fc1 + ReLU + fc2
# ----------------------------------------------------------------------------
def _fused_kernel(x_ref, wc_ref, bc_ref, w1_ref, b1_ref, w2_ref, b2_ref, o_ref):
    # x_ref : (34, CK_pad)        f32   one sample, layout [w, c*25+kh] (padded)
    # wc_ref: (25, CK_pad, 256)   bf16  conv weight, layout [kw, c*25+kh, oc]
    # bc_ref: (1, 256)            f32   conv bias
    # w1_ref: (10, 256, H)        bf16  fc1 weight, layout [ow, oc, h]
    # b1_ref: (1, H)              f32
    # w2_ref: (H, O)              f32
    # b2_ref: (1, O)              f32
    # o_ref : (1, O)              f32

    # ---- conv: acc[ow, oc] = sum_kw x[ow+kw, :] @ wc[kw]  (f32 accumulate) ----
    acc = jnp.zeros((N_POS, CONV_OUT), jnp.float32)
    for kw in range(KSIZE):                                  # static, unrolled
        window = x_ref[kw:kw + N_POS, :].astype(jnp.bfloat16)  # (10, CK_pad)
        acc = acc + jnp.dot(window, wc_ref[kw],
                            preferred_element_type=jnp.float32)
    acc = acc + bc_ref[...]                                  # conv bias

    # ---- flatten (torch channel-major order absorbed into w1 perm) + fc1 ----
    h = b1_ref[...]                                          # (1, H) f32
    for ow in range(N_POS):                                  # static, unrolled
        row = acc[ow:ow + 1, :].astype(jnp.bfloat16)         # (1, 256)
        h = h + jnp.dot(row, w1_ref[ow],
                        preferred_element_type=jnp.float32)
    h = jnp.maximum(h, 0.0)                                  # ReLU
    # TODO(synk): training-mode Dropout(0.2) would need pltpu.prng_seed +
    # pltpu.prng_random_bits masking; eval mode -> identity.

    # ---- fc2 ----
    o_ref[...] = (jnp.dot(h, w2_ref[...], preferred_element_type=jnp.float32)
                  + b2_ref[...])


# ----------------------------------------------------------------------------
# One-time parameter preprocessing (hoisted out of the forward pass)
# ----------------------------------------------------------------------------
def preprocess_params(params):
    w_conv = params["w_conv"]                        # (256, C, 25, 25)
    c_in = w_conv.shape[1]
    ck = c_in * KSIZE
    ck_pad = 128 * ((ck + 127) // 128)               # lane-align reduction dim

    # conv weight -> [kw, c*25+kh, oc], zero-padded reduction dim, bf16
    wc = jnp.transpose(w_conv, (3, 1, 2, 0)).reshape(KSIZE, ck, CONV_OUT)
    wc = jnp.pad(wc, ((0, 0), (0, ck_pad - ck), (0, 0))).astype(jnp.bfloat16)

    # fc1 weight (2560, H): torch row index is oc*10+ow (Flatten of (256,1,10));
    # permute once to [ow, oc, h] so the kernel never transposes the conv out.
    hidden = params["w1"].shape[1]
    w1p = jnp.transpose(params["w1"].reshape(CONV_OUT, N_POS, hidden), (1, 0, 2))
    w1p = w1p.astype(jnp.bfloat16)

    return {
        "wc": wc,
        "b_conv": params["b_conv"].reshape(1, CONV_OUT).astype(jnp.float32),
        "w1": w1p,
        "b1": params["b1"].reshape(1, -1).astype(jnp.float32),
        "w2": params["w2"].astype(jnp.float32),
        "b2": params["b2"].reshape(1, -1).astype(jnp.float32),
    }


# ----------------------------------------------------------------------------
# Forward pass
# ----------------------------------------------------------------------------
def detr_loss_predictor_forward(x, prep):
    """x: (B, C_in, 25, 34) float32, NCHW (PyTorch layout)."""
    B, C, H_in, W_in = x.shape
    assert H_in == KSIZE and W_in == KSIZE + N_POS - 1, "conv output must be 1 x 10"

    ck = C * KSIZE
    ck_pad = prep["wc"].shape[1]
    hidden = prep["w1"].shape[2]
    out_dim = prep["w2"].shape[1]

    # Light per-forward relayout: NCHW -> (B, W, C*KH) puts the conv reduction
    # (c, kh) on the lane dim (~27 KB; replaces the old 10x im2col blow-up).
    xt = jnp.transpose(x, (0, 3, 1, 2)).reshape(B, W_in, ck)
    xt = jnp.pad(xt, ((0, 0), (0, 0), (0, ck_pad - ck)))

    out = pl.pallas_call(
        _fused_kernel,
        out_shape=jax.ShapeDtypeStruct((B, 1, out_dim), jnp.float32),
        grid_spec=pltpu.PrefetchScalarGridSpec(
            num_scalar_prefetch=0,
            grid=(B,),
            in_specs=[
                pl.BlockSpec((None, W_in, ck_pad), lambda b: (b, 0, 0)),       # x
                pl.BlockSpec((KSIZE, ck_pad, CONV_OUT), lambda b: (0, 0, 0)),  # wc
                pl.BlockSpec((1, CONV_OUT), lambda b: (0, 0)),                 # b_conv
                pl.BlockSpec((N_POS, CONV_OUT, hidden), lambda b: (0, 0, 0)),  # w1
                pl.BlockSpec((1, hidden), lambda b: (0, 0)),                   # b1
                pl.BlockSpec((hidden, out_dim), lambda b: (0, 0)),             # w2
                pl.BlockSpec((1, out_dim), lambda b: (0, 0)),                  # b2
            ],
            out_specs=pl.BlockSpec((None, 1, out_dim), lambda b: (b, 0, 0)),
        ),
        compiler_params=pltpu.CompilerParams(
            dimension_semantics=("parallel",)),   # v7x: shard batch over 2 TCs
    )(xt, prep["wc"], prep["b_conv"], prep["w1"], prep["b1"],
      prep["w2"], prep["b2"])

    return out.reshape(B, out_dim)


# ----------------------------------------------------------------------------
# Deterministic parameter init (torch-like layouts) and pure-JAX reference
# ----------------------------------------------------------------------------
def init_params(key, input_size, hidden_size, output_size):
    k1, k2, k3, k4, k5, k6 = jax.random.split(key, 6)
    fan_conv = input_size * KSIZE * KSIZE
    fan1 = CONV_OUT * N_POS
    return {
        "w_conv": jax.random.normal(
            k1, (CONV_OUT, input_size, KSIZE, KSIZE), jnp.float32
        ) / jnp.sqrt(fan_conv),
        "b_conv": jax.random.normal(k2, (CONV_OUT,), jnp.float32) * 0.01,
        "w1": jax.random.normal(k3, (fan1, hidden_size), jnp.float32)
        / jnp.sqrt(fan1),
        "b1": jax.random.normal(k4, (hidden_size,), jnp.float32) * 0.01,
        "w2": jax.random.normal(k5, (hidden_size, output_size), jnp.float32)
        / jnp.sqrt(hidden_size),
        "b2": jax.random.normal(k6, (output_size,), jnp.float32) * 0.01,
    }


def reference_forward(x, params):
    """Pure-JAX reference of the torch module (eval mode), with the big matmul
    operands rounded to bf16 to match the kernel's dtype policy."""
    r = lambda a: a.astype(jnp.bfloat16).astype(jnp.float32)
    conv = lax.conv_general_dilated(
        r(x), r(params["w_conv"]), window_strides=(1, 1), padding="VALID",
        dimension_numbers=("NCHW", "OIHW", "NCHW"))
    conv = conv + params["b_conv"][None, :, None, None]
    flat = conv.reshape(x.shape[0], -1)                       # torch Flatten
    h = jnp.maximum(flat @ r(params["w1"]) + params["b1"][None, :], 0.0)
    return h @ params["w2"] + params["b2"][None, :]


if __name__ == "__main__":
    key = jax.random.PRNGKey(0)
    kx, kp = jax.random.split(key)

    B, C_in, hidden, out_dim = 2, 4, 32, 1
    # spatial 25 x 34 so that Conv2d(k=25, s=1, p=0) yields 1 x 10 positions,
    # matching Linear(256 * 10, hidden).
    x = jax.random.normal(kx, (B, C_in, KSIZE, KSIZE + N_POS - 1), jnp.float32)

    params = init_params(kp, C_in, hidden, out_dim)
    prep = preprocess_params(params)              # one-time weight preprocessing

    fwd = jax.jit(detr_loss_predictor_forward)
    out = jax.block_until_ready(fwd(x, prep))

    assert out.shape == (B, out_dim)
    assert bool(jnp.all(jnp.isfinite(out)))

    ref = reference_forward(x, params)
    np.testing.assert_allclose(np.asarray(out), np.asarray(ref),
                               rtol=5e-2, atol=5e-2)

    print("KERNEL_OK")
</pallas_src>

<mosaic_0001>
module attributes {stable_mosaic.version = 11 : i64} {
  func.func @_fused_kernel(%arg0: i32, %arg1: memref<1x34x128xf32, #tpu.memory_space<vmem>>, %arg2: memref<25x128x256xbf16, #tpu.memory_space<vmem>>, %arg3: memref<1x256xf32, #tpu.memory_space<vmem>>, %arg4: memref<10x256x32xbf16, #tpu.memory_space<vmem>>, %arg5: memref<1x32xf32, #tpu.memory_space<vmem>>, %arg6: memref<32x1xf32, #tpu.memory_space<vmem>>, %arg7: memref<1x1xf32, #tpu.memory_space<vmem>>, %arg8: memref<1x1x1xf32, #tpu.memory_space<vmem>>) attributes {dimension_semantics = [#tpu.dimension_semantics<parallel>], iteration_bounds = array<i64: 2>, scalar_prefetch = 0 : i64, scratch_operands = 0 : i64, tpu.core_type = #tpu.core_type<tc>, window_params = [{transform_indices = @transform_0, window_bounds = array<i64: 1, 34, 128>}, {pipeline_mode = #tpu.pipeline_mode<synchronous>, transform_indices = @transform_1, window_bounds = array<i64: 25, 128, 256>}, {pipeline_mode = #tpu.pipeline_mode<synchronous>, transform_indices = @transform_2, window_bounds = array<i64: 1, 256>}, {pipeline_mode = #tpu.pipeline_mode<synchronous>, transform_indices = @transform_3, window_bounds = array<i64: 10, 256, 32>}, {pipeline_mode = #tpu.pipeline_mode<synchronous>, transform_indices = @transform_4, window_bounds = array<i64: 1, 32>}, {pipeline_mode = #tpu.pipeline_mode<synchronous>, transform_indices = @transform_5, window_bounds = array<i64: 32, 1>}, {pipeline_mode = #tpu.pipeline_mode<synchronous>, transform_indices = @transform_6, window_bounds = array<i64: 1, 1>}, {transform_indices = @transform_7, window_bounds = array<i64: 1, 1, 1>}]} {
    %cst = arith.constant 0.000000e+00 : f32
    %0 = vector.broadcast %cst : f32 to vector<10x256xf32>
    %c0 = arith.constant 0 : index
    %c0_0 = arith.constant 0 : index
    %c0_1 = arith.constant 0 : index
    %1 = vector.load %arg1[%c0, %c0_0, %c0_1] : memref<1x34x128xf32, #tpu.memory_space<vmem>>, vector<1x10x128xf32>
    %2 = vector.shape_cast %1 : vector<1x10x128xf32> to vector<10x128xf32>
    %3 = arith.truncf %2 : vector<10x128xf32> to vector<10x128xbf16>
    %c0_2 = arith.constant 0 : index
    %c0_3 = arith.constant 0 : index
    %c0_4 = arith.constant 0 : index
    %4 = vector.load %arg2[%c0_2, %c0_3, %c0_4] : memref<25x128x256xbf16, #tpu.memory_space<vmem>>, vector<1x128x256xbf16>
    %5 = vector.shape_cast %4 : vector<1x128x256xbf16> to vector<128x256xbf16>
    %cst_5 = arith.constant dense<0.000000e+00> : vector<10x256xf32>
    %6 = tpu.matmul %3, %5, %cst_5 {dimension_numbers = #tpu.dot_dimension_numbers<[1], [0], [0], [1], [0, 0, 1, 1], [], []>} : vector<10x128xbf16>, vector<128x256xbf16>, vector<10x256xf32> -> vector<10x256xf32>
    %7 = arith.addf %0, %6 : vector<10x256xf32>
    %c0_6 = arith.constant 0 : index
    %c1 = arith.constant 1 : index
    %c0_7 = arith.constant 0 : index
    %8 = vector.load %arg1[%c0_6, %c1, %c0_7] : memref<1x34x128xf32, #tpu.memory_space<vmem>>, vector<1x10x128xf32>
    %9 = vector.shape_cast %8 : vector<1x10x128xf32> to vector<10x128xf32>
    %10 = arith.truncf %9 : vector<10x128xf32> to vector<10x128xbf16>
    %c1_8 = arith.constant 1 : index
    %c0_9 = arith.constant 0 : index
    %c0_10 = arith.constant 0 : index
    %11 = vector.load %arg2[%c1_8, %c0_9, %c0_10] : memref<25x128x256xbf16, #tpu.memory_space<vmem>>, vector<1x128x256xbf16>
    %12 = vector.shape_cast %11 : vector<1x128x256xbf16> to vector<128x256xbf16>
    %cst_11 = arith.constant dense<0.000000e+00> : vector<10x256xf32>
    %13 = tpu.matmul %10, %12, %cst_11 {dimension_numbers = #tpu.dot_dimension_numbers<[1], [0], [0], [1], [0, 0, 1, 1], [], []>} : vector<10x128xbf16>, vector<128x256xbf16>, vector<10x256xf32> -> vector<10x256xf32>
    %14 = arith.addf %7, %13 : vector<10x256xf32>
    %c0_12 = arith.constant 0 : index
    %c2 = arith.constant 2 : index
    %c0_13 = arith.constant 0 : index
    %15 = vector.load %arg1[%c0_12, %c2, %c0_13] : memref<1x34x128xf32, #tpu.memory_space<vmem>>, vector<1x10x128xf32>
    %16 = vector.shape_cast %15 : vector<1x10x128xf32> to vector<10x128xf32>
    %17 = arith.truncf %16 : vector<10x128xf32> to vector<10x128xbf16>
    %c2_14 = arith.constant 2 : index
    %c0_15 = arith.constant 0 : index
    %c0_16 = arith.constant 0 : index
    %18 = vector.load %arg2[%c2_14, %c0_15, %c0_16] : memref<25x128x256xbf16, #tpu.memory_space<vmem>>, vector<1x128x256xbf16>
    %19 = vector.shape_cast %18 : vector<1x128x256xbf16> to vector<128x256xbf16>
    %cst_17 = arith.constant dense<0.000000e+00> : vector<10x256xf32>
    %20 = tpu.matmul %17, %19, %cst_17 {dimension_numbers = #tpu.dot_dimension_numbers<[1], [0], [0], [1], [0, 0, 1, 1], [], []>} : vector<10x128xbf16>, vector<128x256xbf16>, vector<10x256xf32> -> vector<10x256xf32>
    %21 = arith.addf %14, %20 : vector<10x256xf32>
    %c0_18 = arith.constant 0 : index
    %c3 = arith.constant 3 : index
    %c0_19 = arith.constant 0 : index
    %22 = vector.load %arg1[%c0_18, %c3, %c0_19] : memref<1x34x128xf32, #tpu.memory_space<vmem>>, vector<1x10x128xf32>
    %23 = vector.shape_cast %22 : vector<1x10x128xf32> to vector<10x128xf32>
    %24 = arith.truncf %23 : vector<10x128xf32> to vector<10x128xbf16>
    %c3_20 = arith.constant 3 : index
    %c0_21 = arith.constant 0 : index
    %c0_22 = arith.constant 0 : index
    %25 = vector.load %arg2[%c3_20, %c0_21, %c0_22] : memref<25x128x256xbf16, #tpu.memory_space<vmem>>, vector<1x128x256xbf16>
    %26 = vector.shape_cast %25 : vector<1x128x256xbf16> to vector<128x256xbf16>
    %cst_23 = arith.constant dense<0.000000e+00> : vector<10x256xf32>
    %27 = tpu.matmul %24, %26, %cst_23 {dimension_numbers = #tpu.dot_dimension_numbers<[1], [0], [0], [1], [0, 0, 1, 1], [], []>} : vector<10x128xbf16>, vector<128x256xbf16>, vector<10x256xf32> -> vector<10x256xf32>
    %28 = arith.addf %21, %27 : vector<10x256xf32>
    %c0_24 = arith.constant 0 : index
    %c4 = arith.constant 4 : index
    %c0_25 = arith.constant 0 : index
    %29 = vector.load %arg1[%c0_24, %c4, %c0_25] : memref<1x34x128xf32, #tpu.memory_space<vmem>>, vector<1x10x128xf32>
    %30 = vector.shape_cast %29 : vector<1x10x128xf32> to vector<10x128xf32>
    %31 = arith.truncf %30 : vector<10x128xf32> to vector<10x128xbf16>
    %c4_26 = arith.constant 4 : index
    %c0_27 = arith.constant 0 : index
    %c0_28 = arith.constant 0 : index
    %32 = vector.load %arg2[%c4_26, %c0_27, %c0_28] : memref<25x128x256xbf16, #tpu.memory_space<vmem>>, vector<1x128x256xbf16>
    %33 = vector.shape_cast %32 : vector<1x128x256xbf16> to vector<128x256xbf16>
    %cst_29 = arith.constant dense<0.000000e+00> : vector<10x256xf32>
    %34 = tpu.matmul %31, %33, %cst_29 {dimension_numbers = #tpu.dot_dimension_numbers<[1], [0], [0], [1], [0, 0, 1, 1], [], []>} : vector<10x128xbf16>, vector<128x256xbf16>, vector<10x256xf32> -> vector<10x256xf32>
    %35 = arith.addf %28, %34 : vector<10x256xf32>
    %c0_30 = arith.constant 0 : index
    %c5 = arith.constant 5 : index
    %c0_31 = arith.constant 0 : index
    %36 = vector.load %arg1[%c0_30, %c5, %c0_31] : memref<1x34x128xf32, #tpu.memory_space<vmem>>, vector<1x10x128xf32>
    %37 = vector.shape_cast %36 : vector<1x10x128xf32> to vector<10x128xf32>
    %38 = arith.truncf %37 : vector<10x128xf32> to vector<10x128xbf16>
    %c5_32 = arith.constant 5 : index
    %c0_33 = arith.constant 0 : index
    %c0_34 = arith.constant 0 : index
    %39 = vector.load %arg2[%c5_32, %c0_33, %c0_34] : memref<25x128x256xbf16, #tpu.memory_space<vmem>>, vector<1x128x256xbf16>
    %40 = vector.shape_cast %39 : vector<1x128x256xbf16> to vector<128x256xbf16>
    %cst_35 = arith.constant dense<0.000000e+00> : vector<10x256xf32>
    %41 = tpu.matmul %38, %40, %cst_35 {dimension_numbers = #tpu.dot_dimension_numbers<[1], [0], [0], [1], [0, 0, 1, 1], [], []>} : vector<10x128xbf16>, vector<128x256xbf16>, vector<10x256xf32> -> vector<10x256xf32>
    %42 = arith.addf %35, %41 : vector<10x256xf32>
    %c0_36 = arith.constant 0 : index
    %c6 = arith.constant 6 : index
    %c0_37 = arith.constant 0 : index
    %43 = vector.load %arg1[%c0_36, %c6, %c0_37] : memref<1x34x128xf32, #tpu.memory_space<vmem>>, vector<1x10x128xf32>
    %44 = vector.shape_cast %43 : vector<1x10x128xf32> to vector<10x128xf32>
    %45 = arith.truncf %44 : vector<10x128xf32> to vector<10x128xbf16>
    %c6_38 = arith.constant 6 : index
    %c0_39 = arith.constant 0 : index
    %c0_40 = arith.constant 0 : index
    %46 = vector.load %arg2[%c6_38, %c0_39, %c0_40] : memref<25x128x256xbf16, #tpu.memory_space<vmem>>, vector<1x128x256xbf16>
    %47 = vector.shape_cast %46 : vector<1x128x256xbf16> to vector<128x256xbf16>
    %cst_41 = arith.constant dense<0.000000e+00> : vector<10x256xf32>
    %48 = tpu.matmul %45, %47, %cst_41 {dimension_numbers = #tpu.dot_dimension_numbers<[1], [0], [0], [1], [0, 0, 1, 1], [], []>} : vector<10x128xbf16>, vector<128x256xbf16>, vector<10x256xf32> -> vector<10x256xf32>
    %49 = arith.addf %42, %48 : vector<10x256xf32>
    %c0_42 = arith.constant 0 : index
    %c7 = arith.constant 7 : index
    %c0_43 = arith.constant 0 : index
    %50 = vector.load %arg1[%c0_42, %c7, %c0_43] : memref<1x34x128xf32, #tpu.memory_space<vmem>>, vector<1x10x128xf32>
    %51 = vector.shape_cast %50 : vector<1x10x128xf32> to vector<10x128xf32>
    %52 = arith.truncf %51 : vector<10x128xf32> to vector<10x128xbf16>
    %c7_44 = arith.constant 7 : index
    %c0_45 = arith.constant 0 : index
    %c0_46 = arith.constant 0 : index
    %53 = vector.load %arg2[%c7_44, %c0_45, %c0_46] : memref<25x128x256xbf16, #tpu.memory_space<vmem>>, vector<1x128x256xbf16>
    %54 = vector.shape_cast %53 : vector<1x128x256xbf16> to vector<128x256xbf16>
    %cst_47 = arith.constant dense<0.000000e+00> : vector<10x256xf32>
    %55 = tpu.matmul %52, %54, %cst_47 {dimension_numbers = #tpu.dot_dimension_numbers<[1], [0], [0], [1], [0, 0, 1, 1], [], []>} : vector<10x128xbf16>, vector<128x256xbf16>, vector<10x256xf32> -> vector<10x256xf32>
    %56 = arith.addf %49, %55 : vector<10x256xf32>
    %c0_48 = arith.constant 0 : index
    %c8 = arith.constant 8 : index
    %c0_49 = arith.constant 0 : index
    %57 = vector.load %arg1[%c0_48, %c8, %c0_49] : memref<1x34x128xf32, #tpu.memory_space<vmem>>, vector<1x10x128xf32>
    %58 = vector.shape_cast %57 : vector<1x10x128xf32> to vector<10x128xf32>
    %59 = arith.truncf %58 : vector<10x128xf32> to vector<10x128xbf16>
    %c8_50 = arith.constant 8 : index
    %c0_51 = arith.constant 0 : index
    %c0_52 = arith.constant 0 : index
    %60 = vector.load %arg2[%c8_50, %c0_51, %c0_52] : memref<25x128x256xbf16, #tpu.memory_space<vmem>>, vector<1x128x256xbf16>
    %61 = vector.shape_cast %60 : vector<1x128x256xbf16> to vector<128x256xbf16>
    %cst_53 = arith.constant dense<0.000000e+00> : vector<10x256xf32>
    %62 = tpu.matmul %59, %61, %cst_53 {dimension_numbers = #tpu.dot_dimension_numbers<[1], [0], [0], [1], [0, 0, 1, 1], [], []>} : vector<10x128xbf16>, vector<128x256xbf16>, vector<10x256xf32> -> vector<10x256xf32>
    %63 = arith.addf %56, %62 : vector<10x256xf32>
    %c0_54 = arith.constant 0 : index
    %c9 = arith.constant 9 : index
    %c0_55 = arith.constant 0 : index
    %64 = vector.load %arg1[%c0_54, %c9, %c0_55] : memref<1x34x128xf32, #tpu.memory_space<vmem>>, vector<1x10x128xf32>
    %65 = vector.shape_cast %64 : vector<1x10x128xf32> to vector<10x128xf32>
    %66 = arith.truncf %65 : vector<10x128xf32> to vector<10x128xbf16>
    %c9_56 = arith.constant 9 : index
    %c0_57 = arith.constant 0 : index
    %c0_58 = arith.constant 0 : index
    %67 = vector.load %arg2[%c9_56, %c0_57, %c0_58] : memref<25x128x256xbf16, #tpu.memory_space<vmem>>, vector<1x128x256xbf16>
    %68 = vector.shape_cast %67 : vector<1x128x256xbf16> to vector<128x256xbf16>
    %cst_59 = arith.constant dense<0.000000e+00> : vector<10x256xf32>
    %69 = tpu.matmul %66, %68, %cst_59 {dimension_numbers = #tpu.dot_dimension_numbers<[1], [0], [0], [1], [0, 0, 1, 1], [], []>} : vector<10x128xbf16>, vector<128x256xbf16>, vector<10x256xf32> -> vector<10x256xf32>
    %70 = arith.addf %63, %69 : vector<10x256xf32>
    %c0_60 = arith.constant 0 : index
    %c10 = arith.constant 10 : index
    %c0_61 = arith.constant 0 : index
    %71 = vector.load %arg1[%c0_60, %c10, %c0_61] : memref<1x34x128xf32, #tpu.memory_space<vmem>>, vector<1x10x128xf32>
    %72 = vector.shape_cast %71 : vector<1x10x128xf32> to vector<10x128xf32>
    %73 = arith.truncf %72 : vector<10x128xf32> to vector<10x128xbf16>
    %c10_62 = arith.constant 10 : index
    %c0_63 = arith.constant 0 : index
    %c0_64 = arith.constant 0 : index
    %74 = vector.load %arg2[%c10_62, %c0_63, %c0_64] : memref<25x128x256xbf16, #tpu.memory_space<vmem>>, vector<1x128x256xbf16>
    %75 = vector.shape_cast %74 : vector<1x128x256xbf16> to vector<128x256xbf16>
    %cst_65 = arith.constant dense<0.000000e+00> : vector<10x256xf32>
    %76 = tpu.matmul %73, %75, %cst_65 {dimension_numbers = #tpu.dot_dimension_numbers<[1], [0], [0], [1], [0, 0, 1, 1], [], []>} : vector<10x128xbf16>, vector<128x256xbf16>, vector<10x256xf32> -> vector<10x256xf32>
    %77 = arith.addf %70, %76 : vector<10x256xf32>
    %c0_66 = arith.constant 0 : index
    %c11 = arith.constant 11 : index
    %c0_67 = arith.constant 0 : index
    %78 = vector.load %arg1[%c0_66, %c11, %c0_67] : memref<1x34x128xf32, #tpu.memory_space<vmem>>, vector<1x10x128xf32>
    %79 = vector.shape_cast %78 : vector<1x10x128xf32> to vector<10x128xf32>
    %80 = arith.truncf %79 : vector<10x128xf32> to vector<10x128xbf16>
    %c11_68 = arith.constant 11 : index
    %c0_69 = arith.constant 0 : index
    %c0_70 = arith.constant 0 : index
    %81 = vector.load %arg2[%c11_68, %c0_69, %c0_70] : memref<25x128x256xbf16, #tpu.memory_space<vmem>>, vector<1x128x256xbf16>
    %82 = vector.shape_cast %81 : vector<1x128x256xbf16> to vector<128x256xbf16>
    %cst_71 = arith.constant dense<0.000000e+00> : vector<10x256xf32>
    %83 = tpu.matmul %80, %82, %cst_71 {dimension_numbers = #tpu.dot_dimension_numbers<[1], [0], [0], [1], [0, 0, 1, 1], [], []>} : vector<10x128xbf16>, vector<128x256xbf16>, vector<10x256xf32> -> vector<10x256xf32>
    %84 = arith.addf %77, %83 : vector<10x256xf32>
    %c0_72 = arith.constant 0 : index
    %c12 = arith.constant 12 : index
    %c0_73 = arith.constant 0 : index
    %85 = vector.load %arg1[%c0_72, %c12, %c0_73] : memref<1x34x128xf32, #tpu.memory_space<vmem>>, vector<1x10x128xf32>
    %86 = vector.shape_cast %85 : vector<1x10x128xf32> to vector<10x128xf32>
    %87 = arith.truncf %86 : vector<10x128xf32> to vector<10x128xbf16>
    %c12_74 = arith.constant 12 : index
    %c0_75 = arith.constant 0 : index
    %c0_76 = arith.constant 0 : index
    %88 = vector.load %arg2[%c12_74, %c0_75, %c0_76] : memref<25x128x256xbf16, #tpu.memory_space<vmem>>, vector<1x128x256xbf16>
    %89 = vector.shape_cast %88 : vector<1x128x256xbf16> to vector<128x256xbf16>
    %cst_77 = arith.constant dense<0.000000e+00> : vector<10x256xf32>
    %90 = tpu.matmul %87, %89, %cst_77 {dimension_numbers = #tpu.dot_dimension_numbers<[1], [0], [0], [1], [0, 0, 1, 1], [], []>} : vector<10x128xbf16>, vector<128x256xbf16>, vector<10x256xf32> -> vector<10x256xf32>
    %91 = arith.addf %84, %90 : vector<10x256xf32>
    %c0_78 = arith.constant 0 : index
    %c13 = arith.constant 13 : index
    %c0_79 = arith.constant 0 : index
    %92 = vector.load %arg1[%c0_78, %c13, %c0_79] : memref<1x34x128xf32, #tpu.memory_space<vmem>>, vector<1x10x128xf32>
    %93 = vector.shape_cast %92 : vector<1x10x128xf32> to vector<10x128xf32>
    %94 = arith.truncf %93 : vector<10x128xf32> to vector<10x128xbf16>
    %c13_80 = arith.constant 13 : index
    %c0_81 = arith.constant 0 : index
    %c0_82 = arith.constant 0 : index
    %95 = vector.load %arg2[%c13_80, %c0_81, %c0_82] : memref<25x128x256xbf16, #tpu.memory_space<vmem>>, vector<1x128x256xbf16>
    %96 = vector.shape_cast %95 : vector<1x128x256xbf16> to vector<128x256xbf16>
    %cst_83 = arith.constant dense<0.000000e+00> : vector<10x256xf32>
    %97 = tpu.matmul %94, %96, %cst_83 {dimension_numbers = #tpu.dot_dimension_numbers<[1], [0], [0], [1], [0, 0, 1, 1], [], []>} : vector<10x128xbf16>, vector<128x256xbf16>, vector<10x256xf32> -> vector<10x256xf32>
    %98 = arith.addf %91, %97 : vector<10x256xf32>
    %c0_84 = arith.constant 0 : index
    %c14 = arith.constant 14 : index
    %c0_85 = arith.constant 0 : index
    %99 = vector.load %arg1[%c0_84, %c14, %c0_85] : memref<1x34x128xf32, #tpu.memory_space<vmem>>, vector<1x10x128xf32>
    %100 = vector.shape_cast %99 : vector<1x10x128xf32> to vector<10x128xf32>
    %101 = arith.truncf %100 : vector<10x128xf32> to vector<10x128xbf16>
    %c14_86 = arith.constant 14 : index
    %c0_87 = arith.constant 0 : index
    %c0_88 = arith.constant 0 : index
    %102 = vector.load %arg2[%c14_86, %c0_87, %c0_88] : memref<25x128x256xbf16, #tpu.memory_space<vmem>>, vector<1x128x256xbf16>
    %103 = vector.shape_cast %102 : vector<1x128x256xbf16> to vector<128x256xbf16>
    %cst_89 = arith.constant dense<0.000000e+00> : vector<10x256xf32>
    %104 = tpu.matmul %101, %103, %cst_89 {dimension_numbers = #tpu.dot_dimension_numbers<[1], [0], [0], [1], [0, 0, 1, 1], [], []>} : vector<10x128xbf16>, vector<128x256xbf16>, vector<10x256xf32> -> vector<10x256xf32>
    %105 = arith.addf %98, %104 : vector<10x256xf32>
    %c0_90 = arith.constant 0 : index
    %c15 = arith.constant 15 : index
    %c0_91 = arith.constant 0 : index
    %106 = vector.load %arg1[%c0_90, %c15, %c0_91] : memref<1x34x128xf32, #tpu.memory_space<vmem>>, vector<1x10x128xf32>
    %107 = vector.shape_cast %106 : vector<1x10x128xf32> to vector<10x128xf32>
    %108 = arith.truncf %107 : vector<10x128xf32> to vector<10x128xbf16>
    %c15_92 = arith.constant 15 : index
    %c0_93 = arith.constant 0 : index
    %c0_94 = arith.constant 0 : index
    %109 = vector.load %arg2[%c15_92, %c0_93, %c0_94] : memref<25x128x256xbf16, #tpu.memory_space<vmem>>, vector<1x128x256xbf16>
    %110 = vector.shape_cast %109 : vector<1x128x256xbf16> to vector<128x256xbf16>
    %cst_95 = arith.constant dense<0.000000e+00> : vector<10x256xf32>
    %111 = tpu.matmul %108, %110, %cst_95 {dimension_numbers = #tpu.dot_dimension_numbers<[1], [0], [0], [1], [0, 0, 1, 1], [], []>} : vector<10x128xbf16>, vector<128x256xbf16>, vector<10x256xf32> -> vector<10x256xf32>
    %112 = arith.addf %105, %111 : vector<10x256xf32>
    %c0_96 = arith.constant 0 : index
    %c16 = arith.constant 16 : index
    %c0_97 = arith.constant 0 : index
    %113 = vector.load %arg1[%c0_96, %c16, %c0_97] : memref<1x34x128xf32, #tpu.memory_space<vmem>>, vector<1x10x128xf32>
    %114 = vector.shape_cast %113 : vector<1x10x128xf32> to vector<10x128xf32>
    %115 = arith.truncf %114 : vector<10x128xf32> to vector<10x128xbf16>
    %c16_98 = arith.constant 16 : index
    %c0_99 = arith.constant 0 : index
    %c0_100 = arith.constant 0 : index
    %116 = vector.load %arg2[%c16_98, %c0_99, %c0_100] : memref<25x128x256xbf16, #tpu.memory_space<vmem>>, vector<1x128x256xbf16>
    %117 = vector.shape_cast %116 : vector<1x128x256xbf16> to vector<128x256xbf16>
    %cst_101 = arith.constant dense<0.000000e+00> : vector<10x256xf32>
    %118 = tpu.matmul %115, %117, %cst_101 {dimension_numbers = #tpu.dot_dimension_numbers<[1], [0], [0], [1], [0, 0, 1, 1], [], []>} : vector<10x128xbf16>, vector<128x256xbf16>, vector<10x256xf32> -> vector<10x256xf32>
    %119 = arith.addf %112, %118 : vector<10x256xf32>
    %c0_102 = arith.constant 0 : index
    %c17 = arith.constant 17 : index
    %c0_103 = arith.constant 0 : index
    %120 = vector.load %arg1[%c0_102, %c17, %c0_103] : memref<1x34x128xf32, #tpu.memory_space<vmem>>, vector<1x10x128xf32>
    %121 = vector.shape_cast %120 : vector<1x10x128xf32> to vector<10x128xf32>
    %122 = arith.truncf %121 : vector<10x128xf32> to vector<10x128xbf16>
    %c17_104 = arith.constant 17 : index
    %c0_105 = arith.constant 0 : index
    %c0_106 = arith.constant 0 : index
    %123 = vector.load %arg2[%c17_104, %c0_105, %c0_106] : memref<25x128x256xbf16, #tpu.memory_space<vmem>>, vector<1x128x256xbf16>
    %124 = vector.shape_cast %123 : vector<1x128x256xbf16> to vector<128x256xbf16>
    %cst_107 = arith.constant dense<0.000000e+00> : vector<10x256xf32>
    %125 = tpu.matmul %122, %124, %cst_107 {dimension_numbers = #tpu.dot_dimension_numbers<[1], [0], [0], [1], [0, 0, 1, 1], [], []>} : vector<10x128xbf16>, vector<128x256xbf16>, vector<10x256xf32> -> vector<10x256xf32>
    %126 = arith.addf %119, %125 : vector<10x256xf32>
    %c0_108 = arith.constant 0 : index
    %c18 = arith.constant 18 : index
    %c0_109 = arith.constant 0 : index
    %127 = vector.load %arg1[%c0_108, %c18, %c0_109] : memref<1x34x128xf32, #tpu.memory_space<vmem>>, vector<1x10x128xf32>
    %128 = vector.shape_cast %127 : vector<1x10x128xf32> to vector<10x128xf32>
    %129 = arith.truncf %128 : vector<10x128xf32> to vector<10x128xbf16>
    %c18_110 = arith.constant 18 : index
    %c0_111 = arith.constant 0 : index
    %c0_112 = arith.constant 0 : index
    %130 = vector.load %arg2[%c18_110, %c0_111, %c0_112] : memref<25x128x256xbf16, #tpu.memory_space<vmem>>, vector<1x128x256xbf16>
    %131 = vector.shape_cast %130 : vector<1x128x256xbf16> to vector<128x256xbf16>
    %cst_113 = arith.constant dense<0.000000e+00> : vector<10x256xf32>
    %132 = tpu.matmul %129, %131, %cst_113 {dimension_numbers = #tpu.dot_dimension_numbers<[1], [0], [0], [1], [0, 0, 1, 1], [], []>} : vector<10x128xbf16>, vector<128x256xbf16>, vector<10x256xf32> -> vector<10x256xf32>
    %133 = arith.addf %126, %132 : vector<10x256xf32>
    %c0_114 = arith.constant 0 : index
    %c19 = arith.constant 19 : index
    %c0_115 = arith.constant 0 : index
    %134 = vector.load %arg1[%c0_114, %c19, %c0_115] : memref<1x34x128xf32, #tpu.memory_space<vmem>>, vector<1x10x128xf32>
    %135 = vector.shape_cast %134 : vector<1x10x128xf32> to vector<10x128xf32>
    %136 = arith.truncf %135 : vector<10x128xf32> to vector<10x128xbf16>
    %c19_116 = arith.constant 19 : index
    %c0_117 = arith.constant 0 : index
    %c0_118 = arith.constant 0 : index
    %137 = vector.load %arg2[%c19_116, %c0_117, %c0_118] : memref<25x128x256xbf16, #tpu.memory_space<vmem>>, vector<1x128x256xbf16>
    %138 = vector.shape_cast %137 : vector<1x128x256xbf16> to vector<128x256xbf16>
    %cst_119 = arith.constant dense<0.000000e+00> : vector<10x256xf32>
    %139 = tpu.matmul %136, %138, %cst_119 {dimension_numbers = #tpu.dot_dimension_numbers<[1], [0], [0], [1], [0, 0, 1, 1], [], []>} : vector<10x128xbf16>, vector<128x256xbf16>, vector<10x256xf32> -> vector<10x256xf32>
    %140 = arith.addf %133, %139 : vector<10x256xf32>
    %c0_120 = arith.constant 0 : index
    %c20 = arith.constant 20 : index
    %c0_121 = arith.constant 0 : index
    %141 = vector.load %arg1[%c0_120, %c20, %c0_121] : memref<1x34x128xf32, #tpu.memory_space<vmem>>, vector<1x10x128xf32>
    %142 = vector.shape_cast %141 : vector<1x10x128xf32> to vector<10x128xf32>
    %143 = arith.truncf %142 : vector<10x128xf32> to vector<10x128xbf16>
    %c20_122 = arith.constant 20 : index
    %c0_123 = arith.constant 0 : index
    %c0_124 = arith.constant 0 : index
    %144 = vector.load %arg2[%c20_122, %c0_123, %c0_124] : memref<25x128x256xbf16, #tpu.memory_space<vmem>>, vector<1x128x256xbf16>
    %145 = vector.shape_cast %144 : vector<1x128x256xbf16> to vector<128x256xbf16>
    %cst_125 = arith.constant dense<0.000000e+00> : vector<10x256xf32>
    %146 = tpu.matmul %143, %145, %cst_125 {dimension_numbers = #tpu.dot_dimension_numbers<[1], [0], [0], [1], [0, 0, 1, 1], [], []>} : vector<10x128xbf16>, vector<128x256xbf16>, vector<10x256xf32> -> vector<10x256xf32>
    %147 = arith.addf %140, %146 : vector<10x256xf32>
    %c0_126 = arith.constant 0 : index
    %c21 = arith.constant 21 : index
    %c0_127 = arith.constant 0 : index
    %148 = vector.load %arg1[%c0_126, %c21, %c0_127] : memref<1x34x128xf32, #tpu.memory_space<vmem>>, vector<1x10x128xf32>
    %149 = vector.shape_cast %148 : vector<1x10x128xf32> to vector<10x128xf32>
    %150 = arith.truncf %149 : vector<10x128xf32> to vector<10x128xbf16>
    %c21_128 = arith.constant 21 : index
    %c0_129 = arith.constant 0 : index
    %c0_130 = arith.constant 0 : index
    %151 = vector.load %arg2[%c21_128, %c0_129, %c0_130] : memref<25x128x256xbf16, #tpu.memory_space<vmem>>, vector<1x128x256xbf16>
    %152 = vector.shape_cast %151 : vector<1x128x256xbf16> to vector<128x256xbf16>
    %cst_131 = arith.constant dense<0.000000e+00> : vector<10x256xf32>
    %153 = tpu.matmul %150, %152, %cst_131 {dimension_numbers = #tpu.dot_dimension_numbers<[1], [0], [0], [1], [0, 0, 1, 1], [], []>} : vector<10x128xbf16>, vector<128x256xbf16>, vector<10x256xf32> -> vector<10x256xf32>
    %154 = arith.addf %147, %153 : vector<10x256xf32>
    %c0_132 = arith.constant 0 : index
    %c22 = arith.constant 22 : index
    %c0_133 = arith.constant 0 : index
    %155 = vector.load %arg1[%c0_132, %c22, %c0_133] : memref<1x34x128xf32, #tpu.memory_space<vmem>>, vector<1x10x128xf32>
    %156 = vector.shape_cast %155 : vector<1x10x128xf32> to vector<10x128xf32>
    %157 = arith.truncf %156 : vector<10x128xf32> to vector<10x128xbf16>
    %c22_134 = arith.constant 22 : index
    %c0_135 = arith.constant 0 : index
    %c0_136 = arith.constant 0 : index
    %158 = vector.load %arg2[%c22_134, %c0_135, %c0_136] : memref<25x128x256xbf16, #tpu.memory_space<vmem>>, vector<1x128x256xbf16>
    %159 = vector.shape_cast %158 : vector<1x128x256xbf16> to vector<128x256xbf16>
    %cst_137 = arith.constant dense<0.000000e+00> : vector<10x256xf32>
    %160 = tpu.matmul %157, %159, %cst_137 {dimension_numbers = #tpu.dot_dimension_numbers<[1], [0], [0], [1], [0, 0, 1, 1], [], []>} : vector<10x128xbf16>, vector<128x256xbf16>, vector<10x256xf32> -> vector<10x256xf32>
    %161 = arith.addf %154, %160 : vector<10x256xf32>
    %c0_138 = arith.constant 0 : index
    %c23 = arith.constant 23 : index
    %c0_139 = arith.constant 0 : index
    %162 = vector.load %arg1[%c0_138, %c23, %c0_139] : memref<1x34x128xf32, #tpu.memory_space<vmem>>, vector<1x10x128xf32>
    %163 = vector.shape_cast %162 : vector<1x10x128xf32> to vector<10x128xf32>
    %164 = arith.truncf %163 : vector<10x128xf32> to vector<10x128xbf16>
    %c23_140 = arith.constant 23 : index
    %c0_141 = arith.constant 0 : index
    %c0_142 = arith.constant 0 : index
    %165 = vector.load %arg2[%c23_140, %c0_141, %c0_142] : memref<25x128x256xbf16, #tpu.memory_space<vmem>>, vector<1x128x256xbf16>
    %166 = vector.shape_cast %165 : vector<1x128x256xbf16> to vector<128x256xbf16>
    %cst_143 = arith.constant dense<0.000000e+00> : vector<10x256xf32>
    %167 = tpu.matmul %164, %166, %cst_143 {dimension_numbers = #tpu.dot_dimension_numbers<[1], [0], [0], [1], [0, 0, 1, 1], [], []>} : vector<10x128xbf16>, vector<128x256xbf16>, vector<10x256xf32> -> vector<10x256xf32>
    %168 = arith.addf %161, %167 : vector<10x256xf32>
    %c0_144 = arith.constant 0 : index
    %c24 = arith.constant 24 : index
    %c0_145 = arith.constant 0 : index
    %169 = vector.load %arg1[%c0_144, %c24, %c0_145] : memref<1x34x128xf32, #tpu.memory_space<vmem>>, vector<1x10x128xf32>
    %170 = vector.shape_cast %169 : vector<1x10x128xf32> to vector<10x128xf32>
    %171 = arith.truncf %170 : vector<10x128xf32> to vector<10x128xbf16>
    %c24_146 = arith.constant 24 : index
    %c0_147 = arith.constant 0 : index
    %c0_148 = arith.constant 0 : index
    %172 = vector.load %arg2[%c24_146, %c0_147, %c0_148] : memref<25x128x256xbf16, #tpu.memory_space<vmem>>, vector<1x128x256xbf16>
    %173 = vector.shape_cast %172 : vector<1x128x256xbf16> to vector<128x256xbf16>
    %cst_149 = arith.constant dense<0.000000e+00> : vector<10x256xf32>
    %174 = tpu.matmul %171, %173, %cst_149 {dimension_numbers = #tpu.dot_dimension_numbers<[1], [0], [0], [1], [0, 0, 1, 1], [], []>} : vector<10x128xbf16>, vector<128x256xbf16>, vector<10x256xf32> -> vector<10x256xf32>
    %175 = arith.addf %168, %174 : vector<10x256xf32>
    %c0_150 = arith.constant 0 : index
    %c0_151 = arith.constant 0 : index
    %176 = vector.load %arg3[%c0_150, %c0_151] : memref<1x256xf32, #tpu.memory_space<vmem>>, vector<1x256xf32>
    %177 = vector.broadcast %176 : vector<1x256xf32> to vector<10x256xf32>
    %178 = arith.addf %175, %177 : vector<10x256xf32>
    %c0_152 = arith.constant 0 : index
    %c0_153 = arith.constant 0 : index
    %179 = vector.load %arg5[%c0_152, %c0_153] : memref<1x32xf32, #tpu.memory_space<vmem>>, vector<1x32xf32>
    %180 = vector.extract_strided_slice %178 {offsets = [0, 0], sizes = [1, 256], strides = [1, 1]} : vector<10x256xf32> to vector<1x256xf32>
    %181 = arith.truncf %180 : vector<1x256xf32> to vector<1x256xbf16>
    %c0_154 = arith.constant 0 : index
    %c0_155 = arith.constant 0 : index
    %c0_156 = arith.constant 0 : index
    %182 = vector.load %arg4[%c0_154, %c0_155, %c0_156] : memref<10x256x32xbf16, #tpu.memory_space<vmem>>, vector<1x256x32xbf16>
    %183 = vector.shape_cast %182 : vector<1x256x32xbf16> to vector<256x32xbf16>
    %cst_157 = arith.constant dense<0.000000e+00> : vector<1x32xf32>
    %184 = tpu.matmul %181, %183, %cst_157 {dimension_numbers = #tpu.dot_dimension_numbers<[1], [0], [0], [1], [0, 0, 1, 1], [], []>} : vector<1x256xbf16>, vector<256x32xbf16>, vector<1x32xf32> -> vector<1x32xf32>
    %185 = arith.addf %179, %184 : vector<1x32xf32>
    %186 = vector.extract_strided_slice %178 {offsets = [1, 0], sizes = [1, 256], strides = [1, 1]} : vector<10x256xf32> to vector<1x256xf32>
    %187 = arith.truncf %186 : vector<1x256xf32> to vector<1x256xbf16>
    %c1_158 = arith.constant 1 : index
    %c0_159 = arith.constant 0 : index
    %c0_160 = arith.constant 0 : index
    %188 = vector.load %arg4[%c1_158, %c0_159, %c0_160] : memref<10x256x32xbf16, #tpu.memory_space<vmem>>, vector<1x256x32xbf16>
    %189 = vector.shape_cast %188 : vector<1x256x32xbf16> to vector<256x32xbf16>
    %cst_161 = arith.constant dense<0.000000e+00> : vector<1x32xf32>
    %190 = tpu.matmul %187, %189, %cst_161 {dimension_numbers = #tpu.dot_dimension_numbers<[1], [0], [0], [1], [0, 0, 1, 1], [], []>} : vector<1x256xbf16>, vector<256x32xbf16>, vector<1x32xf32> -> vector<1x32xf32>
    %191 = arith.addf %185, %190 : vector<1x32xf32>
    %192 = vector.extract_strided_slice %178 {offsets = [2, 0], sizes = [1, 256], strides = [1, 1]} : vector<10x256xf32> to vector<1x256xf32>
    %193 = arith.truncf %192 : vector<1x256xf32> to vector<1x256xbf16>
    %c2_162 = arith.constant 2 : index
    %c0_163 = arith.constant 0 : index
    %c0_164 = arith.constant 0 : index
    %194 = vector.load %arg4[%c2_162, %c0_163, %c0_164] : memref<10x256x32xbf16, #tpu.memory_space<vmem>>, vector<1x256x32xbf16>
    %195 = vector.shape_cast %194 : vector<1x256x32xbf16> to vector<256x32xbf16>
    %cst_165 = arith.constant dense<0.000000e+00> : vector<1x32xf32>
    %196 = tpu.matmul %193, %195, %cst_165 {dimension_numbers = #tpu.dot_dimension_numbers<[1], [0], [0], [1], [0, 0, 1, 1], [], []>} : vector<1x256xbf16>, vector<256x32xbf16>, vector<1x32xf32> -> vector<1x32xf32>
    %197 = arith.addf %191, %196 : vector<1x32xf32>
    %198 = vector.extract_strided_slice %178 {offsets = [3, 0], sizes = [1, 256], strides = [1, 1]} : vector<10x256xf32> to vector<1x256xf32>
    %199 = arith.truncf %198 : vector<1x256xf32> to vector<1x256xbf16>
    %c3_166 = arith.constant 3 : index
    %c0_167 = arith.constant 0 : index
    %c0_168 = arith.constant 0 : index
    %200 = vector.load %arg4[%c3_166, %c0_167, %c0_168] : memref<10x256x32xbf16, #tpu.memory_space<vmem>>, vector<1x256x32xbf16>
    %201 = vector.shape_cast %200 : vector<1x256x32xbf16> to vector<256x32xbf16>
    %cst_169 = arith.constant dense<0.000000e+00> : vector<1x32xf32>
    %202 = tpu.matmul %199, %201, %cst_169 {dimension_numbers = #tpu.dot_dimension_numbers<[1], [0], [0], [1], [0, 0, 1, 1], [], []>} : vector<1x256xbf16>, vector<256x32xbf16>, vector<1x32xf32> -> vector<1x32xf32>
    %203 = arith.addf %197, %202 : vector<1x32xf32>
    %204 = vector.extract_strided_slice %178 {offsets = [4, 0], sizes = [1, 256], strides = [1, 1]} : vector<10x256xf32> to vector<1x256xf32>
    %205 = arith.truncf %204 : vector<1x256xf32> to vector<1x256xbf16>
    %c4_170 = arith.constant 4 : index
    %c0_171 = arith.constant 0 : index
    %c0_172 = arith.constant 0 : index
    %206 = vector.load %arg4[%c4_170, %c0_171, %c0_172] : memref<10x256x32xbf16, #tpu.memory_space<vmem>>, vector<1x256x32xbf16>
    %207 = vector.shape_cast %206 : vector<1x256x32xbf16> to vector<256x32xbf16>
    %cst_173 = arith.constant dense<0.000000e+00> : vector<1x32xf32>
    %208 = tpu.matmul %205, %207, %cst_173 {dimension_numbers = #tpu.dot_dimension_numbers<[1], [0], [0], [1], [0, 0, 1, 1], [], []>} : vector<1x256xbf16>, vector<256x32xbf16>, vector<1x32xf32> -> vector<1x32xf32>
    %209 = arith.addf %203, %208 : vector<1x32xf32>
    %210 = vector.extract_strided_slice %178 {offsets = [5, 0], sizes = [1, 256], strides = [1, 1]} : vector<10x256xf32> to vector<1x256xf32>
    %211 = arith.truncf %210 : vector<1x256xf32> to vector<1x256xbf16>
    %c5_174 = arith.constant 5 : index
    %c0_175 = arith.constant 0 : index
    %c0_176 = arith.constant 0 : index
    %212 = vector.load %arg4[%c5_174, %c0_175, %c0_176] : memref<10x256x32xbf16, #tpu.memory_space<vmem>>, vector<1x256x32xbf16>
    %213 = vector.shape_cast %212 : vector<1x256x32xbf16> to vector<256x32xbf16>
    %cst_177 = arith.constant dense<0.000000e+00> : vector<1x32xf32>
    %214 = tpu.matmul %211, %213, %cst_177 {dimension_numbers = #tpu.dot_dimension_numbers<[1], [0], [0], [1], [0, 0, 1, 1], [], []>} : vector<1x256xbf16>, vector<256x32xbf16>, vector<1x32xf32> -> vector<1x32xf32>
    %215 = arith.addf %209, %214 : vector<1x32xf32>
    %216 = vector.extract_strided_slice %178 {offsets = [6, 0], sizes = [1, 256], strides = [1, 1]} : vector<10x256xf32> to vector<1x256xf32>
    %217 = arith.truncf %216 : vector<1x256xf32> to vector<1x256xbf16>
    %c6_178 = arith.constant 6 : index
    %c0_179 = arith.constant 0 : index
    %c0_180 = arith.constant 0 : index
    %218 = vector.load %arg4[%c6_178, %c0_179, %c0_180] : memref<10x256x32xbf16, #tpu.memory_space<vmem>>, vector<1x256x32xbf16>
    %219 = vector.shape_cast %218 : vector<1x256x32xbf16> to vector<256x32xbf16>
    %cst_181 = arith.constant dense<0.000000e+00> : vector<1x32xf32>
    %220 = tpu.matmul %217, %219, %cst_181 {dimension_numbers = #tpu.dot_dimension_numbers<[1], [0], [0], [1], [0, 0, 1, 1], [], []>} : vector<1x256xbf16>, vector<256x32xbf16>, vector<1x32xf32> -> vector<1x32xf32>
    %221 = arith.addf %215, %220 : vector<1x32xf32>
    %222 = vector.extract_strided_slice %178 {offsets = [7, 0], sizes = [1, 256], strides = [1, 1]} : vector<10x256xf32> to vector<1x256xf32>
    %223 = arith.truncf %222 : vector<1x256xf32> to vector<1x256xbf16>
    %c7_182 = arith.constant 7 : index
    %c0_183 = arith.constant 0 : index
    %c0_184 = arith.constant 0 : index
    %224 = vector.load %arg4[%c7_182, %c0_183, %c0_184] : memref<10x256x32xbf16, #tpu.memory_space<vmem>>, vector<1x256x32xbf16>
    %225 = vector.shape_cast %224 : vector<1x256x32xbf16> to vector<256x32xbf16>
    %cst_185 = arith.constant dense<0.000000e+00> : vector<1x32xf32>
    %226 = tpu.matmul %223, %225, %cst_185 {dimension_numbers = #tpu.dot_dimension_numbers<[1], [0], [0], [1], [0, 0, 1, 1], [], []>} : vector<1x256xbf16>, vector<256x32xbf16>, vector<1x32xf32> -> vector<1x32xf32>
    %227 = arith.addf %221, %226 : vector<1x32xf32>
    %228 = vector.extract_strided_slice %178 {offsets = [8, 0], sizes = [1, 256], strides = [1, 1]} : vector<10x256xf32> to vector<1x256xf32>
    %229 = arith.truncf %228 : vector<1x256xf32> to vector<1x256xbf16>
    %c8_186 = arith.constant 8 : index
    %c0_187 = arith.constant 0 : index
    %c0_188 = arith.constant 0 : index
    %230 = vector.load %arg4[%c8_186, %c0_187, %c0_188] : memref<10x256x32xbf16, #tpu.memory_space<vmem>>, vector<1x256x32xbf16>
    %231 = vector.shape_cast %230 : vector<1x256x32xbf16> to vector<256x32xbf16>
    %cst_189 = arith.constant dense<0.000000e+00> : vector<1x32xf32>
    %232 = tpu.matmul %229, %231, %cst_189 {dimension_numbers = #tpu.dot_dimension_numbers<[1], [0], [0], [1], [0, 0, 1, 1], [], []>} : vector<1x256xbf16>, vector<256x32xbf16>, vector<1x32xf32> -> vector<1x32xf32>
    %233 = arith.addf %227, %232 : vector<1x32xf32>
    %234 = vector.extract_strided_slice %178 {offsets = [9, 0], sizes = [1, 256], strides = [1, 1]} : vector<10x256xf32> to vector<1x256xf32>
    %235 = arith.truncf %234 : vector<1x256xf32> to vector<1x256xbf16>
    %c9_190 = arith.constant 9 : index
    %c0_191 = arith.constant 0 : index
    %c0_192 = arith.constant 0 : index
    %236 = vector.load %arg4[%c9_190, %c0_191, %c0_192] : memref<10x256x32xbf16, #tpu.memory_space<vmem>>, vector<1x256x32xbf16>
    %237 = vector.shape_cast %236 : vector<1x256x32xbf16> to vector<256x32xbf16>
    %cst_193 = arith.constant dense<0.000000e+00> : vector<1x32xf32>
    %238 = tpu.matmul %235, %237, %cst_193 {dimension_numbers = #tpu.dot_dimension_numbers<[1], [0], [0], [1], [0, 0, 1, 1], [], []>} : vector<1x256xbf16>, vector<256x32xbf16>, vector<1x32xf32> -> vector<1x32xf32>
    %239 = arith.addf %233, %238 : vector<1x32xf32>
    %cst_194 = arith.constant 0.000000e+00 : f32
    %240 = vector.broadcast %cst_194 : f32 to vector<1x32xf32>
    %241 = arith.maximumf %239, %240 : vector<1x32xf32>
    %c0_195 = arith.constant 0 : index
    %c0_196 = arith.constant 0 : index
    %242 = vector.load %arg6[%c0_195, %c0_196] : memref<32x1xf32, #tpu.memory_space<vmem>>, vector<32x1xf32>
    %cst_197 = arith.constant dense<0.000000e+00> : vector<1x1xf32>
    %243 = tpu.matmul %241, %242, %cst_197 {dimension_numbers = #tpu.dot_dimension_numbers<[1], [0], [0], [1], [0, 0, 1, 1], [], []>} : vector<1x32xf32>, vector<32x1xf32>, vector<1x1xf32> -> vector<1x1xf32>
    %c0_198 = arith.constant 0 : index
    %c0_199 = arith.constant 0 : index
    %244 = vector.load %arg7[%c0_198, %c0_199] : memref<1x1xf32, #tpu.memory_space<vmem>>, vector<1x1xf32>
    %245 = arith.addf %243, %244 : vector<1x1xf32>
    %c0_200 = arith.constant 0 : index
    %c0_201 = arith.constant 0 : index
    %c0_202 = arith.constant 0 : index
    %246 = vector.load %arg8[%c0_200, %c0_201, %c0_202] : memref<1x1x1xf32, #tpu.memory_space<vmem>>, vector<1x1x1xf32>
    %247 = vector.shape_cast %246 : vector<1x1x1xf32> to vector<1x1xf32>
    %248 = vector.shape_cast %245 : vector<1x1xf32> to vector<1x1x1xf32>
    tpu.vector_store %arg8[%c0_200, %c0_201, %c0_202], %248 {strides = array<i32>} : memref<1x1x1xf32, #tpu.memory_space<vmem>>, vector<1x1x1xf32>,
    return
  }
  func.func @transform_0(%arg0: i32) -> (i32, i32, i32) {
    %c0_i32 = arith.constant 0 : i32
    %c0_i32_0 = arith.constant 0 : i32
    %c0_i32_1 = arith.constant 0 : i32
    return %arg0, %c0_i32, %c0_i32_0 : i32, i32, i32
  }
  func.func @transform_1(%arg0: i32) -> (i32, i32, i32) {
    %c0_i32 = arith.constant 0 : i32
    %c0_i32_0 = arith.constant 0 : i32
    %c0_i32_1 = arith.constant 0 : i32
    %c0_i32_2 = arith.constant 0 : i32
    return %c0_i32, %c0_i32_0, %c0_i32_1 : i32, i32, i32
  }
  func.func @transform_2(%arg0: i32) -> (i32, i32) {
    %c0_i32 = arith.constant 0 : i32
    %c0_i32_0 = arith.constant 0 : i32
    %c0_i32_1 = arith.constant 0 : i32
    return %c0_i32, %c0_i32_0 : i32, i32
  }
  func.func @transform_3(%arg0: i32) -> (i32, i32, i32) {
    %c0_i32 = arith.constant 0 : i32
    %c0_i32_0 = arith.constant 0 : i32
    %c0_i32_1 = arith.constant 0 : i32
    %c0_i32_2 = arith.constant 0 : i32
    return %c0_i32, %c0_i32_0, %c0_i32_1 : i32, i32, i32
  }
  func.func @transform_4(%arg0: i32) -> (i32, i32) {
    %c0_i32 = arith.constant 0 : i32
    %c0_i32_0 = arith.constant 0 : i32
    %c0_i32_1 = arith.constant 0 : i32
    return %c0_i32, %c0_i32_0 : i32, i32
  }
  func.func @transform_5(%arg0: i32) -> (i32, i32) {
    %c0_i32 = arith.constant 0 : i32
    %c0_i32_0 = arith.constant 0 : i32
    %c0_i32_1 = arith.constant 0 : i32
    return %c0_i32, %c0_i32_0 : i32, i32
  }
  func.func @transform_6(%arg0: i32) -> (i32, i32) {
    %c0_i32 = arith.constant 0 : i32
    %c0_i32_0 = arith.constant 0 : i32
    %c0_i32_1 = arith.constant 0 : i32
    return %c0_i32, %c0_i32_0 : i32, i32
  }
  func.func @transform_7(%arg0: i32) -> (i32, i32, i32) {
    %c0_i32 = arith.constant 0 : i32
    %c0_i32_0 = arith.constant 0 : i32
    %c0_i32_1 = arith.constant 0 : i32
    return %arg0, %c0_i32, %c0_i32_0 : i32, i32, i32
  }
}

</mosaic_0001>

<llo_original>
// kernel: detr_loss_predictor_forward.1
$region0: #{detr_loss_predictor_forward.1}
  #allocation0 [shape = 'u32[]', space=smem, size = 0x4, offset = 0x4, fixed_abs, tag = 'smem constant byte address 0x4 - core index']
  #allocation1 [shape = 'u32[144,128]{1,0:T(1,128)}', space=vmem, size = 0x12000, scoped, tag = 'internal scratch']
  #allocation2 [shape = 'f32[1,1]{1,0:T(1,128)S(1)}', space=vmem, size = 0x200, scoped, tag = 'scoped memory for detr_loss_predictor_forward.1']
  %s0 = inlined_call_operand.vmem [shape: f32[2,34,128], index: 0, kind: input, shape index: {}]
  %s1 = inlined_call_operand.hbm [shape: bf16[25,128,256], index: 1, kind: input, shape index: {}]
  %s2 = inlined_call_operand.hbm [shape: f32[1,256], index: 2, kind: input, shape index: {}]
  %s3 = inlined_call_operand.vmem [shape: bf16[10,256,32], index: 3, kind: input, shape index: {}]
  %s4 = inlined_call_operand.hbm [shape: f32[1,32], index: 4, kind: input, shape index: {}]
  %s5 = inlined_call_operand.vmem [shape: f32[32,1], index: 5, kind: input, shape index: {}]
  %s6 = inlined_call_operand.<no memory space> [shape: f32[1,1], index: 6, kind: input, shape index: {}]
  %s7 = inlined_call_operand.vmem [shape: f32[2,1,1], index: 7, kind: output, shape index: {}]
  %s8 = sld [smem:[#allocation0]]
  $region73: #{detr_loss_predictor_forward.1} parent=0
    _
  %s10 = ssub.s32 1, %s8
  %s11 = scalar_select 0, %s10, %s8
  %v12 = vstv %s6
  %13 = vst [vmem:[#allocation2] sm:$0x1] %v12
  $region1: #{detr_loss_predictor_forward.1} parent=0
    #allocation3 [shape = 'u8[1638400]{0}', space=vmem, size = 0x190000, scoped, tag = 'input window, operand 1, single buffered']
    #allocation4 [shape = 's32[2]{0}', space=sflag, size = 0x8, scoped, tag = 'scoped memory for detr_loss_predictor_forward.1']
    #allocation5 [shape = 'u8[1024]{0}', space=vmem, size = 0x400, scoped, tag = 'input window, operand 2, single buffered']
    #allocation6 [shape = 's32[1]{0}', space=sflag, size = 0x4, scoped, tag = 'scoped memory for detr_loss_predictor_forward.1']
    #allocation7 [shape = 'u8[512]{0}', space=vmem, size = 0x400, scoped, tag = 'input window, operand 4, single buffered']
    %14 = vsyncpa [#allocation4], 0
    %15 = vsyncpa [#allocation6], 0
    loop: start=0, step=1, limit=4
    $region2: #{detr_loss_predictor_forward.1} parent=1 // loop_pre_header
      _
    $region3: #{detr_loss_predictor_forward.1} parent=1 // loop_header
      %s17 = sphi 0, %s21
      %p18 = scmp.ge.s32.totalorder %s17, 4
      %s27 = sphi 0, %s29
      %s30 = sphi 0, %s27
      %s31 = sphi 0, %s30
      %s47 = sphi 0, %s31
      %s51 = sphi 0, %s51
      %s53 = sphi 0, %s51
      %s54 = sphi 0, %s53
      %s68 = sphi 0, %s54
      %s72 = sphi 0, %s72
      %s74 = sphi 0, %s72
      %s75 = sphi 0, %s74
      %s89 = sphi 0, %s75
      %s93 = sphi 0, %s93
      %s95 = sphi 0, %s93
      %s96 = sphi 0, %s95
      %s110 = sphi 0, %s96
      %s114 = sphi 0, %s114
      %s116 = sphi 0, %s114
      %s117 = sphi 0, %s116
      %s131 = sphi 0, %s117
      %s135 = sphi 0, %s135
      %s137 = sphi 0, %s135
      %s138 = sphi 0, %s137
      %s152 = sphi 0, %s138
      %s156 = sphi 0, %s156
      %s158 = sphi 0, %s156
      %s159 = sphi 0, %s158
      %s173 = sphi 0, %s159
      %s179 = sphi 0, %s181
      %s182 = sphi 0, %s179
      %s183 = sphi 0, %s182
      %s199 = sphi 0, %s183
    $region4: #{detr_loss_predictor_forward.1} parent=1 // loop_header_branch
      %20 = sbr.rel (%p18) target = $region8
    $region5: #{detr_loss_predictor_forward.1} parent=1 // loop_body
      %s22 = ssub.s32 %s17, 1
      %s23 = ssub.s32 %s17, 2
      %s24 = sadd.s32 %s17, 1
      %s25 = ssub.s32 %s17, %s24
      %p26 = scmp.eq.s32.totalorder %s25, 0
      %s28 = sadd.s32 %s27, 1
      %s29 = scalar_select %p26, %s27, %s28
      %p32 = pneg %p26
      %p33 = scmp.eq.s32.totalorder %s17, 1
      %p34 = por %p32, %p33
      %p35 = scmp.ne.s32.totalorder %s27, %s30
      %p36 = scmp.eq.s32.totalorder %s17, 0
      %p37 = por %p35, %p36
      %p38 = scmp.ne.s32.totalorder %s27, %s30
      %p39 = scmp.eq.s32.totalorder %s22, 1
      %p40 = por %p38, %p39
      %p41 = scmp.ne.s32.totalorder %s30, %s31
      %p42 = scmp.eq.s32.totalorder %s22, 0
      %p43 = por %p41, %p42
      %p44 = scmp.ne.s32.totalorder %s30, %s31
      %p45 = scmp.eq.s32.totalorder %s23, 1
      %p46 = por %p44, %p45
      %p48 = scmp.ne.s32.totalorder %s31, %s47
      %p49 = scmp.eq.s32.totalorder %s23, 0
      %p50 = por %p48, %p49
      %s52 = sadd.s32 %s51, 1
      %p55 = scmp.eq.s32.totalorder %s17, 1
      %p56 = scmp.ne.s32.totalorder %s51, %s53
      %p57 = scmp.eq.s32.totalorder %s17, 0
      %p58 = por %p56, %p57
      %p59 = scmp.ne.s32.totalorder %s51, %s53
      %p60 = scmp.eq.s32.totalorder %s22, 1
      %p61 = por %p59, %p60
      %p62 = scmp.ne.s32.totalorder %s53, %s54
      %p63 = scmp.eq.s32.totalorder %s22, 0
      %p64 = por %p62, %p63
      %p65 = scmp.ne.s32.totalorder %s53, %s54
      %p66 = scmp.eq.s32.totalorder %s23, 1
      %p67 = por %p65, %p66
      %p69 = scmp.ne.s32.totalorder %s54, %s68
      %p70 = scmp.eq.s32.totalorder %s23, 0
      %p71 = por %p69, %p70
      %s73 = sadd.s32 %s72, 1
      %p76 = scmp.eq.s32.totalorder %s17, 1
      %p77 = scmp.ne.s32.totalorder %s72, %s74
      %p78 = scmp.eq.s32.totalorder %s17, 0
      %p79 = por %p77, %p78
      %p80 = scmp.ne.s32.totalorder %s72, %s74
      %p81 = scmp.eq.s32.totalorder %s22, 1
      %p82 = por %p80, %p81
      %p83 = scmp.ne.s32.totalorder %s74, %s75
      %p84 = scmp.eq.s32.totalorder %s22, 0
      %p85 = por %p83, %p84
      %p86 = scmp.ne.s32.totalorder %s74, %s75
      %p87 = scmp.eq.s32.totalorder %s23, 1
      %p88 = por %p86, %p87
      %p90 = scmp.ne.s32.totalorder %s75, %s89
      %p91 = scmp.eq.s32.totalorder %s23, 0
      %p92 = por %p90, %p91
      %s94 = sadd.s32 %s93, 1
      %p97 = scmp.eq.s32.totalorder %s17, 1
      %p98 = scmp.ne.s32.totalorder %s93, %s95
      %p99 = scmp.eq.s32.totalorder %s17, 0
      %p100 = por %p98, %p99
      %p101 = scmp.ne.s32.totalorder %s93, %s95
      %p102 = scmp.eq.s32.totalorder %s22, 1
      %p103 = por %p101, %p102
      %p104 = scmp.ne.s32.totalorder %s95, %s96
      %p105 = scmp.eq.s32.totalorder %s22, 0
      %p106 = por %p104, %p105
      %p107 = scmp.ne.s32.totalorder %s95, %s96
      %p108 = scmp.eq.s32.totalorder %s23, 1
      %p109 = por %p107, %p108
      %p111 = scmp.ne.s32.totalorder %s96, %s110
      %p112 = scmp.eq.s32.totalorder %s23, 0
      %p113 = por %p111, %p112
      %s115 = sadd.s32 %s114, 1
      %p118 = scmp.eq.s32.totalorder %s17, 1
      %p119 = scmp.ne.s32.totalorder %s114, %s116
      %p120 = scmp.eq.s32.totalorder %s17, 0
      %p121 = por %p119, %p120
      %p122 = scmp.ne.s32.totalorder %s114, %s116
      %p123 = scmp.eq.s32.totalorder %s22, 1
      %p124 = por %p122, %p123
      %p125 = scmp.ne.s32.totalorder %s116, %s117
      %p126 = scmp.eq.s32.totalorder %s22, 0
      %p127 = por %p125, %p126
      %p128 = scmp.ne.s32.totalorder %s116, %s117
      %p129 = scmp.eq.s32.totalorder %s23, 1
      %p130 = por %p128, %p129
      %p132 = scmp.ne.s32.totalorder %s117, %s131
      %p133 = scmp.eq.s32.totalorder %s23, 0
      %p134 = por %p132, %p133
      %s136 = sadd.s32 %s135, 1
      %p139 = scmp.eq.s32.totalorder %s17, 1
      %p140 = scmp.ne.s32.totalorder %s135, %s137
      %p141 = scmp.eq.s32.totalorder %s17, 0
      %p142 = por %p140, %p141
      %p143 = scmp.ne.s32.totalorder %s135, %s137
      %p144 = scmp.eq.s32.totalorder %s22, 1
      %p145 = por %p143, %p144
      %p146 = scmp.ne.s32.totalorder %s137, %s138
      %p147 = scmp.eq.s32.totalorder %s22, 0
      %p148 = por %p146, %p147
      %p149 = scmp.ne.s32.totalorder %s137, %s138
      %p150 = scmp.eq.s32.totalorder %s23, 1
      %p151 = por %p149, %p150
      %p153 = scmp.ne.s32.totalorder %s138, %s152
      %p154 = scmp.eq.s32.totalorder %s23, 0
      %p155 = por %p153, %p154
      %s157 = sadd.s32 %s156, 1
      %p160 = scmp.eq.s32.totalorder %s17, 1
      %p161 = scmp.ne.s32.totalorder %s156, %s158
      %p162 = scmp.eq.s32.totalorder %s17, 0
      %p163 = por %p161, %p162
      %p164 = scmp.ne.s32.totalorder %s156, %s158
      %p165 = scmp.eq.s32.totalorder %s22, 1
      %p166 = por %p164, %p165
      %p167 = scmp.ne.s32.totalorder %s158, %s159
      %p168 = scmp.eq.s32.totalorder %s22, 0
      %p169 = por %p167, %p168
      %p170 = scmp.ne.s32.totalorder %s158, %s159
      %p171 = scmp.eq.s32.totalorder %s23, 1
      %p172 = por %p170, %p171
      %p174 = scmp.ne.s32.totalorder %s159, %s173
      %p175 = scmp.eq.s32.totalorder %s23, 0
      %p176 = por %p174, %p175
      %s177 = ssub.s32 %s17, %s24
      %p178 = scmp.eq.s32.totalorder %s177, 0
      %s180 = sadd.s32 %s179, 1
      %s181 = scalar_select %p178, %s179, %s180
      %p184 = pneg %p178
      %p185 = scmp.eq.s32.totalorder %s17, 1
      %p186 = por %p184, %p185
      %p187 = scmp.ne.s32.totalorder %s179, %s182
      %p188 = scmp.eq.s32.totalorder %s17, 0
      %p189 = por %p187, %p188
      %p190 = scmp.ne.s32.totalorder %s179, %s182
      %p191 = scmp.eq.s32.totalorder %s22, 1
      %p192 = por %p190, %p191
      %p193 = scmp.ne.s32.totalorder %s182, %s183
      %p194 = scmp.eq.s32.totalorder %s22, 0
      %p195 = por %p193, %p194
      %p196 = scmp.ne.s32.totalorder %s182, %s183
      %p197 = scmp.eq.s32.totalorder %s23, 1
      %p198 = por %p196, %p197
      %p200 = scmp.ne.s32.totalorder %s183, %s199
      %p201 = scmp.eq.s32.totalorder %s23, 0
      %p202 = por %p200, %p201
      %p203 = scmp.le.s32.totalorder 1, %s17
      %p204 = scmp.lt.s32.totalorder %s17, 3
      %p205 = pnand %p203, %p204
      %p206 = pneg %p205
      // Predicated region
      $region9: #{detr_loss_predictor_forward.1} parent=5 // pred_check
        _
      $region10: #{detr_loss_predictor_forward.1} parent=5 // pred_check_branch
        %208 = sbr.rel (%p205) target = $region12
      $region11: #{detr_loss_predictor_forward.1} parent=5 // pred_region
        %s209 = ssub.s32 %s17, 1
        // Predicated region
        $region13: #{detr_loss_predictor_forward.1} parent=11 // pred_check
          %p210 = pneg %p64
        $region14: #{detr_loss_predictor_forward.1} parent=11 // pred_check_branch
          %212 = sbr.rel (%p210) target = $region16
        $region15: #{detr_loss_predictor_forward.1} parent=11 // pred_region
          %s214 = ssub.s32 51200, 51200
          %215 = vsyncadd [#allocation4], %s214
          %s216 = sshll.u32 [#allocation3], 4
          %s217 = int_to_ptr.vmem [resolvable:$true] %s216
          %222 = dma.hbm_to_vmem [thread:$0]  %s1, 51200, %s217, [#allocation4], 128, 128, 8
        $region16: #{detr_loss_predictor_forward.1} parent=11 // pred_fallthru
          _
        // Predicated region
        $region17: #{detr_loss_predictor_forward.1} parent=11 // pred_check
          %p223 = pneg %p85
        $region18: #{detr_loss_predictor_forward.1} parent=11 // pred_check_branch
          %225 = sbr.rel (%p223) target = $region20
        $region19: #{detr_loss_predictor_forward.1} parent=11 // pred_region
          %s227 = ssub.s32 32, 32
          %228 = vsyncadd [#allocation6], %s227
          %s230 = sshll.u32 [#allocation5], 4
          %s231 = int_to_ptr.vmem [resolvable:$true] %s230
          %233 = dma.hbm_to_vmem [thread:$0]  %s2, 32, %s231, [#allocation6]
        $region20: #{detr_loss_predictor_forward.1} parent=11 // pred_fallthru
          _
        // Predicated region
        $region21: #{detr_loss_predictor_forward.1} parent=11 // pred_check
          %p234 = pneg %p106
        $region22: #{detr_loss_predictor_forward.1} parent=11 // pred_check_branch
          %236 = sbr.rel (%p234) target = $region24
        $region23: #{detr_loss_predictor_forward.1} parent=11 // pred_region
          _
        $region24: #{detr_loss_predictor_forward.1} parent=11 // pred_fallthru
          _
        // Predicated region
        $region25: #{detr_loss_predictor_forward.1} parent=11 // pred_check
          %p237 = pneg %p127
        $region26: #{detr_loss_predictor_forward.1} parent=11 // pred_check_branch
          %239 = sbr.rel (%p237) target = $region28
        $region27: #{detr_loss_predictor_forward.1} parent=11 // pred_region
          %s241 = ssub.s32 16, 16
          %242 = vsyncadd [#allocation6], %s241
          %s244 = sshll.u32 [#allocation7], 4
          %s245 = int_to_ptr.vmem [resolvable:$true] %s244
          %247 = dma.hbm_to_vmem [thread:$0]  %s4, 16, %s245, [#allocation6]
        $region28: #{detr_loss_predictor_forward.1} parent=11 // pred_fallthru
          _
        // Predicated region
        $region29: #{detr_loss_predictor_forward.1} parent=11 // pred_check
          %p248 = pneg %p148
        $region30: #{detr_loss_predictor_forward.1} parent=11 // pred_check_branch
          %250 = sbr.rel (%p248) target = $region32
        $region31: #{detr_loss_predictor_forward.1} parent=11 // pred_region
          _
        $region32: #{detr_loss_predictor_forward.1} parent=11 // pred_fallthru
          _
        // Predicated region
        $region33: #{detr_loss_predictor_forward.1} parent=11 // pred_check
          %p251 = pneg %p169
        $region34: #{detr_loss_predictor_forward.1} parent=11 // pred_check_branch
          %253 = sbr.rel (%p251) target = $region36
        $region35: #{detr_loss_predictor_forward.1} parent=11 // pred_region
          _
        $region36: #{detr_loss_predictor_forward.1} parent=11 // pred_fallthru
          _
      $region12: #{detr_loss_predictor_forward.1} parent=5 // pred_fallthru
        _
      %p254 = scmp.lt.s32.totalorder %s17, 2
      // Predicated region
      $region37: #{detr_loss_predictor_forward.1} parent=5 // pred_check
        %p255 = pneg %p254
      $region38: #{detr_loss_predictor_forward.1} parent=5 // pred_check_branch
        %257 = sbr.rel (%p255) target = $region40
      $region39: #{detr_loss_predictor_forward.1} parent=5 // pred_region
        // Predicated region
        $region41: #{detr_loss_predictor_forward.1} parent=39 // pred_check
          %p258 = pneg %p37
        $region42: #{detr_loss_predictor_forward.1} parent=39 // pred_check_branch
          %260 = sbr.rel (%p258) target = $region44
        $region43: #{detr_loss_predictor_forward.1} parent=39 // pred_region
          %p261 = scmp.lt.s32.totalorder %s17, 1
          %s262 = scalar_select %p261, %s17, 1
          %s263 = smul.addr %s262, 5
          %s264 = smul.addr %s263, 8
          %s265 = scalar_lea.vmem %s0, %s264
        $region44: #{detr_loss_predictor_forward.1} parent=39 // pred_fallthru
          _
      $region40: #{detr_loss_predictor_forward.1} parent=5 // pred_fallthru
        _
      %p266 = scmp.le.s32.totalorder 1, %s17
      %p267 = scmp.lt.s32.totalorder %s17, 3
      %p268 = pnand %p266, %p267
      %p269 = pneg %p268
      // Predicated region
      $region45: #{detr_loss_predictor_forward.1} parent=5 // pred_check
        _
      $region46: #{detr_loss_predictor_forward.1} parent=5 // pred_check_branch
        %271 = sbr.rel (%p268) target = $region48
      $region47: #{detr_loss_predictor_forward.1} parent=5 // pred_region
        %s272 = ssub.s32 %s17, 1
        // Predicated region
        $region49: #{detr_loss_predictor_forward.1} parent=47 // pred_check
          %p273 = pneg %p64
        $region50: #{detr_loss_predictor_forward.1} parent=47 // pred_check_branch
          %275 = sbr.rel (%p273) target = $region52
        $region51: #{detr_loss_predictor_forward.1} parent=47 // pred_region
          %276 = dma.done [#allocation4], 51200
        $region52: #{detr_loss_predictor_forward.1} parent=47 // pred_fallthru
          _
        // Predicated region
        $region53: #{detr_loss_predictor_forward.1} parent=47 // pred_check
          %p277 = pneg %p85
        $region54: #{detr_loss_predictor_forward.1} parent=47 // pred_check_branch
          %279 = sbr.rel (%p277) target = $region56
        $region55: #{detr_loss_predictor_forward.1} parent=47 // pred_region
          %280 = dma.done [#allocation6], 32
        $region56: #{detr_loss_predictor_forward.1} parent=47 // pred_fallthru
          _
        // Predicated region
        $region57: #{detr_loss_predictor_forward.1} parent=47 // pred_check
          %p281 = pneg %p127
        $region58: #{detr_loss_predictor_forward.1} parent=47 // pred_check_branch
          %283 = sbr.rel (%p281) target = $region60
        $region59: #{detr_loss_predictor_forward.1} parent=47 // pred_region
          %284 = dma.done [#allocation6], 16
        $region60: #{detr_loss_predictor_forward.1} parent=47 // pred_fallthru
          _
        %p285 = scmp.lt.s32.totalorder %s22, 1
        %s286 = scalar_select %p285, %s22, 1
        %s287 = smul.addr %s286, 5
        %s288 = smul.addr %s287, 8
        %s289 = scalar_lea.vmem %s0, %s288
        %p290 = pneg %p43
        %p291 = pneg %p40
        %p292 = pneg %p64
        %p293 = pneg %p61
        %p294 = pneg %p85
        %p295 = pneg %p82
        %p296 = pneg %p106
        %p297 = pneg %p103
        %p298 = pneg %p127
        %p299 = pneg %p124
        %p300 = pneg %p148
        %p301 = pneg %p145
        %p302 = pneg %p169
        %p303 = pneg %p166
        %p304 = pneg %p195
        %p305 = pneg %p192
        %p306 = scmp.lt.s32.totalorder %s22, 1
        %s307 = scalar_select %p306, %s22, 1
        %s308 = scalar_lea.vmem %s7, %s307
        %p309 = scmp.lt.s32.totalorder %s22, 1
        %s310 = scalar_select %p309, %s22, 1
        %s311 = smul.addr %s310, 5
        %s312 = smul.addr %s311, 8
        %s313 = scalar_lea.vmem %s0, %s312
        %p314 = scmp.lt.s32.totalorder %s22, 1
        %s315 = scalar_select %p314, %s22, 1
        %s316 = scalar_lea.vmem %s7, %s315
        %v318 = vld [vmem:[%s313] sm:$0xff]
        %v319 = vld [vmem:[%s313 + $0x8] sm:$0x3]
        %v320 = vpack.c.bf16 %v319, %v318
        %v321 = vld [vmem:[#allocation3] sm:$0xff]
        %v322 = vld [vmem:[#allocation3 + $0x8] sm:$0xff]
        %v323 = vld [vmem:[#allocation3 + $0x10] sm:$0xff]
        %v324 = vld [vmem:[#allocation3 + $0x18] sm:$0xff]
        %v325 = vld [vmem:[#allocation3 + $0x20] sm:$0xff]
        %v326 = vld [vmem:[#allocation3 + $0x28] sm:$0xff]
        %v327 = vld [vmem:[#allocation3 + $0x30] sm:$0xff]
        %v328 = vld [vmem:[#allocation3 + $0x38] sm:$0xff]
        %v329 = vld [vmem:[#allocation3 + $0x40] sm:$0xff]
        %v330 = vld [vmem:[#allocation3 + $0x48] sm:$0xff]
        %v331 = vld [vmem:[#allocation3 + $0x50] sm:$0xff]
        %v332 = vld [vmem:[#allocation3 + $0x58] sm:$0xff]
        %v333 = vld [vmem:[#allocation3 + $0x60] sm:$0xff]
        %v334 = vld [vmem:[#allocation3 + $0x68] sm:$0xff]
        %v335 = vld [vmem:[#allocation3 + $0x70] sm:$0xff]
        %v336 = vld [vmem:[#allocation3 + $0x78] sm:$0xff]
        %v337 = vld [vmem:[%s313 + $0x1] sm:$0xff]
        %v338 = vld [vmem:[%s313 + $0x9] sm:$0x3]
        %v339 = vpack.c.bf16 %v338, %v337
        %s340 = scalar_lea.vmem [#allocation3], 128
        %v341 = vld [vmem:[%s340] sm:$0xff]
        %v342 = vld [vmem:[%s340 + $0x8] sm:$0xff]
        %v343 = vld [vmem:[%s340 + $0x10] sm:$0xff]
        %v344 = vld [vmem:[%s340 + $0x18] sm:$0xff]
        %v345 = vld [vmem:[%s340 + $0x20] sm:$0xff]
        %v346 = vld [vmem:[%s340 + $0x28] sm:$0xff]
        %v347 = vld [vmem:[%s340 + $0x30] sm:$0xff]
        %v348 = vld [vmem:[%s340 + $0x38] sm:$0xff]
        %v349 = vld [vmem:[%s340 + $0x40] sm:$0xff]
        %v350 = vld [vmem:[%s340 + $0x48] sm:$0xff]
        %v351 = vld [vmem:[%s340 + $0x50] sm:$0xff]
        %v352 = vld [vmem:[%s340 + $0x58] sm:$0xff]
        %v353 = vld [vmem:[%s340 + $0x60] sm:$0xff]
        %v354 = vld [vmem:[%s340 + $0x68] sm:$0xff]
        %v355 = vld [vmem:[%s340 + $0x70] sm:$0xff]
        %v356 = vld [vmem:[%s340 + $0x78] sm:$0xff]
        %v373 = vunpack.c.l.b16 %v341
        %v374 = vunpack.c.h.b16 %v341
        %v375 = vunpack.c.l.b16 %v342
        %v376 = vunpack.c.h.b16 %v342
        %v377 = vunpack.c.l.b16 %v343
        %v378 = vunpack.c.h.b16 %v343
        %v379 = vunpack.c.l.b16 %v344
        %v380 = vunpack.c.h.b16 %v344
        %v381 = vunpack.c.l.b16 %v345
        %v382 = vunpack.c.h.b16 %v345
        %v383 = vunpack.c.l.b16 %v346
        %v384 = vunpack.c.h.b16 %v346
        %v385 = vunpack.c.l.b16 %v347
        %v386 = vunpack.c.h.b16 %v347
        %v387 = vunpack.c.l.b16 %v348
        %v388 = vunpack.c.h.b16 %v348
        %v389 = vunpack.c.l.b16 %v349
        %v390 = vunpack.c.h.b16 %v349
        %v391 = vunpack.c.l.b16 %v350
        %v392 = vunpack.c.h.b16 %v350
        %v393 = vunpack.c.l.b16 %v351
        %v394 = vunpack.c.h.b16 %v351
        %v395 = vunpack.c.l.b16 %v352
        %v396 = vunpack.c.h.b16 %v352
        %v397 = vunpack.c.l.b16 %v353
        %v398 = vunpack.c.h.b16 %v353
        %v399 = vunpack.c.l.b16 %v354
        %v400 = vunpack.c.h.b16 %v354
        %v401 = vunpack.c.l.b16 %v355
        %v402 = vunpack.c.h.b16 %v355
        %v403 = vunpack.c.l.b16 %v356
        %v404 = vunpack.c.h.b16 %v356
        %v405 = vpack.c.b16 %v375, %v373
        %v406 = vpack.c.b16 %v376, %v374
        %v407 = vpack.c.b16 %v379, %v377
        %v408 = vpack.c.b16 %v380, %v378
        %v409 = vpack.c.b16 %v383, %v381
        %v410 = vpack.c.b16 %v384, %v382
        %v411 = vpack.c.b16 %v387, %v385
        %v412 = vpack.c.b16 %v388, %v386
        %v413 = vpack.c.b16 %v391, %v389
        %v414 = vpack.c.b16 %v392, %v390
        %v415 = vpack.c.b16 %v395, %v393
        %v416 = vpack.c.b16 %v396, %v394
        %v417 = vpack.c.b16 %v399, %v397
        %v418 = vpack.c.b16 %v400, %v398
        %v419 = vpack.c.b16 %v403, %v401
        %v420 = vpack.c.b16 %v404, %v402
        %437 = vmatprep.subr.bf16.mxu0 %v420
        %438 = vmatpush1.bf16.msra.mxu0 %v419
        %439 = vmatprep.subr.bf16.mxu0 %v418
        %440 = vmatpush1.bf16.msra.mxu0 %v417
        %441 = vmatprep.subr.bf16.mxu0 %v416
        %442 = vmatpush1.bf16.msra.mxu0 %v415
        %443 = vmatprep.subr.bf16.mxu0 %v414
        %444 = vmatpush1.bf16.msra.mxu0 %v413
        %445 = vmatprep.subr.bf16.mxu0 %v412
        %446 = vmatpush1.bf16.msra.mxu0 %v411
        %447 = vmatprep.subr.bf16.mxu0 %v410
        %448 = vmatpush1.bf16.msra.mxu0 %v409
        %449 = vmatprep.subr.bf16.mxu0 %v408
        %450 = vmatpush1.bf16.msra.mxu0 %v407
        %451 = vmatprep.subr.bf16.mxu0 %v406
        %452 = vmatpush1.bf16.msra.mxu0 %v405
        %453 = vmatprep.subr.bf16.mxu0 0
        %454 = vmatpush2.bf16.msra.mxu0 0
        %455 = vmatprep.subr.bf16.mxu0 0
        %456 = vmatpush2.bf16.msra.mxu0 0
        %457 = vmatprep.subr.bf16.mxu0 0
        %458 = vmatpush2.bf16.msra.mxu0 0
        %459 = vmatprep.subr.bf16.mxu0 0
        %460 = vmatpush2.bf16.msra.mxu0 0
        %461 = vmatprep.subr.bf16.mxu0 0
        %462 = vmatpush2.bf16.msra.mxu0 0
        %463 = vmatprep.subr.bf16.mxu0 0
        %464 = vmatpush2.bf16.msra.mxu0 0
        %465 = vmatprep.subr.bf16.mxu0 0
        %466 = vmatpush2.bf16.msra.mxu0 0
        %467 = vmatprep.subr.bf16.mxu0 0
        %468 = vmatpush2.bf16.msra.mxu0 0
        %469 = vmatprep.mubr.bf16.mxu0 0
        %470 = vmatmul.mubr.bf16.gmra.mxu0 %v339
        %v471 = vpop.f32.mrf.mxu0
        %v472 = vadd.f32 0.0, %v471
        %v473 = vpop.f32.mrf.mxu0
        %v474 = vadd.f32 0.0, %v473
        %v475 = vpop.f32.mrf.mxu0
        %v476 = vadd.f32 0.0, %v475
        %v477 = vpop.f32.mrf.mxu0
        %v478 = vadd.f32 0.0, %v477
        %479 = vdwg.mxu0
        %v496 = vunpack.c.l.b16 %v321
        %v497 = vunpack.c.h.b16 %v321
        %v498 = vunpack.c.l.b16 %v322
        %v499 = vunpack.c.h.b16 %v322
        %v500 = vunpack.c.l.b16 %v323
        %v501 = vunpack.c.h.b16 %v323
        %v502 = vunpack.c.l.b16 %v324
        %v503 = vunpack.c.h.b16 %v324
        %v504 = vunpack.c.l.b16 %v325
        %v505 = vunpack.c.h.b16 %v325
        %v506 = vunpack.c.l.b16 %v326
        %v507 = vunpack.c.h.b16 %v326
        %v508 = vunpack.c.l.b16 %v327
        %v509 = vunpack.c.h.b16 %v327
        %v510 = vunpack.c.l.b16 %v328
        %v511 = vunpack.c.h.b16 %v328
        %v512 = vunpack.c.l.b16 %v329
        %v513 = vunpack.c.h.b16 %v329
        %v514 = vunpack.c.l.b16 %v330
        %v515 = vunpack.c.h.b16 %v330
        %v516 = vunpack.c.l.b16 %v331
        %v517 = vunpack.c.h.b16 %v331
        %v518 = vunpack.c.l.b16 %v332
        %v519 = vunpack.c.h.b16 %v332
        %v520 = vunpack.c.l.b16 %v333
        %v521 = vunpack.c.h.b16 %v333
        %v522 = vunpack.c.l.b16 %v334
        %v523 = vunpack.c.h.b16 %v334
        %v524 = vunpack.c.l.b16 %v335
        %v525 = vunpack.c.h.b16 %v335
        %v526 = vunpack.c.l.b16 %v336
        %v527 = vunpack.c.h.b16 %v336
        %v528 = vpack.c.b16 %v498, %v496
        %v529 = vpack.c.b16 %v499, %v497
        %v530 = vpack.c.b16 %v502, %v500
        %v531 = vpack.c.b16 %v503, %v501
        %v532 = vpack.c.b16 %v506, %v504
        %v533 = vpack.c.b16 %v507, %v505
        %v534 = vpack.c.b16 %v510, %v508
        %v535 = vpack.c.b16 %v511, %v509
        %v536 = vpack.c.b16 %v514, %v512
        %v537 = vpack.c.b16 %v515, %v513
        %v538 = vpack.c.b16 %v518, %v516
        %v539 = vpack.c.b16 %v519, %v517
        %v540 = vpack.c.b16 %v522, %v520
        %v541 = vpack.c.b16 %v523, %v521
        %v542 = vpack.c.b16 %v526, %v524
        %v543 = vpack.c.b16 %v527, %v525
        %560 = vmatprep.subr.bf16.mxu0 %v543
        %561 = vmatpush1.bf16.msra.mxu0 %v542
        %562 = vmatprep.subr.bf16.mxu0 %v541
        %563 = vmatpush1.bf16.msra.mxu0 %v540
        %564 = vmatprep.subr.bf16.mxu0 %v539
        %565 = vmatpush1.bf16.msra.mxu0 %v538
        %566 = vmatprep.subr.bf16.mxu0 %v537
        %567 = vmatpush1.bf16.msra.mxu0 %v536
        %568 = vmatprep.subr.bf16.mxu0 %v535
        %569 = vmatpush1.bf16.msra.mxu0 %v534
        %570 = vmatprep.subr.bf16.mxu0 %v533
        %571 = vmatpush1.bf16.msra.mxu0 %v532
        %572 = vmatprep.subr.bf16.mxu0 %v531
        %573 = vmatpush1.bf16.msra.mxu0 %v530
        %574 = vmatprep.subr.bf16.mxu0 %v529
        %575 = vmatpush1.bf16.msra.mxu0 %v528
        %576 = vmatprep.subr.bf16.mxu0 0
        %577 = vmatpush2.bf16.msra.mxu0 0
        %578 = vmatprep.subr.bf16.mxu0 0
        %579 = vmatpush2.bf16.msra.mxu0 0
        %580 = vmatprep.subr.bf16.mxu0 0
        %581 = vmatpush2.bf16.msra.mxu0 0
        %582 = vmatprep.subr.bf16.mxu0 0
        %583 = vmatpush2.bf16.msra.mxu0 0
        %584 = vmatprep.subr.bf16.mxu0 0
        %585 = vmatpush2.bf16.msra.mxu0 0
        %586 = vmatprep.subr.bf16.mxu0 0
        %587 = vmatpush2.bf16.msra.mxu0 0
        %588 = vmatprep.subr.bf16.mxu0 0
        %589 = vmatpush2.bf16.msra.mxu0 0
        %590 = vmatprep.subr.bf16.mxu0 0
        %591 = vmatpush2.bf16.msra.mxu0 0
        %592 = vmatprep.mubr.bf16.mxu0 0
        %593 = vmatmul.mubr.bf16.gmra.mxu0 %v320
        %v594 = vpop.f32.mrf.mxu0
        %v595 = vadd.f32 %v472, %v594
        %v596 = vpop.f32.mrf.mxu0
        %v597 = vadd.f32 %v474, %v596
        %v598 = vpop.f32.mrf.mxu0
        %v599 = vadd.f32 %v476, %v598
        %v600 = vpop.f32.mrf.mxu0
        %v601 = vadd.f32 %v478, %v600
        %602 = vdwg.mxu0
        %v603 = vld [vmem:[%s313 + $0x2] sm:$0xff]
        %v604 = vld [vmem:[%s313 + $0xa] sm:$0x3]
        %v605 = vpack.c.bf16 %v604, %v603
        %s606 = scalar_lea.vmem [#allocation3], 256
        %v607 = vld [vmem:[%s606] sm:$0xff]
        %v608 = vld [vmem:[%s606 + $0x8] sm:$0xff]
        %v609 = vld [vmem:[%s606 + $0x10] sm:$0xff]
        %v610 = vld [vmem:[%s606 + $0x18] sm:$0xff]
        %v611 = vld [vmem:[%s606 + $0x20] sm:$0xff]
        %v612 = vld [vmem:[%s606 + $0x28] sm:$0xff]
        %v613 = vld [vmem:[%s606 + $0x30] sm:$0xff]
        %v614 = vld [vmem:[%s606 + $0x38] sm:$0xff]
        %v615 = vld [vmem:[%s606 + $0x40] sm:$0xff]
        %v616 = vld [vmem:[%s606 + $0x48] sm:$0xff]
        %v617 = vld [vmem:[%s606 + $0x50] sm:$0xff]
        %v618 = vld [vmem:[%s606 + $0x58] sm:$0xff]
        %v619 = vld [vmem:[%s606 + $0x60] sm:$0xff]
        %v620 = vld [vmem:[%s606 + $0x68] sm:$0xff]
        %v621 = vld [vmem:[%s606 + $0x70] sm:$0xff]
        %v622 = vld [vmem:[%s606 + $0x78] sm:$0xff]
        %v639 = vunpack.c.l.b16 %v607
        %v640 = vunpack.c.h.b16 %v607
        %v641 = vunpack.c.l.b16 %v608
        %v642 = vunpack.c.h.b16 %v608
        %v643 = vunpack.c.l.b16 %v609
        %v644 = vunpack.c.h.b16 %v609
        %v645 = vunpack.c.l.b16 %v610
        %v646 = vunpack.c.h.b16 %v610
        %v647 = vunpack.c.l.b16 %v611
        %v648 = vunpack.c.h.b16 %v611
        %v649 = vunpack.c.l.b16 %v612
        %v650 = vunpack.c.h.b16 %v612
        %v651 = vunpack.c.l.b16 %v613
        %v652 = vunpack.c.h.b16 %v613
        %v653 = vunpack.c.l.b16 %v614
        %v654 = vunpack.c.h.b16 %v614
        %v655 = vunpack.c.l.b16 %v615
        %v656 = vunpack.c.h.b16 %v615
        %v657 = vunpack.c.l.b16 %v616
        %v658 = vunpack.c.h.b16 %v616
        %v659 = vunpack.c.l.b16 %v617
        %v660 = vunpack.c.h.b16 %v617
        %v661 = vunpack.c.l.b16 %v618
        %v662 = vunpack.c.h.b16 %v618
        %v663 = vunpack.c.l.b16 %v619
        %v664 = vunpack.c.h.b16 %v619
        %v665 = vunpack.c.l.b16 %v620
        %v666 = vunpack.c.h.b16 %v620
        %v667 = vunpack.c.l.b16 %v621
        %v668 = vunpack.c.h.b16 %v621
        %v669 = vunpack.c.l.b16 %v622
        %v670 = vunpack.c.h.b16 %v622
        %v671 = vpack.c.b16 %v641, %v639
        %v672 = vpack.c.b16 %v642, %v640
        %v673 = vpack.c.b16 %v645, %v643
        %v674 = vpack.c.b16 %v646, %v644
        %v675 = vpack.c.b16 %v649, %v647
        %v676 = vpack.c.b16 %v650, %v648
        %v677 = vpack.c.b16 %v653, %v651
        %v678 = vpack.c.b16 %v654, %v652
        %v679 = vpack.c.b16 %v657, %v655
        %v680 = vpack.c.b16 %v658, %v656
        %v681 = vpack.c.b16 %v661, %v659
        %v682 = vpack.c.b16 %v662, %v660
        %v683 = vpack.c.b16 %v665, %v663
        %v684 = vpack.c.b16 %v666, %v664
        %v685 = vpack.c.b16 %v669, %v667
        %v686 = vpack.c.b16 %v670, %v668
        %703 = vmatprep.subr.bf16.mxu0 %v686
        %704 = vmatpush1.bf16.msra.mxu0 %v685
        %705 = vmatprep.subr.bf16.mxu0 %v684
        %706 = vmatpush1.bf16.msra.mxu0 %v683
        %707 = vmatprep.subr.bf16.mxu0 %v682
        %708 = vmatpush1.bf16.msra.mxu0 %v681
        %709 = vmatprep.subr.bf16.mxu0 %v680
        %710 = vmatpush1.bf16.msra.mxu0 %v679
        %711 = vmatprep.subr.bf16.mxu0 %v678
        %712 = vmatpush1.bf16.msra.mxu0 %v677
        %713 = vmatprep.subr.bf16.mxu0 %v676
        %714 = vmatpush1.bf16.msra.mxu0 %v675
        %715 = vmatprep.subr.bf16.mxu0 %v674
        %716 = vmatpush1.bf16.msra.mxu0 %v673
        %717 = vmatprep.subr.bf16.mxu0 %v672
        %718 = vmatpush1.bf16.msra.mxu0 %v671
        %719 = vmatprep.subr.bf16.mxu0 0
        %720 = vmatpush2.bf16.msra.mxu0 0
        %721 = vmatprep.subr.bf16.mxu0 0
        %722 = vmatpush2.bf16.msra.mxu0 0
        %723 = vmatprep.subr.bf16.mxu0 0
        %724 = vmatpush2.bf16.msra.mxu0 0
        %725 = vmatprep.subr.bf16.mxu0 0
        %726 = vmatpush2.bf16.msra.mxu0 0
        %727 = vmatprep.subr.bf16.mxu0 0
        %728 = vmatpush2.bf16.msra.mxu0 0
        %729 = vmatprep.subr.bf16.mxu0 0
        %730 = vmatpush2.bf16.msra.mxu0 0
        %731 = vmatprep.subr.bf16.mxu0 0
        %732 = vmatpush2.bf16.msra.mxu0 0
        %733 = vmatprep.subr.bf16.mxu0 0
        %734 = vmatpush2.bf16.msra.mxu0 0
        %735 = vmatprep.mubr.bf16.mxu0 0
        %736 = vmatmul.mubr.bf16.gmra.mxu0 %v605
        %v737 = vpop.f32.mrf.mxu0
        %v738 = vadd.f32 0.0, %v737
        %v739 = vpop.f32.mrf.mxu0
        %v740 = vadd.f32 0.0, %v739
        %v741 = vpop.f32.mrf.mxu0
        %v742 = vadd.f32 0.0, %v741
        %v743 = vpop.f32.mrf.mxu0
        %v744 = vadd.f32 0.0, %v743
        %745 = vdwg.mxu0
        %v746 = vadd.f32 %v595, %v738
        %v747 = vadd.f32 %v597, %v740
        %v748 = vadd.f32 %v599, %v742
        %v749 = vadd.f32 %v601, %v744
        %v750 = vld [vmem:[%s313 + $0x3] sm:$0xff]
        %v751 = vld [vmem:[%s313 + $0xb] sm:$0x3]
        %v752 = vpack.c.bf16 %v751, %v750
        %s753 = scalar_lea.vmem [#allocation3], 384
        %v754 = vld [vmem:[%s753] sm:$0xff]
        %v755 = vld [vmem:[%s753 + $0x8] sm:$0xff]
        %v756 = vld [vmem:[%s753 + $0x10] sm:$0xff]
        %v757 = vld [vmem:[%s753 + $0x18] sm:$0xff]
        %v758 = vld [vmem:[%s753 + $0x20] sm:$0xff]
        %v759 = vld [vmem:[%s753 + $0x28] sm:$0xff]
        %v760 = vld [vmem:[%s753 + $0x30] sm:$0xff]
        %v761 = vld [vmem:[%s753 + $0x38] sm:$0xff]
        %v762 = vld [vmem:[%s753 + $0x40] sm:$0xff]
        %v763 = vld [vmem:[%s753 + $0x48] sm:$0xff]
        %v764 = vld [vmem:[%s753 + $0x50] sm:$0xff]
        %v765 = vld [vmem:[%s753 + $0x58] sm:$0xff]
        %v766 = vld [vmem:[%s753 + $0x60] sm:$0xff]
        %v767 = vld [vmem:[%s753 + $0x68] sm:$0xff]
        %v768 = vld [vmem:[%s753 + $0x70] sm:$0xff]
        %v769 = vld [vmem:[%s753 + $0x78] sm:$0xff]
        %v786 = vunpack.c.l.b16 %v754
        %v787 = vunpack.c.h.b16 %v754
        %v788 = vunpack.c.l.b16 %v755
        %v789 = vunpack.c.h.b16 %v755
        %v790 = vunpack.c.l.b16 %v756
        %v791 = vunpack.c.h.b16 %v756
        %v792 = vunpack.c.l.b16 %v757
        %v793 = vunpack.c.h.b16 %v757
        %v794 = vunpack.c.l.b16 %v758
        %v795 = vunpack.c.h.b16 %v758
        %v796 = vunpack.c.l.b16 %v759
        %v797 = vunpack.c.h.b16 %v759
        %v798 = vunpack.c.l.b16 %v760
        %v799 = vunpack.c.h.b16 %v760
        %v800 = vunpack.c.l.b16 %v761
        %v801 = vunpack.c.h.b16 %v761
        %v802 = vunpack.c.l.b16 %v762
        %v803 = vunpack.c.h.b16 %v762
        %v804 = vunpack.c.l.b16 %v763
        %v805 = vunpack.c.h.b16 %v763
        %v806 = vunpack.c.l.b16 %v764
        %v807 = vunpack.c.h.b16 %v764
        %v808 = vunpack.c.l.b16 %v765
        %v809 = vunpack.c.h.b16 %v765
        %v810 = vunpack.c.l.b16 %v766
        %v811 = vunpack.c.h.b16 %v766
        %v812 = vunpack.c.l.b16 %v767
        %v813 = vunpack.c.h.b16 %v767
        %v814 = vunpack.c.l.b16 %v768
        %v815 = vunpack.c.h.b16 %v768
        %v816 = vunpack.c.l.b16 %v769
        %v817 = vunpack.c.h.b16 %v769
        %v818 = vpack.c.b16 %v788, %v786
        %v819 = vpack.c.b16 %v789, %v787
        %v820 = vpack.c.b16 %v792, %v790
        %v821 = vpack.c.b16 %v793, %v791
        %v822 = vpack.c.b16 %v796, %v794
        %v823 = vpack.c.b16 %v797, %v795
        %v824 = vpack.c.b16 %v800, %v798
        %v825 = vpack.c.b16 %v801, %v799
        %v826 = vpack.c.b16 %v804, %v802
        %v827 = vpack.c.b16 %v805, %v803
        %v828 = vpack.c.b16 %v808, %v806
        %v829 = vpack.c.b16 %v809, %v807
        %v830 = vpack.c.b16 %v812, %v810
        %v831 = vpack.c.b16 %v813, %v811
        %v832 = vpack.c.b16 %v816, %v814
        %v833 = vpack.c.b16 %v817, %v815
        %850 = vmatprep.subr.bf16.mxu0 %v833
        %851 = vmatpush1.bf16.msra.mxu0 %v832
        %852 = vmatprep.subr.bf16.mxu0 %v831
        %853 = vmatpush1.bf16.msra.mxu0 %v830
        %854 = vmatprep.subr.bf16.mxu0 %v829
        %855 = vmatpush1.bf16.msra.mxu0 %v828
        %856 = vmatprep.subr.bf16.mxu0 %v827
        %857 = vmatpush1.bf16.msra.mxu0 %v826
        %858 = vmatprep.subr.bf16.mxu0 %v825
        %859 = vmatpush1.bf16.msra.mxu0 %v824
        %860 = vmatprep.subr.bf16.mxu0 %v823
        %861 = vmatpush1.bf16.msra.mxu0 %v822
        %862 = vmatprep.subr.bf16.mxu0 %v821
        %863 = vmatpush1.bf16.msra.mxu0 %v820
        %864 = vmatprep.subr.bf16.mxu0 %v819
        %865 = vmatpush1.bf16.msra.mxu0 %v818
        %866 = vmatprep.subr.bf16.mxu0 0
        %867 = vmatpush2.bf16.msra.mxu0 0
        %868 = vmatprep.subr.bf16.mxu0 0
        %869 = vmatpush2.bf16.msra.mxu0 0
        %870 = vmatprep.subr.bf16.mxu0 0
        %871 = vmatpush2.bf16.msra.mxu0 0
        %872 = vmatprep.subr.bf16.mxu0 0
        %873 = vmatpush2.bf16.msra.mxu0 0
        %874 = vmatprep.subr.bf16.mxu0 0
        %875 = vmatpush2.bf16.msra.mxu0 0
        %876 = vmatprep.subr.bf16.mxu0 0
        %877 = vmatpush2.bf16.msra.mxu0 0
        %878 = vmatprep.subr.bf16.mxu0 0
        %879 = vmatpush2.bf16.msra.mxu0 0
        %880 = vmatprep.subr.bf16.mxu0 0
        %881 = vmatpush2.bf16.msra.mxu0 0
        %882 = vmatprep.mubr.bf16.mxu0 0
        %883 = vmatmul.mubr.bf16.gmra.mxu0 %v752
        %v884 = vpop.f32.mrf.mxu0
        %v885 = vadd.f32 0.0, %v884
        %v886 = vpop.f32.mrf.mxu0
        %v887 = vadd.f32 0.0, %v886
        %v888 = vpop.f32.mrf.mxu0
        %v889 = vadd.f32 0.0, %v888
        %v890 = vpop.f32.mrf.mxu0
        %v891 = vadd.f32 0.0, %v890
        %892 = vdwg.mxu0
        %v893 = vadd.f32 %v746, %v885
        %v894 = vadd.f32 %v747, %v887
        %v895 = vadd.f32 %v748, %v889
        %v896 = vadd.f32 %v749, %v891
        %v897 = vld [vmem:[%s313 + $0x4] sm:$0xff]
        %v898 = vld [vmem:[%s313 + $0xc] sm:$0x3]
        %v899 = vpack.c.bf16 %v898, %v897
        %s900 = scalar_lea.vmem [#allocation3], 512
        %v901 = vld [vmem:[%s900] sm:$0xff]
        %v902 = vld [vmem:[%s900 + $0x8] sm:$0xff]
        %v903 = vld [vmem:[%s900 + $0x10] sm:$0xff]
        %v904 = vld [vmem:[%s900 + $0x18] sm:$0xff]
        %v905 = vld [vmem:[%s900 + $0x20] sm:$0xff]
        %v906 = vld [vmem:[%s900 + $0x28] sm:$0xff]
        %v907 = vld [vmem:[%s900 + $0x30] sm:$0xff]
        %v908 = vld [vmem:[%s900 + $0x38] sm:$0xff]
        %v909 = vld [vmem:[%s900 + $0x40] sm:$0xff]
        %v910 = vld [vmem:[%s900 + $0x48] sm:$0xff]
        %v911 = vld [vmem:[%s900 + $0x50] sm:$0xff]
        %v912 = vld [vmem:[%s900 + $0x58] sm:$0xff]
        %v913 = vld [vmem:[%s900 + $0x60] sm:$0xff]
        %v914 = vld [vmem:[%s900 + $0x68] sm:$0xff]
        %v915 = vld [vmem:[%s900 + $0x70] sm:$0xff]
        %v916 = vld [vmem:[%s900 + $0x78] sm:$0xff]
        %v933 = vunpack.c.l.b16 %v901
        %v934 = vunpack.c.h.b16 %v901
        %v935 = vunpack.c.l.b16 %v902
        %v936 = vunpack.c.h.b16 %v902
        %v937 = vunpack.c.l.b16 %v903
        %v938 = vunpack.c.h.b16 %v903
        %v939 = vunpack.c.l.b16 %v904
        %v940 = vunpack.c.h.b16 %v904
        %v941 = vunpack.c.l.b16 %v905
        %v942 = vunpack.c.h.b16 %v905
        %v943 = vunpack.c.l.b16 %v906
        %v944 = vunpack.c.h.b16 %v906
        %v945 = vunpack.c.l.b16 %v907
        %v946 = vunpack.c.h.b16 %v907
        %v947 = vunpack.c.l.b16 %v908
        %v948 = vunpack.c.h.b16 %v908
        %v949 = vunpack.c.l.b16 %v909
        %v950 = vunpack.c.h.b16 %v909
        %v951 = vunpack.c.l.b16 %v910
        %v952 = vunpack.c.h.b16 %v910
        %v953 = vunpack.c.l.b16 %v911
        %v954 = vunpack.c.h.b16 %v911
        %v955 = vunpack.c.l.b16 %v912
        %v956 = vunpack.c.h.b16 %v912
        %v957 = vunpack.c.l.b16 %v913
        %v958 = vunpack.c.h.b16 %v913
        %v959 = vunpack.c.l.b16 %v914
        %v960 = vunpack.c.h.b16 %v914
        %v961 = vunpack.c.l.b16 %v915
        %v962 = vunpack.c.h.b16 %v915
        %v963 = vunpack.c.l.b16 %v916
        %v964 = vunpack.c.h.b16 %v916
        %v965 = vpack.c.b16 %v935, %v933
        %v966 = vpack.c.b16 %v936, %v934
        %v967 = vpack.c.b16 %v939, %v937
        %v968 = vpack.c.b16 %v940, %v938
        %v969 = vpack.c.b16 %v943, %v941
        %v970 = vpack.c.b16 %v944, %v942
        %v971 = vpack.c.b16 %v947, %v945
        %v972 = vpack.c.b16 %v948, %v946
        %v973 = vpack.c.b16 %v951, %v949
        %v974 = vpack.c.b16 %v952, %v950
        %v975 = vpack.c.b16 %v955, %v953
        %v976 = vpack.c.b16 %v956, %v954
        %v977 = vpack.c.b16 %v959, %v957
        %v978 = vpack.c.b16 %v960, %v958
        %v979 = vpack.c.b16 %v963, %v961
        %v980 = vpack.c.b16 %v964, %v962
        %997 = vmatprep.subr.bf16.mxu0 %v980
        %998 = vmatpush1.bf16.msra.mxu0 %v979
        %999 = vmatprep.subr.bf16.mxu0 %v978
        %1000 = vmatpush1.bf16.msra.mxu0 %v977
        %1001 = vmatprep.subr.bf16.mxu0 %v976
        %1002 = vmatpush1.bf16.msra.mxu0 %v975
        %1003 = vmatprep.subr.bf16.mxu0 %v974
        %1004 = vmatpush1.bf16.msra.mxu0 %v973
        %1005 = vmatprep.subr.bf16.mxu0 %v972
        %1006 = vmatpush1.bf16.msra.mxu0 %v971
        %1007 = vmatprep.subr.bf16.mxu0 %v970
        %1008 = vmatpush1.bf16.msra.mxu0 %v969
        %1009 = vmatprep.subr.bf16.mxu0 %v968
        %1010 = vmatpush1.bf16.msra.mxu0 %v967
        %1011 = vmatprep.subr.bf16.mxu0 %v966
        %1012 = vmatpush1.bf16.msra.mxu0 %v965
        %1013 = vmatprep.subr.bf16.mxu0 0
        %1014 = vmatpush2.bf16.msra.mxu0 0
        %1015 = vmatprep.subr.bf16.mxu0 0
        %1016 = vmatpush2.bf16.msra.mxu0 0
        %1017 = vmatprep.subr.bf16.mxu0 0
        %1018 = vmatpush2.bf16.msra.mxu0 0
        %1019 = vmatprep.subr.bf16.mxu0 0
        %1020 = vmatpush2.bf16.msra.mxu0 0
        %1021 = vmatprep.subr.bf16.mxu0 0
        %1022 = vmatpush2.bf16.msra.mxu0 0
        %1023 = vmatprep.subr.bf16.mxu0 0
        %1024 = vmatpush2.bf16.msra.mxu0 0
        %1025 = vmatprep.subr.bf16.mxu0 0
        %1026 = vmatpush2.bf16.msra.mxu0 0
        %1027 = vmatprep.subr.bf16.mxu0 0
        %1028 = vmatpush2.bf16.msra.mxu0 0
        %1029 = vmatprep.mubr.bf16.mxu0 0
        %1030 = vmatmul.mubr.bf16.gmra.mxu0 %v899
        %v1031 = vpop.f32.mrf.mxu0
        %v1032 = vadd.f32 0.0, %v1031
        %v1033 = vpop.f32.mrf.mxu0
        %v1034 = vadd.f32 0.0, %v1033
        %v1035 = vpop.f32.mrf.mxu0
        %v1036 = vadd.f32 0.0, %v1035
        %v1037 = vpop.f32.mrf.mxu0
        %v1038 = vadd.f32 0.0, %v1037
        %1039 = vdwg.mxu0
        %v1040 = vadd.f32 %v893, %v1032
        %v1041 = vadd.f32 %v894, %v1034
        %v1042 = vadd.f32 %v895, %v1036
        %v1043 = vadd.f32 %v896, %v1038
        %v1044 = vld [vmem:[%s313 + $0x5] sm:$0xff]
        %v1045 = vld [vmem:[%s313 + $0xd] sm:$0x3]
        %v1046 = vpack.c.bf16 %v1045, %v1044
        %s1047 = scalar_lea.vmem [#allocation3], 640
        %v1048 = vld [vmem:[%s1047] sm:$0xff]
        %v1049 = vld [vmem:[%s1047 + $0x8] sm:$0xff]
        %v1050 = vld [vmem:[%s1047 + $0x10] sm:$0xff]
        %v1051 = vld [vmem:[%s1047 + $0x18] sm:$0xff]
        %v1052 = vld [vmem:[%s1047 + $0x20] sm:$0xff]
        %v1053 = vld [vmem:[%s1047 + $0x28] sm:$0xff]
        %v1054 = vld [vmem:[%s1047 + $0x30] sm:$0xff]
        %v1055 = vld [vmem:[%s1047 + $0x38] sm:$0xff]
        %v1056 = vld [vmem:[%s1047 + $0x40] sm:$0xff]
        %v1057 = vld [vmem:[%s1047 + $0x48] sm:$0xff]
        %v1058 = vld [vmem:[%s1047 + $0x50] sm:$0xff]
        %v1059 = vld [vmem:[%s1047 + $0x58] sm:$0xff]
        %v1060 = vld [vmem:[%s1047 + $0x60] sm:$0xff]
        %v1061 = vld [vmem:[%s1047 + $0x68] sm:$0xff]
        %v1062 = vld [vmem:[%s1047 + $0x70] sm:$0xff]
        %v1063 = vld [vmem:[%s1047 + $0x78] sm:$0xff]
        %v1080 = vunpack.c.l.b16 %v1048
        %v1081 = vunpack.c.h.b16 %v1048
        %v1082 = vunpack.c.l.b16 %v1049
        %v1083 = vunpack.c.h.b16 %v1049
        %v1084 = vunpack.c.l.b16 %v1050
        %v1085 = vunpack.c.h.b16 %v1050
        %v1086 = vunpack.c.l.b16 %v1051
        %v1087 = vunpack.c.h.b16 %v1051
        %v1088 = vunpack.c.l.b16 %v1052
        %v1089 = vunpack.c.h.b16 %v1052
        %v1090 = vunpack.c.l.b16 %v1053
        %v1091 = vunpack.c.h.b16 %v1053
        %v1092 = vunpack.c.l.b16 %v1054
        %v1093 = vunpack.c.h.b16 %v1054
        %v1094 = vunpack.c.l.b16 %v1055
        %v1095 = vunpack.c.h.b16 %v1055
        %v1096 = vunpack.c.l.b16 %v1056
        %v1097 = vunpack.c.h.b16 %v1056
        %v1098 = vunpack.c.l.b16 %v1057
        %v1099 = vunpack.c.h.b16 %v1057
        %v1100 = vunpack.c.l.b16 %v1058
        %v1101 = vunpack.c.h.b16 %v1058
        %v1102 = vunpack.c.l.b16 %v1059
        %v1103 = vunpack.c.h.b16 %v1059
        %v1104 = vunpack.c.l.b16 %v1060
        %v1105 = vunpack.c.h.b16 %v1060
        %v1106 = vunpack.c.l.b16 %v1061
        %v1107 = vunpack.c.h.b16 %v1061
        %v1108 = vunpack.c.l.b16 %v1062
        %v1109 = vunpack.c.h.b16 %v1062
        %v1110 = vunpack.c.l.b16 %v1063
        %v1111 = vunpack.c.h.b16 %v1063
        %v1112 = vpack.c.b16 %v1082, %v1080
        %v1113 = vpack.c.b16 %v1083, %v1081
        %v1114 = vpack.c.b16 %v1086, %v1084
        %v1115 = vpack.c.b16 %v1087, %v1085
        %v1116 = vpack.c.b16 %v1090, %v1088
        %v1117 = vpack.c.b16 %v1091, %v1089
        %v1118 = vpack.c.b16 %v1094, %v1092
        %v1119 = vpack.c.b16 %v1095, %v1093
        %v1120 = vpack.c.b16 %v1098, %v1096
        %v1121 = vpack.c.b16 %v1099, %v1097
        %v1122 = vpack.c.b16 %v1102, %v1100
        %v1123 = vpack.c.b16 %v1103, %v1101
        %v1124 = vpack.c.b16 %v1106, %v1104
        %v1125 = vpack.c.b16 %v1107, %v1105
        %v1126 = vpack.c.b16 %v1110, %v1108
        %v1127 = vpack.c.b16 %v1111, %v1109
        %1144 = vmatprep.subr.bf16.mxu0 %v1127
        %1145 = vmatpush1.bf16.msra.mxu0 %v1126
        %1146 = vmatprep.subr.bf16.mxu0 %v1125
        %1147 = vmatpush1.bf16.msra.mxu0 %v1124
        %1148 = vmatprep.subr.bf16.mxu0 %v1123
        %1149 = vmatpush1.bf16.msra.mxu0 %v1122
        %1150 = vmatprep.subr.bf16.mxu0 %v1121
        %1151 = vmatpush1.bf16.msra.mxu0 %v1120
        %1152 = vmatprep.subr.bf16.mxu0 %v1119
        %1153 = vmatpush1.bf16.msra.mxu0 %v1118
        %1154 = vmatprep.subr.bf16.mxu0 %v1117
        %1155 = vmatpush1.bf16.msra.mxu0 %v1116
        %1156 = vmatprep.subr.bf16.mxu0 %v1115
        %1157 = vmatpush1.bf16.msra.mxu0 %v1114
        %1158 = vmatprep.subr.bf16.mxu0 %v1113
        %1159 = vmatpush1.bf16.msra.mxu0 %v1112
        %1160 = vmatprep.subr.bf16.mxu0 0
        %1161 = vmatpush2.bf16.msra.mxu0 0
        %1162 = vmatprep.subr.bf16.mxu0 0
        %1163 = vmatpush2.bf16.msra.mxu0 0
        %1164 = vmatprep.subr.bf16.mxu0 0
        %1165 = vmatpush2.bf16.msra.mxu0 0
        %1166 = vmatprep.subr.bf16.mxu0 0
        %1167 = vmatpush2.bf16.msra.mxu0 0
        %1168 = vmatprep.subr.bf16.mxu0 0
        %1169 = vmatpush2.bf16.msra.mxu0 0
        %1170 = vmatprep.subr.bf16.mxu0 0
        %1171 = vmatpush2.bf16.msra.mxu0 0
        %1172 = vmatprep.subr.bf16.mxu0 0
        %1173 = vmatpush2.bf16.msra.mxu0 0
        %1174 = vmatprep.subr.bf16.mxu0 0
        %1175 = vmatpush2.bf16.msra.mxu0 0
        %1176 = vmatprep.mubr.bf16.mxu0 0
        %1177 = vmatmul.mubr.bf16.gmra.mxu0 %v1046
        %v1178 = vpop.f32.mrf.mxu0
        %v1179 = vadd.f32 0.0, %v1178
        %v1180 = vpop.f32.mrf.mxu0
        %v1181 = vadd.f32 0.0, %v1180
        %v1182 = vpop.f32.mrf.mxu0
        %v1183 = vadd.f32 0.0, %v1182
        %v1184 = vpop.f32.mrf.mxu0
        %v1185 = vadd.f32 0.0, %v1184
        %1186 = vdwg.mxu0
        %v1187 = vadd.f32 %v1040, %v1179
        %v1188 = vadd.f32 %v1041, %v1181
        %v1189 = vadd.f32 %v1042, %v1183
        %v1190 = vadd.f32 %v1043, %v1185
        %v1191 = vld [vmem:[%s313 + $0x6] sm:$0xff]
        %v1192 = vld [vmem:[%s313 + $0xe] sm:$0x3]
        %v1193 = vpack.c.bf16 %v1192, %v1191
        %s1194 = scalar_lea.vmem [#allocation3], 768
        %v1195 = vld [vmem:[%s1194] sm:$0xff]
        %v1196 = vld [vmem:[%s1194 + $0x8] sm:$0xff]
        %v1197 = vld [vmem:[%s1194 + $0x10] sm:$0xff]
        %v1198 = vld [vmem:[%s1194 + $0x18] sm:$0xff]
        %v1199 = vld [vmem:[%s1194 + $0x20] sm:$0xff]
        %v1200 = vld [vmem:[%s1194 + $0x28] sm:$0xff]
        %v1201 = vld [vmem:[%s1194 + $0x30] sm:$0xff]
        %v1202 = vld [vmem:[%s1194 + $0x38] sm:$0xff]
        %v1203 = vld [vmem:[%s1194 + $0x40] sm:$0xff]
        %v1204 = vld [vmem:[%s1194 + $0x48] sm:$0xff]
        %v1205 = vld [vmem:[%s1194 + $0x50] sm:$0xff]
        %v1206 = vld [vmem:[%s1194 + $0x58] sm:$0xff]
        %v1207 = vld [vmem:[%s1194 + $0x60] sm:$0xff]
        %v1208 = vld [vmem:[%s1194 + $0x68] sm:$0xff]
        %v1209 = vld [vmem:[%s1194 + $0x70] sm:$0xff]
        %v1210 = vld [vmem:[%s1194 + $0x78] sm:$0xff]
        %v1227 = vunpack.c.l.b16 %v1195
        %v1228 = vunpack.c.h.b16 %v1195
        %v1229 = vunpack.c.l.b16 %v1196
        %v1230 = vunpack.c.h.b16 %v1196
        %v1231 = vunpack.c.l.b16 %v1197
        %v1232 = vunpack.c.h.b16 %v1197
        %v1233 = vunpack.c.l.b16 %v1198
        %v1234 = vunpack.c.h.b16 %v1198
        %v1235 = vunpack.c.l.b16 %v1199
        %v1236 = vunpack.c.h.b16 %v1199
        %v1237 = vunpack.c.l.b16 %v1200
        %v1238 = vunpack.c.h.b16 %v1200
        %v1239 = vunpack.c.l.b16 %v1201
        %v1240 = vunpack.c.h.b16 %v1201
        %v1241 = vunpack.c.l.b16 %v1202
        %v1242 = vunpack.c.h.b16 %v1202
        %v1243 = vunpack.c.l.b16 %v1203
        %v1244 = vunpack.c.h.b16 %v1203
        %v1245 = vunpack.c.l.b16 %v1204
        %v1246 = vunpack.c.h.b16 %v1204
        %v1247 = vunpack.c.l.b16 %v1205
        %v1248 = vunpack.c.h.b16 %v1205
        %v1249 = vunpack.c.l.b16 %v1206
        %v1250 = vunpack.c.h.b16 %v1206
        %v1251 = vunpack.c.l.b16 %v1207
        %v1252 = vunpack.c.h.b16 %v1207
        %v1253 = vunpack.c.l.b16 %v1208
        %v1254 = vunpack.c.h.b16 %v1208
        %v1255 = vunpack.c.l.b16 %v1209
        %v1256 = vunpack.c.h.b16 %v1209
        %v1257 = vunpack.c.l.b16 %v1210
        %v1258 = vunpack.c.h.b16 %v1210
        %v1259 = vpack.c.b16 %v1229, %v1227
        %v1260 = vpack.c.b16 %v1230, %v1228
        %v1261 = vpack.c.b16 %v1233, %v1231
        %v1262 = vpack.c.b16 %v1234, %v1232
        %v1263 = vpack.c.b16 %v1237, %v1235
        %v1264 = vpack.c.b16 %v1238, %v1236
        %v1265 = vpack.c.b16 %v1241, %v1239
        %v1266 = vpack.c.b16 %v1242, %v1240
        %v1267 = vpack.c.b16 %v1245, %v1243
        %v1268 = vpack.c.b16 %v1246, %v1244
        %v1269 = vpack.c.b16 %v1249, %v1247
        %v1270 = vpack.c.b16 %v1250, %v1248
        %v1271 = vpack.c.b16 %v1253, %v1251
        %v1272 = vpack.c.b16 %v1254, %v1252
        %v1273 = vpack.c.b16 %v1257, %v1255
        %v1274 = vpack.c.b16 %v1258, %v1256
        %1291 = vmatprep.subr.bf16.mxu0 %v1274
        %1292 = vmatpush1.bf16.msra.mxu0 %v1273
        %1293 = vmatprep.subr.bf16.mxu0 %v1272
        %1294 = vmatpush1.bf16.msra.mxu0 %v1271
        %1295 = vmatprep.subr.bf16.mxu0 %v1270
        %1296 = vmatpush1.bf16.msra.mxu0 %v1269
        %1297 = vmatprep.subr.bf16.mxu0 %v1268
        %1298 = vmatpush1.bf16.msra.mxu0 %v1267
        %1299 = vmatprep.subr.bf16.mxu0 %v1266
        %1300 = vmatpush1.bf16.msra.mxu0 %v1265
        %1301 = vmatprep.subr.bf16.mxu0 %v1264
        %1302 = vmatpush1.bf16.msra.mxu0 %v1263
        %1303 = vmatprep.subr.bf16.mxu0 %v1262
        %1304 = vmatpush1.bf16.msra.mxu0 %v1261
        %1305 = vmatprep.subr.bf16.mxu0 %v1260
        %1306 = vmatpush1.bf16.msra.mxu0 %v1259
        %1307 = vmatprep.subr.bf16.mxu0 0
        %1308 = vmatpush2.bf16.msra.mxu0 0
        %1309 = vmatprep.subr.bf16.mxu0 0
        %1310 = vmatpush2.bf16.msra.mxu0 0
        %1311 = vmatprep.subr.bf16.mxu0 0
        %1312 = vmatpush2.bf16.msra.mxu0 0
        %1313 = vmatprep.subr.bf16.mxu0 0
        %1314 = vmatpush2.bf16.msra.mxu0 0
        %1315 = vmatprep.subr.bf16.mxu0 0
        %1316 = vmatpush2.bf16.msra.mxu0 0
        %1317 = vmatprep.subr.bf16.mxu0 0
        %1318 = vmatpush2.bf16.msra.mxu0 0
        %1319 = vmatprep.subr.bf16.mxu0 0
        %1320 = vmatpush2.bf16.msra.mxu0 0
        %1321 = vmatprep.subr.bf16.mxu0 0
        %1322 = vmatpush2.bf16.msra.mxu0 0
        %1323 = vmatprep.mubr.bf16.mxu0 0
        %1324 = vmatmul.mubr.bf16.gmra.mxu0 %v1193
        %v1325 = vpop.f32.mrf.mxu0
        %v1326 = vadd.f32 0.0, %v1325
        %v1327 = vpop.f32.mrf.mxu0
        %v1328 = vadd.f32 0.0, %v1327
        %v1329 = vpop.f32.mrf.mxu0
        %v1330 = vadd.f32 0.0, %v1329
        %v1331 = vpop.f32.mrf.mxu0
        %v1332 = vadd.f32 0.0, %v1331
        %1333 = vdwg.mxu0
        %v1334 = vadd.f32 %v1187, %v1326
        %v1335 = vadd.f32 %v1188, %v1328
        %v1336 = vadd.f32 %v1189, %v1330
        %v1337 = vadd.f32 %v1190, %v1332
        %v1338 = vld [vmem:[%s313 + $0x7] sm:$0xff]
        %v1339 = vld [vmem:[%s313 + $0xf] sm:$0x3]
        %v1340 = vpack.c.bf16 %v1339, %v1338
        %s1341 = scalar_lea.vmem [#allocation3], 896
        %v1342 = vld [vmem:[%s1341] sm:$0xff]
        %v1343 = vld [vmem:[%s1341 + $0x8] sm:$0xff]
        %v1344 = vld [vmem:[%s1341 + $0x10] sm:$0xff]
        %v1345 = vld [vmem:[%s1341 + $0x18] sm:$0xff]
        %v1346 = vld [vmem:[%s1341 + $0x20] sm:$0xff]
        %v1347 = vld [vmem:[%s1341 + $0x28] sm:$0xff]
        %v1348 = vld [vmem:[%s1341 + $0x30] sm:$0xff]
        %v1349 = vld [vmem:[%s1341 + $0x38] sm:$0xff]
        %v1350 = vld [vmem:[%s1341 + $0x40] sm:$0xff]
        %v1351 = vld [vmem:[%s1341 + $0x48] sm:$0xff]
        %v1352 = vld [vmem:[%s1341 + $0x50] sm:$0xff]
        %v1353 = vld [vmem:[%s1341 + $0x58] sm:$0xff]
        %v1354 = vld [vmem:[%s1341 + $0x60] sm:$0xff]
        %v1355 = vld [vmem:[%s1341 + $0x68] sm:$0xff]
        %v1356 = vld [vmem:[%s1341 + $0x70] sm:$0xff]
        %v1357 = vld [vmem:[%s1341 + $0x78] sm:$0xff]
        %v1374 = vunpack.c.l.b16 %v1342
        %v1375 = vunpack.c.h.b16 %v1342
        %v1376 = vunpack.c.l.b16 %v1343
        %v1377 = vunpack.c.h.b16 %v1343
        %v1378 = vunpack.c.l.b16 %v1344
        %v1379 = vunpack.c.h.b16 %v1344
        %v1380 = vunpack.c.l.b16 %v1345
        %v1381 = vunpack.c.h.b16 %v1345
        %v1382 = vunpack.c.l.b16 %v1346
        %v1383 = vunpack.c.h.b16 %v1346
        %v1384 = vunpack.c.l.b16 %v1347
        %v1385 = vunpack.c.h.b16 %v1347
        %v1386 = vunpack.c.l.b16 %v1348
        %v1387 = vunpack.c.h.b16 %v1348
        %v1388 = vunpack.c.l.b16 %v1349
        %v1389 = vunpack.c.h.b16 %v1349
        %v1390 = vunpack.c.l.b16 %v1350
        %v1391 = vunpack.c.h.b16 %v1350
        %v1392 = vunpack.c.l.b16 %v1351
        %v1393 = vunpack.c.h.b16 %v1351
        %v1394 = vunpack.c.l.b16 %v1352
        %v1395 = vunpack.c.h.b16 %v1352
        %v1396 = vunpack.c.l.b16 %v1353
        %v1397 = vunpack.c.h.b16 %v1353
        %v1398 = vunpack.c.l.b16 %v1354
        %v1399 = vunpack.c.h.b16 %v1354
        %v1400 = vunpack.c.l.b16 %v1355
        %v1401 = vunpack.c.h.b16 %v1355
        %v1402 = vunpack.c.l.b16 %v1356
        %v1403 = vunpack.c.h.b16 %v1356
        %v1404 = vunpack.c.l.b16 %v1357
        %v1405 = vunpack.c.h.b16 %v1357
        %v1406 = vpack.c.b16 %v1376, %v1374
        %v1407 = vpack.c.b16 %v1377, %v1375
        %v1408 = vpack.c.b16 %v1380, %v1378
        %v1409 = vpack.c.b16 %v1381, %v1379
        %v1410 = vpack.c.b16 %v1384, %v1382
        %v1411 = vpack.c.b16 %v1385, %v1383
        %v1412 = vpack.c.b16 %v1388, %v1386
        %v1413 = vpack.c.b16 %v1389, %v1387
        %v1414 = vpack.c.b16 %v1392, %v1390
        %v1415 = vpack.c.b16 %v1393, %v1391
        %v1416 = vpack.c.b16 %v1396, %v1394
        %v1417 = vpack.c.b16 %v1397, %v1395
        %v1418 = vpack.c.b16 %v1400, %v1398
        %v1419 = vpack.c.b16 %v1401, %v1399
        %v1420 = vpack.c.b16 %v1404, %v1402
        %v1421 = vpack.c.b16 %v1405, %v1403
        %1438 = vmatprep.subr.bf16.mxu0 %v1421
        %1439 = vmatpush1.bf16.msra.mxu0 %v1420
        %1440 = vmatprep.subr.bf16.mxu0 %v1419
        %1441 = vmatpush1.bf16.msra.mxu0 %v1418
        %1442 = vmatprep.subr.bf16.mxu0 %v1417
        %1443 = vmatpush1.bf16.msra.mxu0 %v1416
        %1444 = vmatprep.subr.bf16.mxu0 %v1415
        %1445 = vmatpush1.bf16.msra.mxu0 %v1414
        %1446 = vmatprep.subr.bf16.mxu0 %v1413
        %1447 = vmatpush1.bf16.msra.mxu0 %v1412
        %1448 = vmatprep.subr.bf16.mxu0 %v1411
        %1449 = vmatpush1.bf16.msra.mxu0 %v1410
        %1450 = vmatprep.subr.bf16.mxu0 %v1409
        %1451 = vmatpush1.bf16.msra.mxu0 %v1408
        %1452 = vmatprep.subr.bf16.mxu0 %v1407
        %1453 = vmatpush1.bf16.msra.mxu0 %v1406
        %1454 = vmatprep.subr.bf16.mxu0 0
        %1455 = vmatpush2.bf16.msra.mxu0 0
        %1456 = vmatprep.subr.bf16.mxu0 0
        %1457 = vmatpush2.bf16.msra.mxu0 0
        %1458 = vmatprep.subr.bf16.mxu0 0
        %1459 = vmatpush2.bf16.msra.mxu0 0
        %1460 = vmatprep.subr.bf16.mxu0 0
        %1461 = vmatpush2.bf16.msra.mxu0 0
        %1462 = vmatprep.subr.bf16.mxu0 0
        %1463 = vmatpush2.bf16.msra.mxu0 0
        %1464 = vmatprep.subr.bf16.mxu0 0
        %1465 = vmatpush2.bf16.msra.mxu0 0
        %1466 = vmatprep.subr.bf16.mxu0 0
        %1467 = vmatpush2.bf16.msra.mxu0 0
        %1468 = vmatprep.subr.bf16.mxu0 0
        %1469 = vmatpush2.bf16.msra.mxu0 0
        %1470 = vmatprep.mubr.bf16.mxu0 0
        %1471 = vmatmul.mubr.bf16.gmra.mxu0 %v1340
        %v1472 = vpop.f32.mrf.mxu0
        %v1473 = vadd.f32 0.0, %v1472
        %v1474 = vpop.f32.mrf.mxu0
        %v1475 = vadd.f32 0.0, %v1474
        %v1476 = vpop.f32.mrf.mxu0
        %v1477 = vadd.f32 0.0, %v1476
        %v1478 = vpop.f32.mrf.mxu0
        %v1479 = vadd.f32 0.0, %v1478
        %1480 = vdwg.mxu0
        %v1481 = vadd.f32 %v1334, %v1473
        %v1482 = vadd.f32 %v1335, %v1475
        %v1483 = vadd.f32 %v1336, %v1477
        %v1484 = vadd.f32 %v1337, %v1479
        %v1485 = vld [vmem:[%s313 + $0x8] sm:$0xff]
        %v1486 = vld [vmem:[%s313 + $0x10] sm:$0x3]
        %v1487 = vpack.c.bf16 %v1486, %v1485
        %s1488 = scalar_lea.vmem [#allocation3], 1024
        %v1489 = vld [vmem:[%s1488] sm:$0xff]
        %v1490 = vld [vmem:[%s1488 + $0x8] sm:$0xff]
        %v1491 = vld [vmem:[%s1488 + $0x10] sm:$0xff]
        %v1492 = vld [vmem:[%s1488 + $0x18] sm:$0xff]
        %v1493 = vld [vmem:[%s1488 + $0x20] sm:$0xff]
        %v1494 = vld [vmem:[%s1488 + $0x28] sm:$0xff]
        %v1495 = vld [vmem:[%s1488 + $0x30] sm:$0xff]
        %v1496 = vld [vmem:[%s1488 + $0x38] sm:$0xff]
        %v1497 = vld [vmem:[%s1488 + $0x40] sm:$0xff]
        %v1498 = vld [vmem:[%s1488 + $0x48] sm:$0xff]
        %v1499 = vld [vmem:[%s1488 + $0x50] sm:$0xff]
        %v1500 = vld [vmem:[%s1488 + $0x58] sm:$0xff]
        %v1501 = vld [vmem:[%s1488 + $0x60] sm:$0xff]
        %v1502 = vld [vmem:[%s1488 + $0x68] sm:$0xff]
        %v1503 = vld [vmem:[%s1488 + $0x70] sm:$0xff]
        %v1504 = vld [vmem:[%s1488 + $0x78] sm:$0xff]
        %v1521 = vunpack.c.l.b16 %v1489
        %v1522 = vunpack.c.h.b16 %v1489
        %v1523 = vunpack.c.l.b16 %v1490
        %v1524 = vunpack.c.h.b16 %v1490
        %v1525 = vunpack.c.l.b16 %v1491
        %v1526 = vunpack.c.h.b16 %v1491
        %v1527 = vunpack.c.l.b16 %v1492
        %v1528 = vunpack.c.h.b16 %v1492
        %v1529 = vunpack.c.l.b16 %v1493
        %v1530 = vunpack.c.h.b16 %v1493
        %v1531 = vunpack.c.l.b16 %v1494
        %v1532 = vunpack.c.h.b16 %v1494
        %v1533 = vunpack.c.l.b16 %v1495
        %v1534 = vunpack.c.h.b16 %v1495
        %v1535 = vunpack.c.l.b16 %v1496
        %v1536 = vunpack.c.h.b16 %v1496
        %v1537 = vunpack.c.l.b16 %v1497
        %v1538 = vunpack.c.h.b16 %v1497
        %v1539 = vunpack.c.l.b16 %v1498
        %v1540 = vunpack.c.h.b16 %v1498
        %v1541 = vunpack.c.l.b16 %v1499
        %v1542 = vunpack.c.h.b16 %v1499
        %v1543 = vunpack.c.l.b16 %v1500
        %v1544 = vunpack.c.h.b16 %v1500
        %v1545 = vunpack.c.l.b16 %v1501
        %v1546 = vunpack.c.h.b16 %v1501
        %v1547 = vunpack.c.l.b16 %v1502
        %v1548 = vunpack.c.h.b16 %v1502
        %v1549 = vunpack.c.l.b16 %v1503
        %v1550 = vunpack.c.h.b16 %v1503
        %v1551 = vunpack.c.l.b16 %v1504
        %v1552 = vunpack.c.h.b16 %v1504
        %v1553 = vpack.c.b16 %v1523, %v1521
        %v1554 = vpack.c.b16 %v1524, %v1522
        %v1555 = vpack.c.b16 %v1527, %v1525
        %v1556 = vpack.c.b16 %v1528, %v1526
        %v1557 = vpack.c.b16 %v1531, %v1529
        %v1558 = vpack.c.b16 %v1532, %v1530
        %v1559 = vpack.c.b16 %v1535, %v1533
        %v1560 = vpack.c.b16 %v1536, %v1534
        %v1561 = vpack.c.b16 %v1539, %v1537
        %v1562 = vpack.c.b16 %v1540, %v1538
        %v1563 = vpack.c.b16 %v1543, %v1541
        %v1564 = vpack.c.b16 %v1544, %v1542
        %v1565 = vpack.c.b16 %v1547, %v1545
        %v1566 = vpack.c.b16 %v1548, %v1546
        %v1567 = vpack.c.b16 %v1551, %v1549
        %v1568 = vpack.c.b16 %v1552, %v1550
        %1585 = vmatprep.subr.bf16.mxu0 %v1568
        %1586 = vmatpush1.bf16.msra.mxu0 %v1567
        %1587 = vmatprep.subr.bf16.mxu0 %v1566
        %1588 = vmatpush1.bf16.msra.mxu0 %v1565
        %1589 = vmatprep.subr.bf16.mxu0 %v1564
        %1590 = vmatpush1.bf16.msra.mxu0 %v1563
        %1591 = vmatprep.subr.bf16.mxu0 %v1562
        %1592 = vmatpush1.bf16.msra.mxu0 %v1561
        %1593 = vmatprep.subr.bf16.mxu0 %v1560
        %1594 = vmatpush1.bf16.msra.mxu0 %v1559
        %1595 = vmatprep.subr.bf16.mxu0 %v1558
        %1596 = vmatpush1.bf16.msra.mxu0 %v1557
        %1597 = vmatprep.subr.bf16.mxu0 %v1556
        %1598 = vmatpush1.bf16.msra.mxu0 %v1555
        %1599 = vmatprep.subr.bf16.mxu0 %v1554
        %1600 = vmatpush1.bf16.msra.mxu0 %v1553
        %1601 = vmatprep.subr.bf16.mxu0 0
        %1602 = vmatpush2.bf16.msra.mxu0 0
        %1603 = vmatprep.subr.bf16.mxu0 0
        %1604 = vmatpush2.bf16.msra.mxu0 0
        %1605 = vmatprep.subr.bf16.mxu0 0
        %1606 = vmatpush2.bf16.msra.mxu0 0
        %1607 = vmatprep.subr.bf16.mxu0 0
        %1608 = vmatpush2.bf16.msra.mxu0 0
        %1609 = vmatprep.subr.bf16.mxu0 0
        %1610 = vmatpush2.bf16.msra.mxu0 0
        %1611 = vmatprep.subr.bf16.mxu0 0
        %1612 = vmatpush2.bf16.msra.mxu0 0
        %1613 = vmatprep.subr.bf16.mxu0 0
        %1614 = vmatpush2.bf16.msra.mxu0 0
        %1615 = vmatprep.subr.bf16.mxu0 0
        %1616 = vmatpush2.bf16.msra.mxu0 0
        %1617 = vmatprep.mubr.bf16.mxu0 0
        %1618 = vmatmul.mubr.bf16.gmra.mxu0 %v1487
        %v1619 = vpop.f32.mrf.mxu0
        %v1620 = vadd.f32 0.0, %v1619
        %v1621 = vpop.f32.mrf.mxu0
        %v1622 = vadd.f32 0.0, %v1621
        %v1623 = vpop.f32.mrf.mxu0
        %v1624 = vadd.f32 0.0, %v1623
        %v1625 = vpop.f32.mrf.mxu0
        %v1626 = vadd.f32 0.0, %v1625
        %1627 = vdwg.mxu0
        %v1628 = vadd.f32 %v1481, %v1620
        %v1629 = vadd.f32 %v1482, %v1622
        %v1630 = vadd.f32 %v1483, %v1624
        %v1631 = vadd.f32 %v1484, %v1626
        %v1632 = vld [vmem:[%s313 + $0x9] sm:$0xff]
        %v1633 = vld [vmem:[%s313 + $0x11] sm:$0x3]
        %v1634 = vpack.c.bf16 %v1633, %v1632
        %s1635 = scalar_lea.vmem [#allocation3], 1152
        %v1636 = vld [vmem:[%s1635] sm:$0xff]
        %v1637 = vld [vmem:[%s1635 + $0x8] sm:$0xff]
        %v1638 = vld [vmem:[%s1635 + $0x10] sm:$0xff]
        %v1639 = vld [vmem:[%s1635 + $0x18] sm:$0xff]
        %v1640 = vld [vmem:[%s1635 + $0x20] sm:$0xff]
        %v1641 = vld [vmem:[%s1635 + $0x28] sm:$0xff]
        %v1642 = vld [vmem:[%s1635 + $0x30] sm:$0xff]
        %v1643 = vld [vmem:[%s1635 + $0x38] sm:$0xff]
        %v1644 = vld [vmem:[%s1635 + $0x40] sm:$0xff]
        %v1645 = vld [vmem:[%s1635 + $0x48] sm:$0xff]
        %v1646 = vld [vmem:[%s1635 + $0x50] sm:$0xff]
        %v1647 = vld [vmem:[%s1635 + $0x58] sm:$0xff]
        %v1648 = vld [vmem:[%s1635 + $0x60] sm:$0xff]
        %v1649 = vld [vmem:[%s1635 + $0x68] sm:$0xff]
        %v1650 = vld [vmem:[%s1635 + $0x70] sm:$0xff]
        %v1651 = vld [vmem:[%s1635 + $0x78] sm:$0xff]
        %v1668 = vunpack.c.l.b16 %v1636
        %v1669 = vunpack.c.h.b16 %v1636
        %v1670 = vunpack.c.l.b16 %v1637
        %v1671 = vunpack.c.h.b16 %v1637
        %v1672 = vunpack.c.l.b16 %v1638
        %v1673 = vunpack.c.h.b16 %v1638
        %v1674 = vunpack.c.l.b16 %v1639
        %v1675 = vunpack.c.h.b16 %v1639
        %v1676 = vunpack.c.l.b16 %v1640
        %v1677 = vunpack.c.h.b16 %v1640
        %v1678 = vunpack.c.l.b16 %v1641
        %v1679 = vunpack.c.h.b16 %v1641
        %v1680 = vunpack.c.l.b16 %v1642
        %v1681 = vunpack.c.h.b16 %v1642
        %v1682 = vunpack.c.l.b16 %v1643
        %v1683 = vunpack.c.h.b16 %v1643
        %v1684 = vunpack.c.l.b16 %v1644
        %v1685 = vunpack.c.h.b16 %v1644
        %v1686 = vunpack.c.l.b16 %v1645
        %v1687 = vunpack.c.h.b16 %v1645
        %v1688 = vunpack.c.l.b16 %v1646
        %v1689 = vunpack.c.h.b16 %v1646
        %v1690 = vunpack.c.l.b16 %v1647
        %v1691 = vunpack.c.h.b16 %v1647
        %v1692 = vunpack.c.l.b16 %v1648
        %v1693 = vunpack.c.h.b16 %v1648
        %v1694 = vunpack.c.l.b16 %v1649
        %v1695 = vunpack.c.h.b16 %v1649
        %v1696 = vunpack.c.l.b16 %v1650
        %v1697 = vunpack.c.h.b16 %v1650
        %v1698 = vunpack.c.l.b16 %v1651
        %v1699 = vunpack.c.h.b16 %v1651
        %v1700 = vpack.c.b16 %v1670, %v1668
        %v1701 = vpack.c.b16 %v1671, %v1669
        %v1702 = vpack.c.b16 %v1674, %v1672
        %v1703 = vpack.c.b16 %v1675, %v1673
        %v1704 = vpack.c.b16 %v1678, %v1676
        %v1705 = vpack.c.b16 %v1679, %v1677
        %v1706 = vpack.c.b16 %v1682, %v1680
        %v1707 = vpack.c.b16 %v1683, %v1681
        %v1708 = vpack.c.b16 %v1686, %v1684
        %v1709 = vpack.c.b16 %v1687, %v1685
        %v1710 = vpack.c.b16 %v1690, %v1688
        %v1711 = vpack.c.b16 %v1691, %v1689
        %v1712 = vpack.c.b16 %v1694, %v1692
        %v1713 = vpack.c.b16 %v1695, %v1693
        %v1714 = vpack.c.b16 %v1698, %v1696
        %v1715 = vpack.c.b16 %v1699, %v1697
        %1732 = vmatprep.subr.bf16.mxu0 %v1715
        %1733 = vmatpush1.bf16.msra.mxu0 %v1714
        %1734 = vmatprep.subr.bf16.mxu0 %v1713
        %1735 = vmatpush1.bf16.msra.mxu0 %v1712
        %1736 = vmatprep.subr.bf16.mxu0 %v1711
        %1737 = vmatpush1.bf16.msra.mxu0 %v1710
        %1738 = vmatprep.subr.bf16.mxu0 %v1709
        %1739 = vmatpush1.bf16.msra.mxu0 %v1708
        %1740 = vmatprep.subr.bf16.mxu0 %v1707
        %1741 = vmatpush1.bf16.msra.mxu0 %v1706
        %1742 = vmatprep.subr.bf16.mxu0 %v1705
        %1743 = vmatpush1.bf16.msra.mxu0 %v1704
        %1744 = vmatprep.subr.bf16.mxu0 %v1703
        %1745 = vmatpush1.bf16.msra.mxu0 %v1702
        %1746 = vmatprep.subr.bf16.mxu0 %v1701
        %1747 = vmatpush1.bf16.msra.mxu0 %v1700
        %1748 = vmatprep.subr.bf16.mxu0 0
        %1749 = vmatpush2.bf16.msra.mxu0 0
        %1750 = vmatprep.subr.bf16.mxu0 0
        %1751 = vmatpush2.bf16.msra.mxu0 0
        %1752 = vmatprep.subr.bf16.mxu0 0
        %1753 = vmatpush2.bf16.msra.mxu0 0
        %1754 = vmatprep.subr.bf16.mxu0 0
        %1755 = vmatpush2.bf16.msra.mxu0 0
        %1756 = vmatprep.subr.bf16.mxu0 0
        %1757 = vmatpush2.bf16.msra.mxu0 0
        %1758 = vmatprep.subr.bf16.mxu0 0
        %1759 = vmatpush2.bf16.msra.mxu0 0
        %1760 = vmatprep.subr.bf16.mxu0 0
        %1761 = vmatpush2.bf16.msra.mxu0 0
        %1762 = vmatprep.subr.bf16.mxu0 0
        %1763 = vmatpush2.bf16.msra.mxu0 0
        %1764 = vmatprep.mubr.bf16.mxu0 0
        %1765 = vmatmul.mubr.bf16.gmra.mxu0 %v1634
        %v1766 = vpop.f32.mrf.mxu0
        %v1767 = vadd.f32 0.0, %v1766
        %v1768 = vpop.f32.mrf.mxu0
        %v1769 = vadd.f32 0.0, %v1768
        %v1770 = vpop.f32.mrf.mxu0
        %v1771 = vadd.f32 0.0, %v1770
        %v1772 = vpop.f32.mrf.mxu0
        %v1773 = vadd.f32 0.0, %v1772
        %1774 = vdwg.mxu0
        %v1775 = vadd.f32 %v1628, %v1767
        %v1776 = vadd.f32 %v1629, %v1769
        %v1777 = vadd.f32 %v1630, %v1771
        %v1778 = vadd.f32 %v1631, %v1773
        %v1779 = vld [vmem:[%s313 + $0xa] sm:$0xff]
        %v1780 = vld [vmem:[%s313 + $0x12] sm:$0x3]
        %v1781 = vpack.c.bf16 %v1780, %v1779
        %s1782 = scalar_lea.vmem [#allocation3], 1280
        %v1783 = vld [vmem:[%s1782] sm:$0xff]
        %v1784 = vld [vmem:[%s1782 + $0x8] sm:$0xff]
        %v1785 = vld [vmem:[%s1782 + $0x10] sm:$0xff]
        %v1786 = vld [vmem:[%s1782 + $0x18] sm:$0xff]
        %v1787 = vld [vmem:[%s1782 + $0x20] sm:$0xff]
        %v1788 = vld [vmem:[%s1782 + $0x28] sm:$0xff]
        %v1789 = vld [vmem:[%s1782 + $0x30] sm:$0xff]
        %v1790 = vld [vmem:[%s1782 + $0x38] sm:$0xff]
        %v1791 = vld [vmem:[%s1782 + $0x40] sm:$0xff]
        %v1792 = vld [vmem:[%s1782 + $0x48] sm:$0xff]
        %v1793 = vld [vmem:[%s1782 + $0x50] sm:$0xff]
        %v1794 = vld [vmem:[%s1782 + $0x58] sm:$0xff]
        %v1795 = vld [vmem:[%s1782 + $0x60] sm:$0xff]
        %v1796 = vld [vmem:[%s1782 + $0x68] sm:$0xff]
        %v1797 = vld [vmem:[%s1782 + $0x70] sm:$0xff]
        %v1798 = vld [vmem:[%s1782 + $0x78] sm:$0xff]
        %v1815 = vunpack.c.l.b16 %v1783
        %v1816 = vunpack.c.h.b16 %v1783
        %v1817 = vunpack.c.l.b16 %v1784
        %v1818 = vunpack.c.h.b16 %v1784
        %v1819 = vunpack.c.l.b16 %v1785
        %v1820 = vunpack.c.h.b16 %v1785
        %v1821 = vunpack.c.l.b16 %v1786
        %v1822 = vunpack.c.h.b16 %v1786
        %v1823 = vunpack.c.l.b16 %v1787
        %v1824 = vunpack.c.h.b16 %v1787
        %v1825 = vunpack.c.l.b16 %v1788
        %v1826 = vunpack.c.h.b16 %v1788
        %v1827 = vunpack.c.l.b16 %v1789
        %v1828 = vunpack.c.h.b16 %v1789
        %v1829 = vunpack.c.l.b16 %v1790
        %v1830 = vunpack.c.h.b16 %v1790
        %v1831 = vunpack.c.l.b16 %v1791
        %v1832 = vunpack.c.h.b16 %v1791
        %v1833 = vunpack.c.l.b16 %v1792
        %v1834 = vunpack.c.h.b16 %v1792
        %v1835 = vunpack.c.l.b16 %v1793
        %v1836 = vunpack.c.h.b16 %v1793
        %v1837 = vunpack.c.l.b16 %v1794
        %v1838 = vunpack.c.h.b16 %v1794
        %v1839 = vunpack.c.l.b16 %v1795
        %v1840 = vunpack.c.h.b16 %v1795
        %v1841 = vunpack.c.l.b16 %v1796
        %v1842 = vunpack.c.h.b16 %v1796
        %v1843 = vunpack.c.l.b16 %v1797
        %v1844 = vunpack.c.h.b16 %v1797
        %v1845 = vunpack.c.l.b16 %v1798
        %v1846 = vunpack.c.h.b16 %v1798
        %v1847 = vpack.c.b16 %v1817, %v1815
        %v1848 = vpack.c.b16 %v1818, %v1816
        %v1849 = vpack.c.b16 %v1821, %v1819
        %v1850 = vpack.c.b16 %v1822, %v1820
        %v1851 = vpack.c.b16 %v1825, %v1823
        %v1852 = vpack.c.b16 %v1826, %v1824
        %v1853 = vpack.c.b16 %v1829, %v1827
        %v1854 = vpack.c.b16 %v1830, %v1828
        %v1855 = vpack.c.b16 %v1833, %v1831
        %v1856 = vpack.c.b16 %v1834, %v1832
        %v1857 = vpack.c.b16 %v1837, %v1835
        %v1858 = vpack.c.b16 %v1838, %v1836
        %v1859 = vpack.c.b16 %v1841, %v1839
        %v1860 = vpack.c.b16 %v1842, %v1840
        %v1861 = vpack.c.b16 %v1845, %v1843
        %v1862 = vpack.c.b16 %v1846, %v1844
        %1879 = vmatprep.subr.bf16.mxu0 %v1862
        %1880 = vmatpush1.bf16.msra.mxu0 %v1861
        %1881 = vmatprep.subr.bf16.mxu0 %v1860
        %1882 = vmatpush1.bf16.msra.mxu0 %v1859
        %1883 = vmatprep.subr.bf16.mxu0 %v1858
        %1884 = vmatpush1.bf16.msra.mxu0 %v1857
        %1885 = vmatprep.subr.bf16.mxu0 %v1856
        %1886 = vmatpush1.bf16.msra.mxu0 %v1855
        %1887 = vmatprep.subr.bf16.mxu0 %v1854
        %1888 = vmatpush1.bf16.msra.mxu0 %v1853
        %1889 = vmatprep.subr.bf16.mxu0 %v1852
        %1890 = vmatpush1.bf16.msra.mxu0 %v1851
        %1891 = vmatprep.subr.bf16.mxu0 %v1850
        %1892 = vmatpush1.bf16.msra.mxu0 %v1849
        %1893 = vmatprep.subr.bf16.mxu0 %v1848
        %1894 = vmatpush1.bf16.msra.mxu0 %v1847
        %1895 = vmatprep.subr.bf16.mxu0 0
        %1896 = vmatpush2.bf16.msra.mxu0 0
        %1897 = vmatprep.subr.bf16.mxu0 0
        %1898 = vmatpush2.bf16.msra.mxu0 0
        %1899 = vmatprep.subr.bf16.mxu0 0
        %1900 = vmatpush2.bf16.msra.mxu0 0
        %1901 = vmatprep.subr.bf16.mxu0 0
        %1902 = vmatpush2.bf16.msra.mxu0 0
        %1903 = vmatprep.subr.bf16.mxu0 0
        %1904 = vmatpush2.bf16.msra.mxu0 0
        %1905 = vmatprep.subr.bf16.mxu0 0
        %1906 = vmatpush2.bf16.msra.mxu0 0
        %1907 = vmatprep.subr.bf16.mxu0 0
        %1908 = vmatpush2.bf16.msra.mxu0 0
        %1909 = vmatprep.subr.bf16.mxu0 0
        %1910 = vmatpush2.bf16.msra.mxu0 0
        %1911 = vmatprep.mubr.bf16.mxu0 0
        %1912 = vmatmul.mubr.bf16.gmra.mxu0 %v1781
        %v1913 = vpop.f32.mrf.mxu0
        %v1914 = vadd.f32 0.0, %v1913
        %v1915 = vpop.f32.mrf.mxu0
        %v1916 = vadd.f32 0.0, %v1915
        %v1917 = vpop.f32.mrf.mxu0
        %v1918 = vadd.f32 0.0, %v1917
        %v1919 = vpop.f32.mrf.mxu0
        %v1920 = vadd.f32 0.0, %v1919
        %1921 = vdwg.mxu0
        %v1922 = vadd.f32 %v1775, %v1914
        %v1923 = vadd.f32 %v1776, %v1916
        %v1924 = vadd.f32 %v1777, %v1918
        %v1925 = vadd.f32 %v1778, %v1920
        %v1926 = vld [vmem:[%s313 + $0xb] sm:$0xff]
        %v1927 = vld [vmem:[%s313 + $0x13] sm:$0x3]
        %v1928 = vpack.c.bf16 %v1927, %v1926
        %s1929 = scalar_lea.vmem [#allocation3], 1408
        %v1930 = vld [vmem:[%s1929] sm:$0xff]
        %v1931 = vld [vmem:[%s1929 + $0x8] sm:$0xff]
        %v1932 = vld [vmem:[%s1929 + $0x10] sm:$0xff]
        %v1933 = vld [vmem:[%s1929 + $0x18] sm:$0xff]
        %v1934 = vld [vmem:[%s1929 + $0x20] sm:$0xff]
        %v1935 = vld [vmem:[%s1929 + $0x28] sm:$0xff]
        %v1936 = vld [vmem:[%s1929 + $0x30] sm:$0xff]
        %v1937 = vld [vmem:[%s1929 + $0x38] sm:$0xff]
        %v1938 = vld [vmem:[%s1929 + $0x40] sm:$0xff]
        %v1939 = vld [vmem:[%s1929 + $0x48] sm:$0xff]
        %v1940 = vld [vmem:[%s1929 + $0x50] sm:$0xff]
        %v1941 = vld [vmem:[%s1929 + $0x58] sm:$0xff]
        %v1942 = vld [vmem:[%s1929 + $0x60] sm:$0xff]
        %v1943 = vld [vmem:[%s1929 + $0x68] sm:$0xff]
        %v1944 = vld [vmem:[%s1929 + $0x70] sm:$0xff]
        %v1945 = vld [vmem:[%s1929 + $0x78] sm:$0xff]
        %v1962 = vunpack.c.l.b16 %v1930
        %v1963 = vunpack.c.h.b16 %v1930
        %v1964 = vunpack.c.l.b16 %v1931
        %v1965 = vunpack.c.h.b16 %v1931
        %v1966 = vunpack.c.l.b16 %v1932
        %v1967 = vunpack.c.h.b16 %v1932
        %v1968 = vunpack.c.l.b16 %v1933
        %v1969 = vunpack.c.h.b16 %v1933
        %v1970 = vunpack.c.l.b16 %v1934
        %v1971 = vunpack.c.h.b16 %v1934
        %v1972 = vunpack.c.l.b16 %v1935
        %v1973 = vunpack.c.h.b16 %v1935
        %v1974 = vunpack.c.l.b16 %v1936
        %v1975 = vunpack.c.h.b16 %v1936
        %v1976 = vunpack.c.l.b16 %v1937
        %v1977 = vunpack.c.h.b16 %v1937
        %v1978 = vunpack.c.l.b16 %v1938
        %v1979 = vunpack.c.h.b16 %v1938
        %v1980 = vunpack.c.l.b16 %v1939
        %v1981 = vunpack.c.h.b16 %v1939
        %v1982 = vunpack.c.l.b16 %v1940
        %v1983 = vunpack.c.h.b16 %v1940
        %v1984 = vunpack.c.l.b16 %v1941
        %v1985 = vunpack.c.h.b16 %v1941
        %v1986 = vunpack.c.l.b16 %v1942
        %v1987 = vunpack.c.h.b16 %v1942
        %v1988 = vunpack.c.l.b16 %v1943
        %v1989 = vunpack.c.h.b16 %v1943
        %v1990 = vunpack.c.l.b16 %v1944
        %v1991 = vunpack.c.h.b16 %v1944
        %v1992 = vunpack.c.l.b16 %v1945
        %v1993 = vunpack.c.h.b16 %v1945
        %v1994 = vpack.c.b16 %v1964, %v1962
        %v1995 = vpack.c.b16 %v1965, %v1963
        %v1996 = vpack.c.b16 %v1968, %v1966
        %v1997 = vpack.c.b16 %v1969, %v1967
        %v1998 = vpack.c.b16 %v1972, %v1970
        %v1999 = vpack.c.b16 %v1973, %v1971
        %v2000 = vpack.c.b16 %v1976, %v1974
        %v2001 = vpack.c.b16 %v1977, %v1975
        %v2002 = vpack.c.b16 %v1980, %v1978
        %v2003 = vpack.c.b16 %v1981, %v1979
        %v2004 = vpack.c.b16 %v1984, %v1982
        %v2005 = vpack.c.b16 %v1985, %v1983
        %v2006 = vpack.c.b16 %v1988, %v1986
        %v2007 = vpack.c.b16 %v1989, %v1987
        %v2008 = vpack.c.b16 %v1992, %v1990
        %v2009 = vpack.c.b16 %v1993, %v1991
        %2026 = vmatprep.subr.bf16.mxu0 %v2009
        %2027 = vmatpush1.bf16.msra.mxu0 %v2008
        %2028 = vmatprep.subr.bf16.mxu0 %v2007
        %2029 = vmatpush1.bf16.msra.mxu0 %v2006
        %2030 = vmatprep.subr.bf16.mxu0 %v2005
        %2031 = vmatpush1.bf16.msra.mxu0 %v2004
        %2032 = vmatprep.subr.bf16.mxu0 %v2003
        %2033 = vmatpush1.bf16.msra.mxu0 %v2002
        %2034 = vmatprep.subr.bf16.mxu0 %v2001
        %2035 = vmatpush1.bf16.msra.mxu0 %v2000
        %2036 = vmatprep.subr.bf16.mxu0 %v1999
        %2037 = vmatpush1.bf16.msra.mxu0 %v1998
        %2038 = vmatprep.subr.bf16.mxu0 %v1997
        %2039 = vmatpush1.bf16.msra.mxu0 %v1996
        %2040 = vmatprep.subr.bf16.mxu0 %v1995
        %2041 = vmatpush1.bf16.msra.mxu0 %v1994
        %2042 = vmatprep.subr.bf16.mxu0 0
        %2043 = vmatpush2.bf16.msra.mxu0 0
        %2044 = vmatprep.subr.bf16.mxu0 0
        %2045 = vmatpush2.bf16.msra.mxu0 0
        %2046 = vmatprep.subr.bf16.mxu0 0
        %2047 = vmatpush2.bf16.msra.mxu0 0
        %2048 = vmatprep.subr.bf16.mxu0 0
        %2049 = vmatpush2.bf16.msra.mxu0 0
        %2050 = vmatprep.subr.bf16.mxu0 0
        %2051 = vmatpush2.bf16.msra.mxu0 0
        %2052 = vmatprep.subr.bf16.mxu0 0
        %2053 = vmatpush2.bf16.msra.mxu0 0
        %2054 = vmatprep.subr.bf16.mxu0 0
        %2055 = vmatpush2.bf16.msra.mxu0 0
        %2056 = vmatprep.subr.bf16.mxu0 0
        %2057 = vmatpush2.bf16.msra.mxu0 0
        %2058 = vmatprep.mubr.bf16.mxu0 0
        %2059 = vmatmul.mubr.bf16.gmra.mxu0 %v1928
        %v2060 = vpop.f32.mrf.mxu0
        %v2061 = vadd.f32 0.0, %v2060
        %v2062 = vpop.f32.mrf.mxu0
        %v2063 = vadd.f32 0.0, %v2062
        %v2064 = vpop.f32.mrf.mxu0
        %v2065 = vadd.f32 0.0, %v2064
        %v2066 = vpop.f32.mrf.mxu0
        %v2067 = vadd.f32 0.0, %v2066
        %2068 = vdwg.mxu0
        %v2069 = vadd.f32 %v1922, %v2061
        %v2070 = vadd.f32 %v1923, %v2063
        %v2071 = vadd.f32 %v1924, %v2065
        %v2072 = vadd.f32 %v1925, %v2067
        %v2073 = vld [vmem:[%s313 + $0xc] sm:$0xff]
        %v2074 = vld [vmem:[%s313 + $0x14] sm:$0x3]
        %v2075 = vpack.c.bf16 %v2074, %v2073
        %s2076 = scalar_lea.vmem [#allocation3], 1536
        %v2077 = vld [vmem:[%s2076] sm:$0xff]
        %v2078 = vld [vmem:[%s2076 + $0x8] sm:$0xff]
        %v2079 = vld [vmem:[%s2076 + $0x10] sm:$0xff]
        %v2080 = vld [vmem:[%s2076 + $0x18] sm:$0xff]
        %v2081 = vld [vmem:[%s2076 + $0x20] sm:$0xff]
        %v2082 = vld [vmem:[%s2076 + $0x28] sm:$0xff]
        %v2083 = vld [vmem:[%s2076 + $0x30] sm:$0xff]
        %v2084 = vld [vmem:[%s2076 + $0x38] sm:$0xff]
        %v2085 = vld [vmem:[%s2076 + $0x40] sm:$0xff]
        %v2086 = vld [vmem:[%s2076 + $0x48] sm:$0xff]
        %v2087 = vld [vmem:[%s2076 + $0x50] sm:$0xff]
        %v2088 = vld [vmem:[%s2076 + $0x58] sm:$0xff]
        %v2089 = vld [vmem:[%s2076 + $0x60] sm:$0xff]
        %v2090 = vld [vmem:[%s2076 + $0x68] sm:$0xff]
        %v2091 = vld [vmem:[%s2076 + $0x70] sm:$0xff]
        %v2092 = vld [vmem:[%s2076 + $0x78] sm:$0xff]
        %v2109 = vunpack.c.l.b16 %v2077
        %v2110 = vunpack.c.h.b16 %v2077
        %v2111 = vunpack.c.l.b16 %v2078
        %v2112 = vunpack.c.h.b16 %v2078
        %v2113 = vunpack.c.l.b16 %v2079
        %v2114 = vunpack.c.h.b16 %v2079
        %v2115 = vunpack.c.l.b16 %v2080
        %v2116 = vunpack.c.h.b16 %v2080
        %v2117 = vunpack.c.l.b16 %v2081
        %v2118 = vunpack.c.h.b16 %v2081
        %v2119 = vunpack.c.l.b16 %v2082
        %v2120 = vunpack.c.h.b16 %v2082
        %v2121 = vunpack.c.l.b16 %v2083
        %v2122 = vunpack.c.h.b16 %v2083
        %v2123 = vunpack.c.l.b16 %v2084
        %v2124 = vunpack.c.h.b16 %v2084
        %v2125 = vunpack.c.l.b16 %v2085
        %v2126 = vunpack.c.h.b16 %v2085
        %v2127 = vunpack.c.l.b16 %v2086
        %v2128 = vunpack.c.h.b16 %v2086
        %v2129 = vunpack.c.l.b16 %v2087
        %v2130 = vunpack.c.h.b16 %v2087
        %v2131 = vunpack.c.l.b16 %v2088
        %v2132 = vunpack.c.h.b16 %v2088
        %v2133 = vunpack.c.l.b16 %v2089
        %v2134 = vunpack.c.h.b16 %v2089
        %v2135 = vunpack.c.l.b16 %v2090
        %v2136 = vunpack.c.h.b16 %v2090
        %v2137 = vunpack.c.l.b16 %v2091
        %v2138 = vunpack.c.h.b16 %v2091
        %v2139 = vunpack.c.l.b16 %v2092
        %v2140 = vunpack.c.h.b16 %v2092
        %v2141 = vpack.c.b16 %v2111, %v2109
        %v2142 = vpack.c.b16 %v2112, %v2110
        %v2143 = vpack.c.b16 %v2115, %v2113
        %v2144 = vpack.c.b16 %v2116, %v2114
        %v2145 = vpack.c.b16 %v2119, %v2117
        %v2146 = vpack.c.b16 %v2120, %v2118
        %v2147 = vpack.c.b16 %v2123, %v2121
        %v2148 = vpack.c.b16 %v2124, %v2122
        %v2149 = vpack.c.b16 %v2127, %v2125
        %v2150 = vpack.c.b16 %v2128, %v2126
        %v2151 = vpack.c.b16 %v2131, %v2129
        %v2152 = vpack.c.b16 %v2132, %v2130
        %v2153 = vpack.c.b16 %v2135, %v2133
        %v2154 = vpack.c.b16 %v2136, %v2134
        %v2155 = vpack.c.b16 %v2139, %v2137
        %v2156 = vpack.c.b16 %v2140, %v2138
        %2173 = vmatprep.subr.bf16.mxu0 %v2156
        %2174 = vmatpush1.bf16.msra.mxu0 %v2155
        %2175 = vmatprep.subr.bf16.mxu0 %v2154
        %2176 = vmatpush1.bf16.msra.mxu0 %v2153
        %2177 = vmatprep.subr.bf16.mxu0 %v2152
        %2178 = vmatpush1.bf16.msra.mxu0 %v2151
        %2179 = vmatprep.subr.bf16.mxu0 %v2150
        %2180 = vmatpush1.bf16.msra.mxu0 %v2149
        %2181 = vmatprep.subr.bf16.mxu0 %v2148
        %2182 = vmatpush1.bf16.msra.mxu0 %v2147
        %2183 = vmatprep.subr.bf16.mxu0 %v2146
        %2184 = vmatpush1.bf16.msra.mxu0 %v2145
        %2185 = vmatprep.subr.bf16.mxu0 %v2144
        %2186 = vmatpush1.bf16.msra.mxu0 %v2143
        %2187 = vmatprep.subr.bf16.mxu0 %v2142
        %2188 = vmatpush1.bf16.msra.mxu0 %v2141
        %2189 = vmatprep.subr.bf16.mxu0 0
        %2190 = vmatpush2.bf16.msra.mxu0 0
        %2191 = vmatprep.subr.bf16.mxu0 0
        %2192 = vmatpush2.bf16.msra.mxu0 0
        %2193 = vmatprep.subr.bf16.mxu0 0
        %2194 = vmatpush2.bf16.msra.mxu0 0
        %2195 = vmatprep.subr.bf16.mxu0 0
        %2196 = vmatpush2.bf16.msra.mxu0 0
        %2197 = vmatprep.subr.bf16.mxu0 0
        %2198 = vmatpush2.bf16.msra.mxu0 0
        %2199 = vmatprep.subr.bf16.mxu0 0
        %2200 = vmatpush2.bf16.msra.mxu0 0
        %2201 = vmatprep.subr.bf16.mxu0 0
        %2202 = vmatpush2.bf16.msra.mxu0 0
        %2203 = vmatprep.subr.bf16.mxu0 0
        %2204 = vmatpush2.bf16.msra.mxu0 0
        %2205 = vmatprep.mubr.bf16.mxu0 0
        %2206 = vmatmul.mubr.bf16.gmra.mxu0 %v2075
        %v2207 = vpop.f32.mrf.mxu0
        %v2208 = vadd.f32 0.0, %v2207
        %v2209 = vpop.f32.mrf.mxu0
        %v2210 = vadd.f32 0.0, %v2209
        %v2211 = vpop.f32.mrf.mxu0
        %v2212 = vadd.f32 0.0, %v2211
        %v2213 = vpop.f32.mrf.mxu0
        %v2214 = vadd.f32 0.0, %v2213
        %2215 = vdwg.mxu0
        %v2216 = vadd.f32 %v2069, %v2208
        %v2217 = vadd.f32 %v2070, %v2210
        %v2218 = vadd.f32 %v2071, %v2212
        %v2219 = vadd.f32 %v2072, %v2214
        %v2220 = vld [vmem:[%s313 + $0xd] sm:$0xff]
        %v2221 = vld [vmem:[%s313 + $0x15] sm:$0x3]
        %v2222 = vpack.c.bf16 %v2221, %v2220
        %s2223 = scalar_lea.vmem [#allocation3], 1664
        %v2224 = vld [vmem:[%s2223] sm:$0xff]
        %v2225 = vld [vmem:[%s2223 + $0x8] sm:$0xff]
        %v2226 = vld [vmem:[%s2223 + $0x10] sm:$0xff]
        %v2227 = vld [vmem:[%s2223 + $0x18] sm:$0xff]
        %v2228 = vld [vmem:[%s2223 + $0x20] sm:$0xff]
        %v2229 = vld [vmem:[%s2223 + $0x28] sm:$0xff]
        %v2230 = vld [vmem:[%s2223 + $0x30] sm:$0xff]
        %v2231 = vld [vmem:[%s2223 + $0x38] sm:$0xff]
        %v2232 = vld [vmem:[%s2223 + $0x40] sm:$0xff]
        %v2233 = vld [vmem:[%s2223 + $0x48] sm:$0xff]
        %v2234 = vld [vmem:[%s2223 + $0x50] sm:$0xff]
        %v2235 = vld [vmem:[%s2223 + $0x58] sm:$0xff]
        %v2236 = vld [vmem:[%s2223 + $0x60] sm:$0xff]
        %v2237 = vld [vmem:[%s2223 + $0x68] sm:$0xff]
        %v2238 = vld [vmem:[%s2223 + $0x70] sm:$0xff]
        %v2239 = vld [vmem:[%s2223 + $0x78] sm:$0xff]
        %v2256 = vunpack.c.l.b16 %v2224
        %v2257 = vunpack.c.h.b16 %v2224
        %v2258 = vunpack.c.l.b16 %v2225
        %v2259 = vunpack.c.h.b16 %v2225
        %v2260 = vunpack.c.l.b16 %v2226
        %v2261 = vunpack.c.h.b16 %v2226
        %v2262 = vunpack.c.l.b16 %v2227
        %v2263 = vunpack.c.h.b16 %v2227
        %v2264 = vunpack.c.l.b16 %v2228
        %v2265 = vunpack.c.h.b16 %v2228
        %v2266 = vunpack.c.l.b16 %v2229
        %v2267 = vunpack.c.h.b16 %v2229
        %v2268 = vunpack.c.l.b16 %v2230
        %v2269 = vunpack.c.h.b16 %v2230
        %v2270 = vunpack.c.l.b16 %v2231
        %v2271 = vunpack.c.h.b16 %v2231
        %v2272 = vunpack.c.l.b16 %v2232
        %v2273 = vunpack.c.h.b16 %v2232
        %v2274 = vunpack.c.l.b16 %v2233
        %v2275 = vunpack.c.h.b16 %v2233
        %v2276 = vunpack.c.l.b16 %v2234
        %v2277 = vunpack.c.h.b16 %v2234
        %v2278 = vunpack.c.l.b16 %v2235
        %v2279 = vunpack.c.h.b16 %v2235
        %v2280 = vunpack.c.l.b16 %v2236
        %v2281 = vunpack.c.h.b16 %v2236
        %v2282 = vunpack.c.l.b16 %v2237
        %v2283 = vunpack.c.h.b16 %v2237
        %v2284 = vunpack.c.l.b16 %v2238
        %v2285 = vunpack.c.h.b16 %v2238
        %v2286 = vunpack.c.l.b16 %v2239
        %v2287 = vunpack.c.h.b16 %v2239
        %v2288 = vpack.c.b16 %v2258, %v2256
        %v2289 = vpack.c.b16 %v2259, %v2257
        %v2290 = vpack.c.b16 %v2262, %v2260
        %v2291 = vpack.c.b16 %v2263, %v2261
        %v2292 = vpack.c.b16 %v2266, %v2264
        %v2293 = vpack.c.b16 %v2267, %v2265
        %v2294 = vpack.c.b16 %v2270, %v2268
        %v2295 = vpack.c.b16 %v2271, %v2269
        %v2296 = vpack.c.b16 %v2274, %v2272
        %v2297 = vpack.c.b16 %v2275, %v2273
        %v2298 = vpack.c.b16 %v2278, %v2276
        %v2299 = vpack.c.b16 %v2279, %v2277
        %v2300 = vpack.c.b16 %v2282, %v2280
        %v2301 = vpack.c.b16 %v2283, %v2281
        %v2302 = vpack.c.b16 %v2286, %v2284
        %v2303 = vpack.c.b16 %v2287, %v2285
        %2320 = vmatprep.subr.bf16.mxu0 %v2303
        %2321 = vmatpush1.bf16.msra.mxu0 %v2302
        %2322 = vmatprep.subr.bf16.mxu0 %v2301
        %2323 = vmatpush1.bf16.msra.mxu0 %v2300
        %2324 = vmatprep.subr.bf16.mxu0 %v2299
        %2325 = vmatpush1.bf16.msra.mxu0 %v2298
        %2326 = vmatprep.subr.bf16.mxu0 %v2297
        %2327 = vmatpush1.bf16.msra.mxu0 %v2296
        %2328 = vmatprep.subr.bf16.mxu0 %v2295
        %2329 = vmatpush1.bf16.msra.mxu0 %v2294
        %2330 = vmatprep.subr.bf16.mxu0 %v2293
        %2331 = vmatpush1.bf16.msra.mxu0 %v2292
        %2332 = vmatprep.subr.bf16.mxu0 %v2291
        %2333 = vmatpush1.bf16.msra.mxu0 %v2290
        %2334 = vmatprep.subr.bf16.mxu0 %v2289
        %2335 = vmatpush1.bf16.msra.mxu0 %v2288
        %2336 = vmatprep.subr.bf16.mxu0 0
        %2337 = vmatpush2.bf16.msra.mxu0 0
        %2338 = vmatprep.subr.bf16.mxu0 0
        %2339 = vmatpush2.bf16.msra.mxu0 0
        %2340 = vmatprep.subr.bf16.mxu0 0
        %2341 = vmatpush2.bf16.msra.mxu0 0
        %2342 = vmatprep.subr.bf16.mxu0 0
        %2343 = vmatpush2.bf16.msra.mxu0 0
        %2344 = vmatprep.subr.bf16.mxu0 0
        %2345 = vmatpush2.bf16.msra.mxu0 0
        %2346 = vmatprep.subr.bf16.mxu0 0
        %2347 = vmatpush2.bf16.msra.mxu0 0
        %2348 = vmatprep.subr.bf16.mxu0 0
        %2349 = vmatpush2.bf16.msra.mxu0 0
        %2350 = vmatprep.subr.bf16.mxu0 0
        %2351 = vmatpush2.bf16.msra.mxu0 0
        %2352 = vmatprep.mubr.bf16.mxu0 0
        %2353 = vmatmul.mubr.bf16.gmra.mxu0 %v2222
        %v2354 = vpop.f32.mrf.mxu0
        %v2355 = vadd.f32 0.0, %v2354
        %v2356 = vpop.f32.mrf.mxu0
        %v2357 = vadd.f32 0.0, %v2356
        %v2358 = vpop.f32.mrf.mxu0
        %v2359 = vadd.f32 0.0, %v2358
        %v2360 = vpop.f32.mrf.mxu0
        %v2361 = vadd.f32 0.0, %v2360
        %2362 = vdwg.mxu0
        %v2363 = vadd.f32 %v2216, %v2355
        %v2364 = vadd.f32 %v2217, %v2357
        %v2365 = vadd.f32 %v2218, %v2359
        %v2366 = vadd.f32 %v2219, %v2361
        %v2367 = vld [vmem:[%s313 + $0xe] sm:$0xff]
        %v2368 = vld [vmem:[%s313 + $0x16] sm:$0x3]
        %v2369 = vpack.c.bf16 %v2368, %v2367
        %s2370 = scalar_lea.vmem [#allocation3], 1792
        %v2371 = vld [vmem:[%s2370] sm:$0xff]
        %v2372 = vld [vmem:[%s2370 + $0x8] sm:$0xff]
        %v2373 = vld [vmem:[%s2370 + $0x10] sm:$0xff]
        %v2374 = vld [vmem:[%s2370 + $0x18] sm:$0xff]
        %v2375 = vld [vmem:[%s2370 + $0x20] sm:$0xff]
        %v2376 = vld [vmem:[%s2370 + $0x28] sm:$0xff]
        %v2377 = vld [vmem:[%s2370 + $0x30] sm:$0xff]
        %v2378 = vld [vmem:[%s2370 + $0x38] sm:$0xff]
        %v2379 = vld [vmem:[%s2370 + $0x40] sm:$0xff]
        %v2380 = vld [vmem:[%s2370 + $0x48] sm:$0xff]
        %v2381 = vld [vmem:[%s2370 + $0x50] sm:$0xff]
        %v2382 = vld [vmem:[%s2370 + $0x58] sm:$0xff]
        %v2383 = vld [vmem:[%s2370 + $0x60] sm:$0xff]
        %v2384 = vld [vmem:[%s2370 + $0x68] sm:$0xff]
        %v2385 = vld [vmem:[%s2370 + $0x70] sm:$0xff]
        %v2386 = vld [vmem:[%s2370 + $0x78] sm:$0xff]
        %v2403 = vunpack.c.l.b16 %v2371
        %v2404 = vunpack.c.h.b16 %v2371
        %v2405 = vunpack.c.l.b16 %v2372
        %v2406 = vunpack.c.h.b16 %v2372
        %v2407 = vunpack.c.l.b16 %v2373
        %v2408 = vunpack.c.h.b16 %v2373
        %v2409 = vunpack.c.l.b16 %v2374
        %v2410 = vunpack.c.h.b16 %v2374
        %v2411 = vunpack.c.l.b16 %v2375
        %v2412 = vunpack.c.h.b16 %v2375
        %v2413 = vunpack.c.l.b16 %v2376
        %v2414 = vunpack.c.h.b16 %v2376
        %v2415 = vunpack.c.l.b16 %v2377
        %v2416 = vunpack.c.h.b16 %v2377
        %v2417 = vunpack.c.l.b16 %v2378
        %v2418 = vunpack.c.h.b16 %v2378
        %v2419 = vunpack.c.l.b16 %v2379
        %v2420 = vunpack.c.h.b16 %v2379
        %v2421 = vunpack.c.l.b16 %v2380
        %v2422 = vunpack.c.h.b16 %v2380
        %v2423 = vunpack.c.l.b16 %v2381
        %v2424 = vunpack.c.h.b16 %v2381
        %v2425 = vunpack.c.l.b16 %v2382
        %v2426 = vunpack.c.h.b16 %v2382
        %v2427 = vunpack.c.l.b16 %v2383
        %v2428 = vunpack.c.h.b16 %v2383
        %v2429 = vunpack.c.l.b16 %v2384
        %v2430 = vunpack.c.h.b16 %v2384
        %v2431 = vunpack.c.l.b16 %v2385
        %v2432 = vunpack.c.h.b16 %v2385
        %v2433 = vunpack.c.l.b16 %v2386
        %v2434 = vunpack.c.h.b16 %v2386
        %v2435 = vpack.c.b16 %v2405, %v2403
        %v2436 = vpack.c.b16 %v2406, %v2404
        %v2437 = vpack.c.b16 %v2409, %v2407
        %v2438 = vpack.c.b16 %v2410, %v2408
        %v2439 = vpack.c.b16 %v2413, %v2411
        %v2440 = vpack.c.b16 %v2414, %v2412
        %v2441 = vpack.c.b16 %v2417, %v2415
        %v2442 = vpack.c.b16 %v2418, %v2416
        %v2443 = vpack.c.b16 %v2421, %v2419
        %v2444 = vpack.c.b16 %v2422, %v2420
        %v2445 = vpack.c.b16 %v2425, %v2423
        %v2446 = vpack.c.b16 %v2426, %v2424
        %v2447 = vpack.c.b16 %v2429, %v2427
        %v2448 = vpack.c.b16 %v2430, %v2428
        %v2449 = vpack.c.b16 %v2433, %v2431
        %v2450 = vpack.c.b16 %v2434, %v2432
        %2467 = vmatprep.subr.bf16.mxu0 %v2450
        %2468 = vmatpush1.bf16.msra.mxu0 %v2449
        %2469 = vmatprep.subr.bf16.mxu0 %v2448
        %2470 = vmatpush1.bf16.msra.mxu0 %v2447
        %2471 = vmatprep.subr.bf16.mxu0 %v2446
        %2472 = vmatpush1.bf16.msra.mxu0 %v2445
        %2473 = vmatprep.subr.bf16.mxu0 %v2444
        %2474 = vmatpush1.bf16.msra.mxu0 %v2443
        %2475 = vmatprep.subr.bf16.mxu0 %v2442
        %2476 = vmatpush1.bf16.msra.mxu0 %v2441
        %2477 = vmatprep.subr.bf16.mxu0 %v2440
        %2478 = vmatpush1.bf16.msra.mxu0 %v2439
        %2479 = vmatprep.subr.bf16.mxu0 %v2438
        %2480 = vmatpush1.bf16.msra.mxu0 %v2437
        %2481 = vmatprep.subr.bf16.mxu0 %v2436
        %2482 = vmatpush1.bf16.msra.mxu0 %v2435
        %2483 = vmatprep.subr.bf16.mxu0 0
        %2484 = vmatpush2.bf16.msra.mxu0 0
        %2485 = vmatprep.subr.bf16.mxu0 0
        %2486 = vmatpush2.bf16.msra.mxu0 0
        %2487 = vmatprep.subr.bf16.mxu0 0
        %2488 = vmatpush2.bf16.msra.mxu0 0
        %2489 = vmatprep.subr.bf16.mxu0 0
        %2490 = vmatpush2.bf16.msra.mxu0 0
        %2491 = vmatprep.subr.bf16.mxu0 0
        %2492 = vmatpush2.bf16.msra.mxu0 0
        %2493 = vmatprep.subr.bf16.mxu0 0
        %2494 = vmatpush2.bf16.msra.mxu0 0
        %2495 = vmatprep.subr.bf16.mxu0 0
        %2496 = vmatpush2.bf16.msra.mxu0 0
        %2497 = vmatprep.subr.bf16.mxu0 0
        %2498 = vmatpush2.bf16.msra.mxu0 0
        %2499 = vmatprep.mubr.bf16.mxu0 0
        %2500 = vmatmul.mubr.bf16.gmra.mxu0 %v2369
        %v2501 = vpop.f32.mrf.mxu0
        %v2502 = vadd.f32 0.0, %v2501
        %v2503 = vpop.f32.mrf.mxu0
        %v2504 = vadd.f32 0.0, %v2503
        %v2505 = vpop.f32.mrf.mxu0
        %v2506 = vadd.f32 0.0, %v2505
        %v2507 = vpop.f32.mrf.mxu0
        %v2508 = vadd.f32 0.0, %v2507
        %2509 = vdwg.mxu0
        %v2510 = vadd.f32 %v2363, %v2502
        %v2511 = vadd.f32 %v2364, %v2504
        %v2512 = vadd.f32 %v2365, %v2506
        %v2513 = vadd.f32 %v2366, %v2508
        %v2514 = vld [vmem:[%s313 + $0xf] sm:$0xff]
        %v2515 = vld [vmem:[%s313 + $0x17] sm:$0x3]
        %v2516 = vpack.c.bf16 %v2515, %v2514
        %s2517 = scalar_lea.vmem [#allocation3], 1920
        %v2518 = vld [vmem:[%s2517] sm:$0xff]
        %v2519 = vld [vmem:[%s2517 + $0x8] sm:$0xff]
        %v2520 = vld [vmem:[%s2517 + $0x10] sm:$0xff]
        %v2521 = vld [vmem:[%s2517 + $0x18] sm:$0xff]
        %v2522 = vld [vmem:[%s2517 + $0x20] sm:$0xff]
        %v2523 = vld [vmem:[%s2517 + $0x28] sm:$0xff]
        %v2524 = vld [vmem:[%s2517 + $0x30] sm:$0xff]
        %v2525 = vld [vmem:[%s2517 + $0x38] sm:$0xff]
        %v2526 = vld [vmem:[%s2517 + $0x40] sm:$0xff]
        %v2527 = vld [vmem:[%s2517 + $0x48] sm:$0xff]
        %v2528 = vld [vmem:[%s2517 + $0x50] sm:$0xff]
        %v2529 = vld [vmem:[%s2517 + $0x58] sm:$0xff]
        %v2530 = vld [vmem:[%s2517 + $0x60] sm:$0xff]
        %v2531 = vld [vmem:[%s2517 + $0x68] sm:$0xff]
        %v2532 = vld [vmem:[%s2517 + $0x70] sm:$0xff]
        %v2533 = vld [vmem:[%s2517 + $0x78] sm:$0xff]
        %v2550 = vunpack.c.l.b16 %v2518
        %v2551 = vunpack.c.h.b16 %v2518
        %v2552 = vunpack.c.l.b16 %v2519
        %v2553 = vunpack.c.h.b16 %v2519
        %v2554 = vunpack.c.l.b16 %v2520
        %v2555 = vunpack.c.h.b16 %v2520
        %v2556 = vunpack.c.l.b16 %v2521
        %v2557 = vunpack.c.h.b16 %v2521
        %v2558 = vunpack.c.l.b16 %v2522
        %v2559 = vunpack.c.h.b16 %v2522
        %v2560 = vunpack.c.l.b16 %v2523
        %v2561 = vunpack.c.h.b16 %v2523
        %v2562 = vunpack.c.l.b16 %v2524
        %v2563 = vunpack.c.h.b16 %v2524
        %v2564 = vunpack.c.l.b16 %v2525
        %v2565 = vunpack.c.h.b16 %v2525
        %v2566 = vunpack.c.l.b16 %v2526
        %v2567 = vunpack.c.h.b16 %v2526
        %v2568 = vunpack.c.l.b16 %v2527
        %v2569 = vunpack.c.h.b16 %v2527
        %v2570 = vunpack.c.l.b16 %v2528
        %v2571 = vunpack.c.h.b16 %v2528
        %v2572 = vunpack.c.l.b16 %v2529
        %v2573 = vunpack.c.h.b16 %v2529
        %v2574 = vunpack.c.l.b16 %v2530
        %v2575 = vunpack.c.h.b16 %v2530
        %v2576 = vunpack.c.l.b16 %v2531
        %v2577 = vunpack.c.h.b16 %v2531
        %v2578 = vunpack.c.l.b16 %v2532
        %v2579 = vunpack.c.h.b16 %v2532
        %v2580 = vunpack.c.l.b16 %v2533
        %v2581 = vunpack.c.h.b16 %v2533
        %v2582 = vpack.c.b16 %v2552, %v2550
        %v2583 = vpack.c.b16 %v2553, %v2551
        %v2584 = vpack.c.b16 %v2556, %v2554
        %v2585 = vpack.c.b16 %v2557, %v2555
        %v2586 = vpack.c.b16 %v2560, %v2558
        %v2587 = vpack.c.b16 %v2561, %v2559
        %v2588 = vpack.c.b16 %v2564, %v2562
        %v2589 = vpack.c.b16 %v2565, %v2563
        %v2590 = vpack.c.b16 %v2568, %v2566
        %v2591 = vpack.c.b16 %v2569, %v2567
        %v2592 = vpack.c.b16 %v2572, %v2570
        %v2593 = vpack.c.b16 %v2573, %v2571
        %v2594 = vpack.c.b16 %v2576, %v2574
        %v2595 = vpack.c.b16 %v2577, %v2575
        %v2596 = vpack.c.b16 %v2580, %v2578
        %v2597 = vpack.c.b16 %v2581, %v2579
        %2614 = vmatprep.subr.bf16.mxu0 %v2597
        %2615 = vmatpush1.bf16.msra.mxu0 %v2596
        %2616 = vmatprep.subr.bf16.mxu0 %v2595
        %2617 = vmatpush1.bf16.msra.mxu0 %v2594
        %2618 = vmatprep.subr.bf16.mxu0 %v2593
        %2619 = vmatpush1.bf16.msra.mxu0 %v2592
        %2620 = vmatprep.subr.bf16.mxu0 %v2591
        %2621 = vmatpush1.bf16.msra.mxu0 %v2590
        %2622 = vmatprep.subr.bf16.mxu0 %v2589
        %2623 = vmatpush1.bf16.msra.mxu0 %v2588
        %2624 = vmatprep.subr.bf16.mxu0 %v2587
        %2625 = vmatpush1.bf16.msra.mxu0 %v2586
        %2626 = vmatprep.subr.bf16.mxu0 %v2585
        %2627 = vmatpush1.bf16.msra.mxu0 %v2584
        %2628 = vmatprep.subr.bf16.mxu0 %v2583
        %2629 = vmatpush1.bf16.msra.mxu0 %v2582
        %2630 = vmatprep.subr.bf16.mxu0 0
        %2631 = vmatpush2.bf16.msra.mxu0 0
        %2632 = vmatprep.subr.bf16.mxu0 0
        %2633 = vmatpush2.bf16.msra.mxu0 0
        %2634 = vmatprep.subr.bf16.mxu0 0
        %2635 = vmatpush2.bf16.msra.mxu0 0
        %2636 = vmatprep.subr.bf16.mxu0 0
        %2637 = vmatpush2.bf16.msra.mxu0 0
        %2638 = vmatprep.subr.bf16.mxu0 0
        %2639 = vmatpush2.bf16.msra.mxu0 0
        %2640 = vmatprep.subr.bf16.mxu0 0
        %2641 = vmatpush2.bf16.msra.mxu0 0
        %2642 = vmatprep.subr.bf16.mxu0 0
        %2643 = vmatpush2.bf16.msra.mxu0 0
        %2644 = vmatprep.subr.bf16.mxu0 0
        %2645 = vmatpush2.bf16.msra.mxu0 0
        %2646 = vmatprep.mubr.bf16.mxu0 0
        %2647 = vmatmul.mubr.bf16.gmra.mxu0 %v2516
        %v2648 = vpop.f32.mrf.mxu0
        %v2649 = vadd.f32 0.0, %v2648
        %v2650 = vpop.f32.mrf.mxu0
        %v2651 = vadd.f32 0.0, %v2650
        %v2652 = vpop.f32.mrf.mxu0
        %v2653 = vadd.f32 0.0, %v2652
        %v2654 = vpop.f32.mrf.mxu0
        %v2655 = vadd.f32 0.0, %v2654
        %2656 = vdwg.mxu0
        %v2657 = vadd.f32 %v2510, %v2649
        %v2658 = vadd.f32 %v2511, %v2651
        %v2659 = vadd.f32 %v2512, %v2653
        %v2660 = vadd.f32 %v2513, %v2655
        %v2661 = vld [vmem:[%s313 + $0x10] sm:$0xff]
        %v2662 = vld [vmem:[%s313 + $0x18] sm:$0x3]
        %v2663 = vpack.c.bf16 %v2662, %v2661
        %s2664 = scalar_lea.vmem [#allocation3], 2048
        %v2665 = vld [vmem:[%s2664] sm:$0xff]
        %v2666 = vld [vmem:[%s2664 + $0x8] sm:$0xff]
        %v2667 = vld [vmem:[%s2664 + $0x10] sm:$0xff]
        %v2668 = vld [vmem:[%s2664 + $0x18] sm:$0xff]
        %v2669 = vld [vmem:[%s2664 + $0x20] sm:$0xff]
        %v2670 = vld [vmem:[%s2664 + $0x28] sm:$0xff]
        %v2671 = vld [vmem:[%s2664 + $0x30] sm:$0xff]
        %v2672 = vld [vmem:[%s2664 + $0x38] sm:$0xff]
        %v2673 = vld [vmem:[%s2664 + $0x40] sm:$0xff]
        %v2674 = vld [vmem:[%s2664 + $0x48] sm:$0xff]
        %v2675 = vld [vmem:[%s2664 + $0x50] sm:$0xff]
        %v2676 = vld [vmem:[%s2664 + $0x58] sm:$0xff]
        %v2677 = vld [vmem:[%s2664 + $0x60] sm:$0xff]
        %v2678 = vld [vmem:[%s2664 + $0x68] sm:$0xff]
        %v2679 = vld [vmem:[%s2664 + $0x70] sm:$0xff]
        %v2680 = vld [vmem:[%s2664 + $0x78] sm:$0xff]
        %v2697 = vunpack.c.l.b16 %v2665
        %v2698 = vunpack.c.h.b16 %v2665
        %v2699 = vunpack.c.l.b16 %v2666
        %v2700 = vunpack.c.h.b16 %v2666
        %v2701 = vunpack.c.l.b16 %v2667
        %v2702 = vunpack.c.h.b16 %v2667
        %v2703 = vunpack.c.l.b16 %v2668
        %v2704 = vunpack.c.h.b16 %v2668
        %v2705 = vunpack.c.l.b16 %v2669
        %v2706 = vunpack.c.h.b16 %v2669
        %v2707 = vunpack.c.l.b16 %v2670
        %v2708 = vunpack.c.h.b16 %v2670
        %v2709 = vunpack.c.l.b16 %v2671
        %v2710 = vunpack.c.h.b16 %v2671
        %v2711 = vunpack.c.l.b16 %v2672
        %v2712 = vunpack.c.h.b16 %v2672
        %v2713 = vunpack.c.l.b16 %v2673
        %v2714 = vunpack.c.h.b16 %v2673
        %v2715 = vunpack.c.l.b16 %v2674
        %v2716 = vunpack.c.h.b16 %v2674
        %v2717 = vunpack.c.l.b16 %v2675
        %v2718 = vunpack.c.h.b16 %v2675
        %v2719 = vunpack.c.l.b16 %v2676
        %v2720 = vunpack.c.h.b16 %v2676
        %v2721 = vunpack.c.l.b16 %v2677
        %v2722 = vunpack.c.h.b16 %v2677
        %v2723 = vunpack.c.l.b16 %v2678
        %v2724 = vunpack.c.h.b16 %v2678
        %v2725 = vunpack.c.l.b16 %v2679
        %v2726 = vunpack.c.h.b16 %v2679
        %v2727 = vunpack.c.l.b16 %v2680
        %v2728 = vunpack.c.h.b16 %v2680
        %v2729 = vpack.c.b16 %v2699, %v2697
        %v2730 = vpack.c.b16 %v2700, %v2698
        %v2731 = vpack.c.b16 %v2703, %v2701
        %v2732 = vpack.c.b16 %v2704, %v2702
        %v2733 = vpack.c.b16 %v2707, %v2705
        %v2734 = vpack.c.b16 %v2708, %v2706
        %v2735 = vpack.c.b16 %v2711, %v2709
        %v2736 = vpack.c.b16 %v2712, %v2710
        %v2737 = vpack.c.b16 %v2715, %v2713
        %v2738 = vpack.c.b16 %v2716, %v2714
        %v2739 = vpack.c.b16 %v2719, %v2717
        %v2740 = vpack.c.b16 %v2720, %v2718
        %v2741 = vpack.c.b16 %v2723, %v2721
        %v2742 = vpack.c.b16 %v2724, %v2722
        %v2743 = vpack.c.b16 %v2727, %v2725
        %v2744 = vpack.c.b16 %v2728, %v2726
        %2761 = vmatprep.subr.bf16.mxu0 %v2744
        %2762 = vmatpush1.bf16.msra.mxu0 %v2743
        %2763 = vmatprep.subr.bf16.mxu0 %v2742
        %2764 = vmatpush1.bf16.msra.mxu0 %v2741
        %2765 = vmatprep.subr.bf16.mxu0 %v2740
        %2766 = vmatpush1.bf16.msra.mxu0 %v2739
        %2767 = vmatprep.subr.bf16.mxu0 %v2738
        %2768 = vmatpush1.bf16.msra.mxu0 %v2737
        %2769 = vmatprep.subr.bf16.mxu0 %v2736
        %2770 = vmatpush1.bf16.msra.mxu0 %v2735
        %2771 = vmatprep.subr.bf16.mxu0 %v2734
        %2772 = vmatpush1.bf16.msra.mxu0 %v2733
        %2773 = vmatprep.subr.bf16.mxu0 %v2732
        %2774 = vmatpush1.bf16.msra.mxu0 %v2731
        %2775 = vmatprep.subr.bf16.mxu0 %v2730
        %2776 = vmatpush1.bf16.msra.mxu0 %v2729
        %2777 = vmatprep.subr.bf16.mxu0 0
        %2778 = vmatpush2.bf16.msra.mxu0 0
        %2779 = vmatprep.subr.bf16.mxu0 0
        %2780 = vmatpush2.bf16.msra.mxu0 0
        %2781 = vmatprep.subr.bf16.mxu0 0
        %2782 = vmatpush2.bf16.msra.mxu0 0
        %2783 = vmatprep.subr.bf16.mxu0 0
        %2784 = vmatpush2.bf16.msra.mxu0 0
        %2785 = vmatprep.subr.bf16.mxu0 0
        %2786 = vmatpush2.bf16.msra.mxu0 0
        %2787 = vmatprep.subr.bf16.mxu0 0
        %2788 = vmatpush2.bf16.msra.mxu0 0
        %2789 = vmatprep.subr.bf16.mxu0 0
        %2790 = vmatpush2.bf16.msra.mxu0 0
        %2791 = vmatprep.subr.bf16.mxu0 0
        %2792 = vmatpush2.bf16.msra.mxu0 0
        %2793 = vmatprep.mubr.bf16.mxu0 0
        %2794 = vmatmul.mubr.bf16.gmra.mxu0 %v2663
        %v2795 = vpop.f32.mrf.mxu0
        %v2796 = vadd.f32 0.0, %v2795
        %v2797 = vpop.f32.mrf.mxu0
        %v2798 = vadd.f32 0.0, %v2797
        %v2799 = vpop.f32.mrf.mxu0
        %v2800 = vadd.f32 0.0, %v2799
        %v2801 = vpop.f32.mrf.mxu0
        %v2802 = vadd.f32 0.0, %v2801
        %2803 = vdwg.mxu0
        %v2804 = vadd.f32 %v2657, %v2796
        %v2805 = vadd.f32 %v2658, %v2798
        %v2806 = vadd.f32 %v2659, %v2800
        %v2807 = vadd.f32 %v2660, %v2802
        %v2808 = vld [vmem:[%s313 + $0x11] sm:$0xff]
        %v2809 = vld [vmem:[%s313 + $0x19] sm:$0x3]
        %v2810 = vpack.c.bf16 %v2809, %v2808
        %s2811 = scalar_lea.vmem [#allocation3], 2176
        %v2812 = vld [vmem:[%s2811] sm:$0xff]
        %v2813 = vld [vmem:[%s2811 + $0x8] sm:$0xff]
        %v2814 = vld [vmem:[%s2811 + $0x10] sm:$0xff]
        %v2815 = vld [vmem:[%s2811 + $0x18] sm:$0xff]
        %v2816 = vld [vmem:[%s2811 + $0x20] sm:$0xff]
        %v2817 = vld [vmem:[%s2811 + $0x28] sm:$0xff]
        %v2818 = vld [vmem:[%s2811 + $0x30] sm:$0xff]
        %v2819 = vld [vmem:[%s2811 + $0x38] sm:$0xff]
        %v2820 = vld [vmem:[%s2811 + $0x40] sm:$0xff]
        %v2821 = vld [vmem:[%s2811 + $0x48] sm:$0xff]
        %v2822 = vld [vmem:[%s2811 + $0x50] sm:$0xff]
        %v2823 = vld [vmem:[%s2811 + $0x58] sm:$0xff]
        %v2824 = vld [vmem:[%s2811 + $0x60] sm:$0xff]
        %v2825 = vld [vmem:[%s2811 + $0x68] sm:$0xff]
        %v2826 = vld [vmem:[%s2811 + $0x70] sm:$0xff]
        %v2827 = vld [vmem:[%s2811 + $0x78] sm:$0xff]
        %v2844 = vunpack.c.l.b16 %v2812
        %v2845 = vunpack.c.h.b16 %v2812
        %v2846 = vunpack.c.l.b16 %v2813
        %v2847 = vunpack.c.h.b16 %v2813
        %v2848 = vunpack.c.l.b16 %v2814
        %v2849 = vunpack.c.h.b16 %v2814
        %v2850 = vunpack.c.l.b16 %v2815
        %v2851 = vunpack.c.h.b16 %v2815
        %v2852 = vunpack.c.l.b16 %v2816
        %v2853 = vunpack.c.h.b16 %v2816
        %v2854 = vunpack.c.l.b16 %v2817
        %v2855 = vunpack.c.h.b16 %v2817
        %v2856 = vunpack.c.l.b16 %v2818
        %v2857 = vunpack.c.h.b16 %v2818
        %v2858 = vunpack.c.l.b16 %v2819
        %v2859 = vunpack.c.h.b16 %v2819
        %v2860 = vunpack.c.l.b16 %v2820
        %v2861 = vunpack.c.h.b16 %v2820
        %v2862 = vunpack.c.l.b16 %v2821
        %v2863 = vunpack.c.h.b16 %v2821
        %v2864 = vunpack.c.l.b16 %v2822
        %v2865 = vunpack.c.h.b16 %v2822
        %v2866 = vunpack.c.l.b16 %v2823
        %v2867 = vunpack.c.h.b16 %v2823
        %v2868 = vunpack.c.l.b16 %v2824
        %v2869 = vunpack.c.h.b16 %v2824
        %v2870 = vunpack.c.l.b16 %v2825
        %v2871 = vunpack.c.h.b16 %v2825
        %v2872 = vunpack.c.l.b16 %v2826
        %v2873 = vunpack.c.h.b16 %v2826
        %v2874 = vunpack.c.l.b16 %v2827
        %v2875 = vunpack.c.h.b16 %v2827
        %v2876 = vpack.c.b16 %v2846, %v2844
        %v2877 = vpack.c.b16 %v2847, %v2845
        %v2878 = vpack.c.b16 %v2850, %v2848
        %v2879 = vpack.c.b16 %v2851, %v2849
        %v2880 = vpack.c.b16 %v2854, %v2852
        %v2881 = vpack.c.b16 %v2855, %v2853
        %v2882 = vpack.c.b16 %v2858, %v2856
        %v2883 = vpack.c.b16 %v2859, %v2857
        %v2884 = vpack.c.b16 %v2862, %v2860
        %v2885 = vpack.c.b16 %v2863, %v2861
        %v2886 = vpack.c.b16 %v2866, %v2864
        %v2887 = vpack.c.b16 %v2867, %v2865
        %v2888 = vpack.c.b16 %v2870, %v2868
        %v2889 = vpack.c.b16 %v2871, %v2869
        %v2890 = vpack.c.b16 %v2874, %v2872
        %v2891 = vpack.c.b16 %v2875, %v2873
        %2908 = vmatprep.subr.bf16.mxu0 %v2891
        %2909 = vmatpush1.bf16.msra.mxu0 %v2890
        %2910 = vmatprep.subr.bf16.mxu0 %v2889
        %2911 = vmatpush1.bf16.msra.mxu0 %v2888
        %2912 = vmatprep.subr.bf16.mxu0 %v2887
        %2913 = vmatpush1.bf16.msra.mxu0 %v2886
        %2914 = vmatprep.subr.bf16.mxu0 %v2885
        %2915 = vmatpush1.bf16.msra.mxu0 %v2884
        %2916 = vmatprep.subr.bf16.mxu0 %v2883
        %2917 = vmatpush1.bf16.msra.mxu0 %v2882
        %2918 = vmatprep.subr.bf16.mxu0 %v2881
        %2919 = vmatpush1.bf16.msra.mxu0 %v2880
        %2920 = vmatprep.subr.bf16.mxu0 %v2879
        %2921 = vmatpush1.bf16.msra.mxu0 %v2878
        %2922 = vmatprep.subr.bf16.mxu0 %v2877
        %2923 = vmatpush1.bf16.msra.mxu0 %v2876
        %2924 = vmatprep.subr.bf16.mxu0 0
        %2925 = vmatpush2.bf16.msra.mxu0 0
        %2926 = vmatprep.subr.bf16.mxu0 0
        %2927 = vmatpush2.bf16.msra.mxu0 0
        %2928 = vmatprep.subr.bf16.mxu0 0
        %2929 = vmatpush2.bf16.msra.mxu0 0
        %2930 = vmatprep.subr.bf16.mxu0 0
        %2931 = vmatpush2.bf16.msra.mxu0 0
        %2932 = vmatprep.subr.bf16.mxu0 0
        %2933 = vmatpush2.bf16.msra.mxu0 0
        %2934 = vmatprep.subr.bf16.mxu0 0
        %2935 = vmatpush2.bf16.msra.mxu0 0
        %2936 = vmatprep.subr.bf16.mxu0 0
        %2937 = vmatpush2.bf16.msra.mxu0 0
        %2938 = vmatprep.subr.bf16.mxu0 0
        %2939 = vmatpush2.bf16.msra.mxu0 0
        %2940 = vmatprep.mubr.bf16.mxu0 0
        %2941 = vmatmul.mubr.bf16.gmra.mxu0 %v2810
        %v2942 = vpop.f32.mrf.mxu0
        %v2943 = vadd.f32 0.0, %v2942
        %v2944 = vpop.f32.mrf.mxu0
        %v2945 = vadd.f32 0.0, %v2944
        %v2946 = vpop.f32.mrf.mxu0
        %v2947 = vadd.f32 0.0, %v2946
        %v2948 = vpop.f32.mrf.mxu0
        %v2949 = vadd.f32 0.0, %v2948
        %2950 = vdwg.mxu0
        %v2951 = vadd.f32 %v2804, %v2943
        %v2952 = vadd.f32 %v2805, %v2945
        %v2953 = vadd.f32 %v2806, %v2947
        %v2954 = vadd.f32 %v2807, %v2949
        %v2955 = vld [vmem:[%s313 + $0x12] sm:$0xff]
        %v2956 = vld [vmem:[%s313 + $0x1a] sm:$0x3]
        %v2957 = vpack.c.bf16 %v2956, %v2955
        %s2958 = scalar_lea.vmem [#allocation3], 2304
        %v2959 = vld [vmem:[%s2958] sm:$0xff]
        %v2960 = vld [vmem:[%s2958 + $0x8] sm:$0xff]
        %v2961 = vld [vmem:[%s2958 + $0x10] sm:$0xff]
        %v2962 = vld [vmem:[%s2958 + $0x18] sm:$0xff]
        %v2963 = vld [vmem:[%s2958 + $0x20] sm:$0xff]
        %v2964 = vld [vmem:[%s2958 + $0x28] sm:$0xff]
        %v2965 = vld [vmem:[%s2958 + $0x30] sm:$0xff]
        %v2966 = vld [vmem:[%s2958 + $0x38] sm:$0xff]
        %v2967 = vld [vmem:[%s2958 + $0x40] sm:$0xff]
        %v2968 = vld [vmem:[%s2958 + $0x48] sm:$0xff]
        %v2969 = vld [vmem:[%s2958 + $0x50] sm:$0xff]
        %v2970 = vld [vmem:[%s2958 + $0x58] sm:$0xff]
        %v2971 = vld [vmem:[%s2958 + $0x60] sm:$0xff]
        %v2972 = vld [vmem:[%s2958 + $0x68] sm:$0xff]
        %v2973 = vld [vmem:[%s2958 + $0x70] sm:$0xff]
        %v2974 = vld [vmem:[%s2958 + $0x78] sm:$0xff]
        %v2991 = vunpack.c.l.b16 %v2959
        %v2992 = vunpack.c.h.b16 %v2959
        %v2993 = vunpack.c.l.b16 %v2960
        %v2994 = vunpack.c.h.b16 %v2960
        %v2995 = vunpack.c.l.b16 %v2961
        %v2996 = vunpack.c.h.b16 %v2961
        %v2997 = vunpack.c.l.b16 %v2962
        %v2998 = vunpack.c.h.b16 %v2962
        %v2999 = vunpack.c.l.b16 %v2963
        %v3000 = vunpack.c.h.b16 %v2963
        %v3001 = vunpack.c.l.b16 %v2964
        %v3002 = vunpack.c.h.b16 %v2964
        %v3003 = vunpack.c.l.b16 %v2965
        %v3004 = vunpack.c.h.b16 %v2965
        %v3005 = vunpack.c.l.b16 %v2966
        %v3006 = vunpack.c.h.b16 %v2966
        %v3007 = vunpack.c.l.b16 %v2967
        %v3008 = vunpack.c.h.b16 %v2967
        %v3009 = vunpack.c.l.b16 %v2968
        %v3010 = vunpack.c.h.b16 %v2968
        %v3011 = vunpack.c.l.b16 %v2969
        %v3012 = vunpack.c.h.b16 %v2969
        %v3013 = vunpack.c.l.b16 %v2970
        %v3014 = vunpack.c.h.b16 %v2970
        %v3015 = vunpack.c.l.b16 %v2971
        %v3016 = vunpack.c.h.b16 %v2971
        %v3017 = vunpack.c.l.b16 %v2972
        %v3018 = vunpack.c.h.b16 %v2972
        %v3019 = vunpack.c.l.b16 %v2973
        %v3020 = vunpack.c.h.b16 %v2973
        %v3021 = vunpack.c.l.b16 %v2974
        %v3022 = vunpack.c.h.b16 %v2974
        %v3023 = vpack.c.b16 %v2993, %v2991
        %v3024 = vpack.c.b16 %v2994, %v2992
        %v3025 = vpack.c.b16 %v2997, %v2995
        %v3026 = vpack.c.b16 %v2998, %v2996
        %v3027 = vpack.c.b16 %v3001, %v2999
        %v3028 = vpack.c.b16 %v3002, %v3000
        %v3029 = vpack.c.b16 %v3005, %v3003
        %v3030 = vpack.c.b16 %v3006, %v3004
        %v3031 = vpack.c.b16 %v3009, %v3007
        %v3032 = vpack.c.b16 %v3010, %v3008
        %v3033 = vpack.c.b16 %v3013, %v3011
        %v3034 = vpack.c.b16 %v3014, %v3012
        %v3035 = vpack.c.b16 %v3017, %v3015
        %v3036 = vpack.c.b16 %v3018, %v3016
        %v3037 = vpack.c.b16 %v3021, %v3019
        %v3038 = vpack.c.b16 %v3022, %v3020
        %3055 = vmatprep.subr.bf16.mxu0 %v3038
        %3056 = vmatpush1.bf16.msra.mxu0 %v3037
        %3057 = vmatprep.subr.bf16.mxu0 %v3036
        %3058 = vmatpush1.bf16.msra.mxu0 %v3035
        %3059 = vmatprep.subr.bf16.mxu0 %v3034
        %3060 = vmatpush1.bf16.msra.mxu0 %v3033
        %3061 = vmatprep.subr.bf16.mxu0 %v3032
        %3062 = vmatpush1.bf16.msra.mxu0 %v3031
        %3063 = vmatprep.subr.bf16.mxu0 %v3030
        %3064 = vmatpush1.bf16.msra.mxu0 %v3029
        %3065 = vmatprep.subr.bf16.mxu0 %v3028
        %3066 = vmatpush1.bf16.msra.mxu0 %v3027
        %3067 = vmatprep.subr.bf16.mxu0 %v3026
        %3068 = vmatpush1.bf16.msra.mxu0 %v3025
        %3069 = vmatprep.subr.bf16.mxu0 %v3024
        %3070 = vmatpush1.bf16.msra.mxu0 %v3023
        %3071 = vmatprep.subr.bf16.mxu0 0
        %3072 = vmatpush2.bf16.msra.mxu0 0
        %3073 = vmatprep.subr.bf16.mxu0 0
        %3074 = vmatpush2.bf16.msra.mxu0 0
        %3075 = vmatprep.subr.bf16.mxu0 0
        %3076 = vmatpush2.bf16.msra.mxu0 0
        %3077 = vmatprep.subr.bf16.mxu0 0
        %3078 = vmatpush2.bf16.msra.mxu0 0
        %3079 = vmatprep.subr.bf16.mxu0 0
        %3080 = vmatpush2.bf16.msra.mxu0 0
        %3081 = vmatprep.subr.bf16.mxu0 0
        %3082 = vmatpush2.bf16.msra.mxu0 0
        %3083 = vmatprep.subr.bf16.mxu0 0
        %3084 = vmatpush2.bf16.msra.mxu0 0
        %3085 = vmatprep.subr.bf16.mxu0 0
        %3086 = vmatpush2.bf16.msra.mxu0 0
        %3087 = vmatprep.mubr.bf16.mxu0 0
        %3088 = vmatmul.mubr.bf16.gmra.mxu0 %v2957
        %v3089 = vpop.f32.mrf.mxu0
        %v3090 = vadd.f32 0.0, %v3089
        %v3091 = vpop.f32.mrf.mxu0
        %v3092 = vadd.f32 0.0, %v3091
        %v3093 = vpop.f32.mrf.mxu0
        %v3094 = vadd.f32 0.0, %v3093
        %v3095 = vpop.f32.mrf.mxu0
        %v3096 = vadd.f32 0.0, %v3095
        %3097 = vdwg.mxu0
        %v3098 = vadd.f32 %v2951, %v3090
        %v3099 = vadd.f32 %v2952, %v3092
        %v3100 = vadd.f32 %v2953, %v3094
        %v3101 = vadd.f32 %v2954, %v3096
        %v3102 = vld [vmem:[%s313 + $0x13] sm:$0xff]
        %v3103 = vld [vmem:[%s313 + $0x1b] sm:$0x3]
        %v3104 = vpack.c.bf16 %v3103, %v3102
        %s3105 = scalar_lea.vmem [#allocation3], 2432
        %v3106 = vld [vmem:[%s3105] sm:$0xff]
        %v3107 = vld [vmem:[%s3105 + $0x8] sm:$0xff]
        %v3108 = vld [vmem:[%s3105 + $0x10] sm:$0xff]
        %v3109 = vld [vmem:[%s3105 + $0x18] sm:$0xff]
        %v3110 = vld [vmem:[%s3105 + $0x20] sm:$0xff]
        %v3111 = vld [vmem:[%s3105 + $0x28] sm:$0xff]
        %v3112 = vld [vmem:[%s3105 + $0x30] sm:$0xff]
        %v3113 = vld [vmem:[%s3105 + $0x38] sm:$0xff]
        %v3114 = vld [vmem:[%s3105 + $0x40] sm:$0xff]
        %v3115 = vld [vmem:[%s3105 + $0x48] sm:$0xff]
        %v3116 = vld [vmem:[%s3105 + $0x50] sm:$0xff]
        %v3117 = vld [vmem:[%s3105 + $0x58] sm:$0xff]
        %v3118 = vld [vmem:[%s3105 + $0x60] sm:$0xff]
        %v3119 = vld [vmem:[%s3105 + $0x68] sm:$0xff]
        %v3120 = vld [vmem:[%s3105 + $0x70] sm:$0xff]
        %v3121 = vld [vmem:[%s3105 + $0x78] sm:$0xff]
        %v3138 = vunpack.c.l.b16 %v3106
        %v3139 = vunpack.c.h.b16 %v3106
        %v3140 = vunpack.c.l.b16 %v3107
        %v3141 = vunpack.c.h.b16 %v3107
        %v3142 = vunpack.c.l.b16 %v3108
        %v3143 = vunpack.c.h.b16 %v3108
        %v3144 = vunpack.c.l.b16 %v3109
        %v3145 = vunpack.c.h.b16 %v3109
        %v3146 = vunpack.c.l.b16 %v3110
        %v3147 = vunpack.c.h.b16 %v3110
        %v3148 = vunpack.c.l.b16 %v3111
        %v3149 = vunpack.c.h.b16 %v3111
        %v3150 = vunpack.c.l.b16 %v3112
        %v3151 = vunpack.c.h.b16 %v3112
        %v3152 = vunpack.c.l.b16 %v3113
        %v3153 = vunpack.c.h.b16 %v3113
        %v3154 = vunpack.c.l.b16 %v3114
        %v3155 = vunpack.c.h.b16 %v3114
        %v3156 = vunpack.c.l.b16 %v3115
        %v3157 = vunpack.c.h.b16 %v3115
        %v3158 = vunpack.c.l.b16 %v3116
        %v3159 = vunpack.c.h.b16 %v3116
        %v3160 = vunpack.c.l.b16 %v3117
        %v3161 = vunpack.c.h.b16 %v3117
        %v3162 = vunpack.c.l.b16 %v3118
        %v3163 = vunpack.c.h.b16 %v3118
        %v3164 = vunpack.c.l.b16 %v3119
        %v3165 = vunpack.c.h.b16 %v3119
        %v3166 = vunpack.c.l.b16 %v3120
        %v3167 = vunpack.c.h.b16 %v3120
        %v3168 = vunpack.c.l.b16 %v3121
        %v3169 = vunpack.c.h.b16 %v3121
        %v3170 = vpack.c.b16 %v3140, %v3138
        %v3171 = vpack.c.b16 %v3141, %v3139
        %v3172 = vpack.c.b16 %v3144, %v3142
        %v3173 = vpack.c.b16 %v3145, %v3143
        %v3174 = vpack.c.b16 %v3148, %v3146
        %v3175 = vpack.c.b16 %v3149, %v3147
        %v3176 = vpack.c.b16 %v3152, %v3150
        %v3177 = vpack.c.b16 %v3153, %v3151
        %v3178 = vpack.c.b16 %v3156, %v3154
        %v3179 = vpack.c.b16 %v3157, %v3155
        %v3180 = vpack.c.b16 %v3160, %v3158
        %v3181 = vpack.c.b16 %v3161, %v3159
        %v3182 = vpack.c.b16 %v3164, %v3162
        %v3183 = vpack.c.b16 %v3165, %v3163
        %v3184 = vpack.c.b16 %v3168, %v3166
        %v3185 = vpack.c.b16 %v3169, %v3167
        %3202 = vmatprep.subr.bf16.mxu0 %v3185
        %3203 = vmatpush1.bf16.msra.mxu0 %v3184
        %3204 = vmatprep.subr.bf16.mxu0 %v3183
        %3205 = vmatpush1.bf16.msra.mxu0 %v3182
        %3206 = vmatprep.subr.bf16.mxu0 %v3181
        %3207 = vmatpush1.bf16.msra.mxu0 %v3180
        %3208 = vmatprep.subr.bf16.mxu0 %v3179
        %3209 = vmatpush1.bf16.msra.mxu0 %v3178
        %3210 = vmatprep.subr.bf16.mxu0 %v3177
        %3211 = vmatpush1.bf16.msra.mxu0 %v3176
        %3212 = vmatprep.subr.bf16.mxu0 %v3175
        %3213 = vmatpush1.bf16.msra.mxu0 %v3174
        %3214 = vmatprep.subr.bf16.mxu0 %v3173
        %3215 = vmatpush1.bf16.msra.mxu0 %v3172
        %3216 = vmatprep.subr.bf16.mxu0 %v3171
        %3217 = vmatpush1.bf16.msra.mxu0 %v3170
        %3218 = vmatprep.subr.bf16.mxu0 0
        %3219 = vmatpush2.bf16.msra.mxu0 0
        %3220 = vmatprep.subr.bf16.mxu0 0
        %3221 = vmatpush2.bf16.msra.mxu0 0
        %3222 = vmatprep.subr.bf16.mxu0 0
        %3223 = vmatpush2.bf16.msra.mxu0 0
        %3224 = vmatprep.subr.bf16.mxu0 0
        %3225 = vmatpush2.bf16.msra.mxu0 0
        %3226 = vmatprep.subr.bf16.mxu0 0
        %3227 = vmatpush2.bf16.msra.mxu0 0
        %3228 = vmatprep.subr.bf16.mxu0 0
        %3229 = vmatpush2.bf16.msra.mxu0 0
        %3230 = vmatprep.subr.bf16.mxu0 0
        %3231 = vmatpush2.bf16.msra.mxu0 0
        %3232 = vmatprep.subr.bf16.mxu0 0
        %3233 = vmatpush2.bf16.msra.mxu0 0
        %3234 = vmatprep.mubr.bf16.mxu0 0
        %3235 = vmatmul.mubr.bf16.gmra.mxu0 %v3104
        %v3236 = vpop.f32.mrf.mxu0
        %v3237 = vadd.f32 0.0, %v3236
        %v3238 = vpop.f32.mrf.mxu0
        %v3239 = vadd.f32 0.0, %v3238
        %v3240 = vpop.f32.mrf.mxu0
        %v3241 = vadd.f32 0.0, %v3240
        %v3242 = vpop.f32.mrf.mxu0
        %v3243 = vadd.f32 0.0, %v3242
        %3244 = vdwg.mxu0
        %v3245 = vadd.f32 %v3098, %v3237
        %v3246 = vadd.f32 %v3099, %v3239
        %v3247 = vadd.f32 %v3100, %v3241
        %v3248 = vadd.f32 %v3101, %v3243
        %v3249 = vld [vmem:[%s313 + $0x14] sm:$0xff]
        %v3250 = vld [vmem:[%s313 + $0x1c] sm:$0x3]
        %v3251 = vpack.c.bf16 %v3250, %v3249
        %s3252 = scalar_lea.vmem [#allocation3], 2560
        %v3253 = vld [vmem:[%s3252] sm:$0xff]
        %v3254 = vld [vmem:[%s3252 + $0x8] sm:$0xff]
        %v3255 = vld [vmem:[%s3252 + $0x10] sm:$0xff]
        %v3256 = vld [vmem:[%s3252 + $0x18] sm:$0xff]
        %v3257 = vld [vmem:[%s3252 + $0x20] sm:$0xff]
        %v3258 = vld [vmem:[%s3252 + $0x28] sm:$0xff]
        %v3259 = vld [vmem:[%s3252 + $0x30] sm:$0xff]
        %v3260 = vld [vmem:[%s3252 + $0x38] sm:$0xff]
        %v3261 = vld [vmem:[%s3252 + $0x40] sm:$0xff]
        %v3262 = vld [vmem:[%s3252 + $0x48] sm:$0xff]
        %v3263 = vld [vmem:[%s3252 + $0x50] sm:$0xff]
        %v3264 = vld [vmem:[%s3252 + $0x58] sm:$0xff]
        %v3265 = vld [vmem:[%s3252 + $0x60] sm:$0xff]
        %v3266 = vld [vmem:[%s3252 + $0x68] sm:$0xff]
        %v3267 = vld [vmem:[%s3252 + $0x70] sm:$0xff]
        %v3268 = vld [vmem:[%s3252 + $0x78] sm:$0xff]
        %v3285 = vunpack.c.l.b16 %v3253
        %v3286 = vunpack.c.h.b16 %v3253
        %v3287 = vunpack.c.l.b16 %v3254
        %v3288 = vunpack.c.h.b16 %v3254
        %v3289 = vunpack.c.l.b16 %v3255
        %v3290 = vunpack.c.h.b16 %v3255
        %v3291 = vunpack.c.l.b16 %v3256
        %v3292 = vunpack.c.h.b16 %v3256
        %v3293 = vunpack.c.l.b16 %v3257
        %v3294 = vunpack.c.h.b16 %v3257
        %v3295 = vunpack.c.l.b16 %v3258
        %v3296 = vunpack.c.h.b16 %v3258
        %v3297 = vunpack.c.l.b16 %v3259
        %v3298 = vunpack.c.h.b16 %v3259
        %v3299 = vunpack.c.l.b16 %v3260
        %v3300 = vunpack.c.h.b16 %v3260
        %v3301 = vunpack.c.l.b16 %v3261
        %v3302 = vunpack.c.h.b16 %v3261
        %v3303 = vunpack.c.l.b16 %v3262
        %v3304 = vunpack.c.h.b16 %v3262
        %v3305 = vunpack.c.l.b16 %v3263
        %v3306 = vunpack.c.h.b16 %v3263
        %v3307 = vunpack.c.l.b16 %v3264
        %v3308 = vunpack.c.h.b16 %v3264
        %v3309 = vunpack.c.l.b16 %v3265
        %v3310 = vunpack.c.h.b16 %v3265
        %v3311 = vunpack.c.l.b16 %v3266
        %v3312 = vunpack.c.h.b16 %v3266
        %v3313 = vunpack.c.l.b16 %v3267
        %v3314 = vunpack.c.h.b16 %v3267
        %v3315 = vunpack.c.l.b16 %v3268
        %v3316 = vunpack.c.h.b16 %v3268
        %v3317 = vpack.c.b16 %v3287, %v3285
        %v3318 = vpack.c.b16 %v3288, %v3286
        %v3319 = vpack.c.b16 %v3291, %v3289
        %v3320 = vpack.c.b16 %v3292, %v3290
        %v3321 = vpack.c.b16 %v3295, %v3293
        %v3322 = vpack.c.b16 %v3296, %v3294
        %v3323 = vpack.c.b16 %v3299, %v3297
        %v3324 = vpack.c.b16 %v3300, %v3298
        %v3325 = vpack.c.b16 %v3303, %v3301
        %v3326 = vpack.c.b16 %v3304, %v3302
        %v3327 = vpack.c.b16 %v3307, %v3305
        %v3328 = vpack.c.b16 %v3308, %v3306
        %v3329 = vpack.c.b16 %v3311, %v3309
        %v3330 = vpack.c.b16 %v3312, %v3310
        %v3331 = vpack.c.b16 %v3315, %v3313
        %v3332 = vpack.c.b16 %v3316, %v3314
        %3349 = vmatprep.subr.bf16.mxu0 %v3332
        %3350 = vmatpush1.bf16.msra.mxu0 %v3331
        %3351 = vmatprep.subr.bf16.mxu0 %v3330
        %3352 = vmatpush1.bf16.msra.mxu0 %v3329
        %3353 = vmatprep.subr.bf16.mxu0 %v3328
        %3354 = vmatpush1.bf16.msra.mxu0 %v3327
        %3355 = vmatprep.subr.bf16.mxu0 %v3326
        %3356 = vmatpush1.bf16.msra.mxu0 %v3325
        %3357 = vmatprep.subr.bf16.mxu0 %v3324
        %3358 = vmatpush1.bf16.msra.mxu0 %v3323
        %3359 = vmatprep.subr.bf16.mxu0 %v3322
        %3360 = vmatpush1.bf16.msra.mxu0 %v3321
        %3361 = vmatprep.subr.bf16.mxu0 %v3320
        %3362 = vmatpush1.bf16.msra.mxu0 %v3319
        %3363 = vmatprep.subr.bf16.mxu0 %v3318
        %3364 = vmatpush1.bf16.msra.mxu0 %v3317
        %3365 = vmatprep.subr.bf16.mxu0 0
        %3366 = vmatpush2.bf16.msra.mxu0 0
        %3367 = vmatprep.subr.bf16.mxu0 0
        %3368 = vmatpush2.bf16.msra.mxu0 0
        %3369 = vmatprep.subr.bf16.mxu0 0
        %3370 = vmatpush2.bf16.msra.mxu0 0
        %3371 = vmatprep.subr.bf16.mxu0 0
        %3372 = vmatpush2.bf16.msra.mxu0 0
        %3373 = vmatprep.subr.bf16.mxu0 0
        %3374 = vmatpush2.bf16.msra.mxu0 0
        %3375 = vmatprep.subr.bf16.mxu0 0
        %3376 = vmatpush2.bf16.msra.mxu0 0
        %3377 = vmatprep.subr.bf16.mxu0 0
        %3378 = vmatpush2.bf16.msra.mxu0 0
        %3379 = vmatprep.subr.bf16.mxu0 0
        %3380 = vmatpush2.bf16.msra.mxu0 0
        %3381 = vmatprep.mubr.bf16.mxu0 0
        %3382 = vmatmul.mubr.bf16.gmra.mxu0 %v3251
        %v3383 = vpop.f32.mrf.mxu0
        %v3384 = vadd.f32 0.0, %v3383
        %v3385 = vpop.f32.mrf.mxu0
        %v3386 = vadd.f32 0.0, %v3385
        %v3387 = vpop.f32.mrf.mxu0
        %v3388 = vadd.f32 0.0, %v3387
        %v3389 = vpop.f32.mrf.mxu0
        %v3390 = vadd.f32 0.0, %v3389
        %3391 = vdwg.mxu0
        %v3392 = vadd.f32 %v3245, %v3384
        %v3393 = vadd.f32 %v3246, %v3386
        %v3394 = vadd.f32 %v3247, %v3388
        %v3395 = vadd.f32 %v3248, %v3390
        %v3396 = vld [vmem:[%s313 + $0x15] sm:$0xff]
        %v3397 = vld [vmem:[%s313 + $0x1d] sm:$0x3]
        %v3398 = vpack.c.bf16 %v3397, %v3396
        %s3399 = scalar_lea.vmem [#allocation3], 2688
        %v3400 = vld [vmem:[%s3399] sm:$0xff]
        %v3401 = vld [vmem:[%s3399 + $0x8] sm:$0xff]
        %v3402 = vld [vmem:[%s3399 + $0x10] sm:$0xff]
        %v3403 = vld [vmem:[%s3399 + $0x18] sm:$0xff]
        %v3404 = vld [vmem:[%s3399 + $0x20] sm:$0xff]
        %v3405 = vld [vmem:[%s3399 + $0x28] sm:$0xff]
        %v3406 = vld [vmem:[%s3399 + $0x30] sm:$0xff]
        %v3407 = vld [vmem:[%s3399 + $0x38] sm:$0xff]
        %v3408 = vld [vmem:[%s3399 + $0x40] sm:$0xff]
        %v3409 = vld [vmem:[%s3399 + $0x48] sm:$0xff]
        %v3410 = vld [vmem:[%s3399 + $0x50] sm:$0xff]
        %v3411 = vld [vmem:[%s3399 + $0x58] sm:$0xff]
        %v3412 = vld [vmem:[%s3399 + $0x60] sm:$0xff]
        %v3413 = vld [vmem:[%s3399 + $0x68] sm:$0xff]
        %v3414 = vld [vmem:[%s3399 + $0x70] sm:$0xff]
        %v3415 = vld [vmem:[%s3399 + $0x78] sm:$0xff]
        %v3432 = vunpack.c.l.b16 %v3400
        %v3433 = vunpack.c.h.b16 %v3400
        %v3434 = vunpack.c.l.b16 %v3401
        %v3435 = vunpack.c.h.b16 %v3401
        %v3436 = vunpack.c.l.b16 %v3402
        %v3437 = vunpack.c.h.b16 %v3402
        %v3438 = vunpack.c.l.b16 %v3403
        %v3439 = vunpack.c.h.b16 %v3403
        %v3440 = vunpack.c.l.b16 %v3404
        %v3441 = vunpack.c.h.b16 %v3404
        %v3442 = vunpack.c.l.b16 %v3405
        %v3443 = vunpack.c.h.b16 %v3405
        %v3444 = vunpack.c.l.b16 %v3406
        %v3445 = vunpack.c.h.b16 %v3406
        %v3446 = vunpack.c.l.b16 %v3407
        %v3447 = vunpack.c.h.b16 %v3407
        %v3448 = vunpack.c.l.b16 %v3408
        %v3449 = vunpack.c.h.b16 %v3408
        %v3450 = vunpack.c.l.b16 %v3409
        %v3451 = vunpack.c.h.b16 %v3409
        %v3452 = vunpack.c.l.b16 %v3410
        %v3453 = vunpack.c.h.b16 %v3410
        %v3454 = vunpack.c.l.b16 %v3411
        %v3455 = vunpack.c.h.b16 %v3411
        %v3456 = vunpack.c.l.b16 %v3412
        %v3457 = vunpack.c.h.b16 %v3412
        %v3458 = vunpack.c.l.b16 %v3413
        %v3459 = vunpack.c.h.b16 %v3413
        %v3460 = vunpack.c.l.b16 %v3414
        %v3461 = vunpack.c.h.b16 %v3414
        %v3462 = vunpack.c.l.b16 %v3415
        %v3463 = vunpack.c.h.b16 %v3415
        %v3464 = vpack.c.b16 %v3434, %v3432
        %v3465 = vpack.c.b16 %v3435, %v3433
        %v3466 = vpack.c.b16 %v3438, %v3436
        %v3467 = vpack.c.b16 %v3439, %v3437
        %v3468 = vpack.c.b16 %v3442, %v3440
        %v3469 = vpack.c.b16 %v3443, %v3441
        %v3470 = vpack.c.b16 %v3446, %v3444
        %v3471 = vpack.c.b16 %v3447, %v3445
        %v3472 = vpack.c.b16 %v3450, %v3448
        %v3473 = vpack.c.b16 %v3451, %v3449
        %v3474 = vpack.c.b16 %v3454, %v3452
        %v3475 = vpack.c.b16 %v3455, %v3453
        %v3476 = vpack.c.b16 %v3458, %v3456
        %v3477 = vpack.c.b16 %v3459, %v3457
        %v3478 = vpack.c.b16 %v3462, %v3460
        %v3479 = vpack.c.b16 %v3463, %v3461
        %3496 = vmatprep.subr.bf16.mxu0 %v3479
        %3497 = vmatpush1.bf16.msra.mxu0 %v3478
        %3498 = vmatprep.subr.bf16.mxu0 %v3477
        %3499 = vmatpush1.bf16.msra.mxu0 %v3476
        %3500 = vmatprep.subr.bf16.mxu0 %v3475
        %3501 = vmatpush1.bf16.msra.mxu0 %v3474
        %3502 = vmatprep.subr.bf16.mxu0 %v3473
        %3503 = vmatpush1.bf16.msra.mxu0 %v3472
        %3504 = vmatprep.subr.bf16.mxu0 %v3471
        %3505 = vmatpush1.bf16.msra.mxu0 %v3470
        %3506 = vmatprep.subr.bf16.mxu0 %v3469
        %3507 = vmatpush1.bf16.msra.mxu0 %v3468
        %3508 = vmatprep.subr.bf16.mxu0 %v3467
        %3509 = vmatpush1.bf16.msra.mxu0 %v3466
        %3510 = vmatprep.subr.bf16.mxu0 %v3465
        %3511 = vmatpush1.bf16.msra.mxu0 %v3464
        %3512 = vmatprep.subr.bf16.mxu0 0
        %3513 = vmatpush2.bf16.msra.mxu0 0
        %3514 = vmatprep.subr.bf16.mxu0 0
        %3515 = vmatpush2.bf16.msra.mxu0 0
        %3516 = vmatprep.subr.bf16.mxu0 0
        %3517 = vmatpush2.bf16.msra.mxu0 0
        %3518 = vmatprep.subr.bf16.mxu0 0
        %3519 = vmatpush2.bf16.msra.mxu0 0
        %3520 = vmatprep.subr.bf16.mxu0 0
        %3521 = vmatpush2.bf16.msra.mxu0 0
        %3522 = vmatprep.subr.bf16.mxu0 0
        %3523 = vmatpush2.bf16.msra.mxu0 0
        %3524 = vmatprep.subr.bf16.mxu0 0
        %3525 = vmatpush2.bf16.msra.mxu0 0
        %3526 = vmatprep.subr.bf16.mxu0 0
        %3527 = vmatpush2.bf16.msra.mxu0 0
        %3528 = vmatprep.mubr.bf16.mxu0 0
        %3529 = vmatmul.mubr.bf16.gmra.mxu0 %v3398
        %v3530 = vpop.f32.mrf.mxu0
        %v3531 = vadd.f32 0.0, %v3530
        %v3532 = vpop.f32.mrf.mxu0
        %v3533 = vadd.f32 0.0, %v3532
        %v3534 = vpop.f32.mrf.mxu0
        %v3535 = vadd.f32 0.0, %v3534
        %v3536 = vpop.f32.mrf.mxu0
        %v3537 = vadd.f32 0.0, %v3536
        %3538 = vdwg.mxu0
        %v3539 = vadd.f32 %v3392, %v3531
        %v3540 = vadd.f32 %v3393, %v3533
        %v3541 = vadd.f32 %v3394, %v3535
        %v3542 = vadd.f32 %v3395, %v3537
        %v3543 = vld [vmem:[%s313 + $0x16] sm:$0xff]
        %v3544 = vld [vmem:[%s313 + $0x1e] sm:$0x3]
        %v3545 = vpack.c.bf16 %v3544, %v3543
        %s3546 = scalar_lea.vmem [#allocation3], 2816
        %v3547 = vld [vmem:[%s3546] sm:$0xff]
        %v3548 = vld [vmem:[%s3546 + $0x8] sm:$0xff]
        %v3549 = vld [vmem:[%s3546 + $0x10] sm:$0xff]
        %v3550 = vld [vmem:[%s3546 + $0x18] sm:$0xff]
        %v3551 = vld [vmem:[%s3546 + $0x20] sm:$0xff]
        %v3552 = vld [vmem:[%s3546 + $0x28] sm:$0xff]
        %v3553 = vld [vmem:[%s3546 + $0x30] sm:$0xff]
        %v3554 = vld [vmem:[%s3546 + $0x38] sm:$0xff]
        %v3555 = vld [vmem:[%s3546 + $0x40] sm:$0xff]
        %v3556 = vld [vmem:[%s3546 + $0x48] sm:$0xff]
        %v3557 = vld [vmem:[%s3546 + $0x50] sm:$0xff]
        %v3558 = vld [vmem:[%s3546 + $0x58] sm:$0xff]
        %v3559 = vld [vmem:[%s3546 + $0x60] sm:$0xff]
        %v3560 = vld [vmem:[%s3546 + $0x68] sm:$0xff]
        %v3561 = vld [vmem:[%s3546 + $0x70] sm:$0xff]
        %v3562 = vld [vmem:[%s3546 + $0x78] sm:$0xff]
        %v3579 = vunpack.c.l.b16 %v3547
        %v3580 = vunpack.c.h.b16 %v3547
        %v3581 = vunpack.c.l.b16 %v3548
        %v3582 = vunpack.c.h.b16 %v3548
        %v3583 = vunpack.c.l.b16 %v3549
        %v3584 = vunpack.c.h.b16 %v3549
        %v3585 = vunpack.c.l.b16 %v3550
        %v3586 = vunpack.c.h.b16 %v3550
        %v3587 = vunpack.c.l.b16 %v3551
        %v3588 = vunpack.c.h.b16 %v3551
        %v3589 = vunpack.c.l.b16 %v3552
        %v3590 = vunpack.c.h.b16 %v3552
        %v3591 = vunpack.c.l.b16 %v3553
        %v3592 = vunpack.c.h.b16 %v3553
        %v3593 = vunpack.c.l.b16 %v3554
        %v3594 = vunpack.c.h.b16 %v3554
        %v3595 = vunpack.c.l.b16 %v3555
        %v3596 = vunpack.c.h.b16 %v3555
        %v3597 = vunpack.c.l.b16 %v3556
        %v3598 = vunpack.c.h.b16 %v3556
        %v3599 = vunpack.c.l.b16 %v3557
        %v3600 = vunpack.c.h.b16 %v3557
        %v3601 = vunpack.c.l.b16 %v3558
        %v3602 = vunpack.c.h.b16 %v3558
        %v3603 = vunpack.c.l.b16 %v3559
        %v3604 = vunpack.c.h.b16 %v3559
        %v3605 = vunpack.c.l.b16 %v3560
        %v3606 = vunpack.c.h.b16 %v3560
        %v3607 = vunpack.c.l.b16 %v3561
        %v3608 = vunpack.c.h.b16 %v3561
        %v3609 = vunpack.c.l.b16 %v3562
        %v3610 = vunpack.c.h.b16 %v3562
        %v3611 = vpack.c.b16 %v3581, %v3579
        %v3612 = vpack.c.b16 %v3582, %v3580
        %v3613 = vpack.c.b16 %v3585, %v3583
        %v3614 = vpack.c.b16 %v3586, %v3584
        %v3615 = vpack.c.b16 %v3589, %v3587
        %v3616 = vpack.c.b16 %v3590, %v3588
        %v3617 = vpack.c.b16 %v3593, %v3591
        %v3618 = vpack.c.b16 %v3594, %v3592
        %v3619 = vpack.c.b16 %v3597, %v3595
        %v3620 = vpack.c.b16 %v3598, %v3596
        %v3621 = vpack.c.b16 %v3601, %v3599
        %v3622 = vpack.c.b16 %v3602, %v3600
        %v3623 = vpack.c.b16 %v3605, %v3603
        %v3624 = vpack.c.b16 %v3606, %v3604
        %v3625 = vpack.c.b16 %v3609, %v3607
        %v3626 = vpack.c.b16 %v3610, %v3608
        %3643 = vmatprep.subr.bf16.mxu0 %v3626
        %3644 = vmatpush1.bf16.msra.mxu0 %v3625
        %3645 = vmatprep.subr.bf16.mxu0 %v3624
        %3646 = vmatpush1.bf16.msra.mxu0 %v3623
        %3647 = vmatprep.subr.bf16.mxu0 %v3622
        %3648 = vmatpush1.bf16.msra.mxu0 %v3621
        %3649 = vmatprep.subr.bf16.mxu0 %v3620
        %3650 = vmatpush1.bf16.msra.mxu0 %v3619
        %3651 = vmatprep.subr.bf16.mxu0 %v3618
        %3652 = vmatpush1.bf16.msra.mxu0 %v3617
        %3653 = vmatprep.subr.bf16.mxu0 %v3616
        %3654 = vmatpush1.bf16.msra.mxu0 %v3615
        %3655 = vmatprep.subr.bf16.mxu0 %v3614
        %3656 = vmatpush1.bf16.msra.mxu0 %v3613
        %3657 = vmatprep.subr.bf16.mxu0 %v3612
        %3658 = vmatpush1.bf16.msra.mxu0 %v3611
        %3659 = vmatprep.subr.bf16.mxu0 0
        %3660 = vmatpush2.bf16.msra.mxu0 0
        %3661 = vmatprep.subr.bf16.mxu0 0
        %3662 = vmatpush2.bf16.msra.mxu0 0
        %3663 = vmatprep.subr.bf16.mxu0 0
        %3664 = vmatpush2.bf16.msra.mxu0 0
        %3665 = vmatprep.subr.bf16.mxu0 0
        %3666 = vmatpush2.bf16.msra.mxu0 0
        %3667 = vmatprep.subr.bf16.mxu0 0
        %3668 = vmatpush2.bf16.msra.mxu0 0
        %3669 = vmatprep.subr.bf16.mxu0 0
        %3670 = vmatpush2.bf16.msra.mxu0 0
        %3671 = vmatprep.subr.bf16.mxu0 0
        %3672 = vmatpush2.bf16.msra.mxu0 0
        %3673 = vmatprep.subr.bf16.mxu0 0
        %3674 = vmatpush2.bf16.msra.mxu0 0
        %3675 = vmatprep.mubr.bf16.mxu0 0
        %3676 = vmatmul.mubr.bf16.gmra.mxu0 %v3545
        %v3677 = vpop.f32.mrf.mxu0
        %v3678 = vadd.f32 0.0, %v3677
        %v3679 = vpop.f32.mrf.mxu0
        %v3680 = vadd.f32 0.0, %v3679
        %v3681 = vpop.f32.mrf.mxu0
        %v3682 = vadd.f32 0.0, %v3681
        %v3683 = vpop.f32.mrf.mxu0
        %v3684 = vadd.f32 0.0, %v3683
        %3685 = vdwg.mxu0
        %v3686 = vadd.f32 %v3539, %v3678
        %v3687 = vadd.f32 %v3540, %v3680
        %v3688 = vadd.f32 %v3541, %v3682
        %v3689 = vadd.f32 %v3542, %v3684
        %v3690 = vld [vmem:[%s313 + $0x17] sm:$0xff]
        %v3691 = vld [vmem:[%s313 + $0x1f] sm:$0x3]
        %v3692 = vpack.c.bf16 %v3691, %v3690
        %s3693 = scalar_lea.vmem [#allocation3], 2944
        %v3694 = vld [vmem:[%s3693] sm:$0xff]
        %v3695 = vld [vmem:[%s3693 + $0x8] sm:$0xff]
        %v3696 = vld [vmem:[%s3693 + $0x10] sm:$0xff]
        %v3697 = vld [vmem:[%s3693 + $0x18] sm:$0xff]
        %v3698 = vld [vmem:[%s3693 + $0x20] sm:$0xff]
        %v3699 = vld [vmem:[%s3693 + $0x28] sm:$0xff]
        %v3700 = vld [vmem:[%s3693 + $0x30] sm:$0xff]
        %v3701 = vld [vmem:[%s3693 + $0x38] sm:$0xff]
        %v3702 = vld [vmem:[%s3693 + $0x40] sm:$0xff]
        %v3703 = vld [vmem:[%s3693 + $0x48] sm:$0xff]
        %v3704 = vld [vmem:[%s3693 + $0x50] sm:$0xff]
        %v3705 = vld [vmem:[%s3693 + $0x58] sm:$0xff]
        %v3706 = vld [vmem:[%s3693 + $0x60] sm:$0xff]
        %v3707 = vld [vmem:[%s3693 + $0x68] sm:$0xff]
        %v3708 = vld [vmem:[%s3693 + $0x70] sm:$0xff]
        %v3709 = vld [vmem:[%s3693 + $0x78] sm:$0xff]
        %v3726 = vunpack.c.l.b16 %v3694
        %v3727 = vunpack.c.h.b16 %v3694
        %v3728 = vunpack.c.l.b16 %v3695
        %v3729 = vunpack.c.h.b16 %v3695
        %v3730 = vunpack.c.l.b16 %v3696
        %v3731 = vunpack.c.h.b16 %v3696
        %v3732 = vunpack.c.l.b16 %v3697
        %v3733 = vunpack.c.h.b16 %v3697
        %v3734 = vunpack.c.l.b16 %v3698
        %v3735 = vunpack.c.h.b16 %v3698
        %v3736 = vunpack.c.l.b16 %v3699
        %v3737 = vunpack.c.h.b16 %v3699
        %v3738 = vunpack.c.l.b16 %v3700
        %v3739 = vunpack.c.h.b16 %v3700
        %v3740 = vunpack.c.l.b16 %v3701
        %v3741 = vunpack.c.h.b16 %v3701
        %v3742 = vunpack.c.l.b16 %v3702
        %v3743 = vunpack.c.h.b16 %v3702
        %v3744 = vunpack.c.l.b16 %v3703
        %v3745 = vunpack.c.h.b16 %v3703
        %v3746 = vunpack.c.l.b16 %v3704
        %v3747 = vunpack.c.h.b16 %v3704
        %v3748 = vunpack.c.l.b16 %v3705
        %v3749 = vunpack.c.h.b16 %v3705
        %v3750 = vunpack.c.l.b16 %v3706
        %v3751 = vunpack.c.h.b16 %v3706
        %v3752 = vunpack.c.l.b16 %v3707
        %v3753 = vunpack.c.h.b16 %v3707
        %v3754 = vunpack.c.l.b16 %v3708
        %v3755 = vunpack.c.h.b16 %v3708
        %v3756 = vunpack.c.l.b16 %v3709
        %v3757 = vunpack.c.h.b16 %v3709
        %v3758 = vpack.c.b16 %v3728, %v3726
        %v3759 = vpack.c.b16 %v3729, %v3727
        %v3760 = vpack.c.b16 %v3732, %v3730
        %v3761 = vpack.c.b16 %v3733, %v3731
        %v3762 = vpack.c.b16 %v3736, %v3734
        %v3763 = vpack.c.b16 %v3737, %v3735
        %v3764 = vpack.c.b16 %v3740, %v3738
        %v3765 = vpack.c.b16 %v3741, %v3739
        %v3766 = vpack.c.b16 %v3744, %v3742
        %v3767 = vpack.c.b16 %v3745, %v3743
        %v3768 = vpack.c.b16 %v3748, %v3746
        %v3769 = vpack.c.b16 %v3749, %v3747
        %v3770 = vpack.c.b16 %v3752, %v3750
        %v3771 = vpack.c.b16 %v3753, %v3751
        %v3772 = vpack.c.b16 %v3756, %v3754
        %v3773 = vpack.c.b16 %v3757, %v3755
        %3790 = vmatprep.subr.bf16.mxu0 %v3773
        %3791 = vmatpush1.bf16.msra.mxu0 %v3772
        %3792 = vmatprep.subr.bf16.mxu0 %v3771
        %3793 = vmatpush1.bf16.msra.mxu0 %v3770
        %3794 = vmatprep.subr.bf16.mxu0 %v3769
        %3795 = vmatpush1.bf16.msra.mxu0 %v3768
        %3796 = vmatprep.subr.bf16.mxu0 %v3767
        %3797 = vmatpush1.bf16.msra.mxu0 %v3766
        %3798 = vmatprep.subr.bf16.mxu0 %v3765
        %3799 = vmatpush1.bf16.msra.mxu0 %v3764
        %3800 = vmatprep.subr.bf16.mxu0 %v3763
        %3801 = vmatpush1.bf16.msra.mxu0 %v3762
        %3802 = vmatprep.subr.bf16.mxu0 %v3761
        %3803 = vmatpush1.bf16.msra.mxu0 %v3760
        %3804 = vmatprep.subr.bf16.mxu0 %v3759
        %3805 = vmatpush1.bf16.msra.mxu0 %v3758
        %3806 = vmatprep.subr.bf16.mxu0 0
        %3807 = vmatpush2.bf16.msra.mxu0 0
        %3808 = vmatprep.subr.bf16.mxu0 0
        %3809 = vmatpush2.bf16.msra.mxu0 0
        %3810 = vmatprep.subr.bf16.mxu0 0
        %3811 = vmatpush2.bf16.msra.mxu0 0
        %3812 = vmatprep.subr.bf16.mxu0 0
        %3813 = vmatpush2.bf16.msra.mxu0 0
        %3814 = vmatprep.subr.bf16.mxu0 0
        %3815 = vmatpush2.bf16.msra.mxu0 0
        %3816 = vmatprep.subr.bf16.mxu0 0
        %3817 = vmatpush2.bf16.msra.mxu0 0
        %3818 = vmatprep.subr.bf16.mxu0 0
        %3819 = vmatpush2.bf16.msra.mxu0 0
        %3820 = vmatprep.subr.bf16.mxu0 0
        %3821 = vmatpush2.bf16.msra.mxu0 0
        %3822 = vmatprep.mubr.bf16.mxu0 0
        %3823 = vmatmul.mubr.bf16.gmra.mxu0 %v3692
        %v3824 = vpop.f32.mrf.mxu0
        %v3825 = vadd.f32 0.0, %v3824
        %v3826 = vpop.f32.mrf.mxu0
        %v3827 = vadd.f32 0.0, %v3826
        %v3828 = vpop.f32.mrf.mxu0
        %v3829 = vadd.f32 0.0, %v3828
        %v3830 = vpop.f32.mrf.mxu0
        %v3831 = vadd.f32 0.0, %v3830
        %3832 = vdwg.mxu0
        %v3833 = vadd.f32 %v3686, %v3825
        %v3834 = vadd.f32 %v3687, %v3827
        %v3835 = vadd.f32 %v3688, %v3829
        %v3836 = vadd.f32 %v3689, %v3831
        %v3837 = vld [vmem:[%s313 + $0x18] sm:$0xff]
        %v3838 = vld [vmem:[%s313 + $0x20] sm:$0x3]
        %v3839 = vpack.c.bf16 %v3838, %v3837
        %s3840 = scalar_lea.vmem [#allocation3], 3072
        %v3841 = vld [vmem:[%s3840] sm:$0xff]
        %v3842 = vld [vmem:[%s3840 + $0x8] sm:$0xff]
        %v3843 = vld [vmem:[%s3840 + $0x10] sm:$0xff]
        %v3844 = vld [vmem:[%s3840 + $0x18] sm:$0xff]
        %v3845 = vld [vmem:[%s3840 + $0x20] sm:$0xff]
        %v3846 = vld [vmem:[%s3840 + $0x28] sm:$0xff]
        %v3847 = vld [vmem:[%s3840 + $0x30] sm:$0xff]
        %v3848 = vld [vmem:[%s3840 + $0x38] sm:$0xff]
        %v3849 = vld [vmem:[%s3840 + $0x40] sm:$0xff]
        %v3850 = vld [vmem:[%s3840 + $0x48] sm:$0xff]
        %v3851 = vld [vmem:[%s3840 + $0x50] sm:$0xff]
        %v3852 = vld [vmem:[%s3840 + $0x58] sm:$0xff]
        %v3853 = vld [vmem:[%s3840 + $0x60] sm:$0xff]
        %v3854 = vld [vmem:[%s3840 + $0x68] sm:$0xff]
        %v3855 = vld [vmem:[%s3840 + $0x70] sm:$0xff]
        %v3856 = vld [vmem:[%s3840 + $0x78] sm:$0xff]
        %v3873 = vunpack.c.l.b16 %v3841
        %v3874 = vunpack.c.h.b16 %v3841
        %v3875 = vunpack.c.l.b16 %v3842
        %v3876 = vunpack.c.h.b16 %v3842
        %v3877 = vunpack.c.l.b16 %v3843
        %v3878 = vunpack.c.h.b16 %v3843
        %v3879 = vunpack.c.l.b16 %v3844
        %v3880 = vunpack.c.h.b16 %v3844
        %v3881 = vunpack.c.l.b16 %v3845
        %v3882 = vunpack.c.h.b16 %v3845
        %v3883 = vunpack.c.l.b16 %v3846
        %v3884 = vunpack.c.h.b16 %v3846
        %v3885 = vunpack.c.l.b16 %v3847
        %v3886 = vunpack.c.h.b16 %v3847
        %v3887 = vunpack.c.l.b16 %v3848
        %v3888 = vunpack.c.h.b16 %v3848
        %v3889 = vunpack.c.l.b16 %v3849
        %v3890 = vunpack.c.h.b16 %v3849
        %v3891 = vunpack.c.l.b16 %v3850
        %v3892 = vunpack.c.h.b16 %v3850
        %v3893 = vunpack.c.l.b16 %v3851
        %v3894 = vunpack.c.h.b16 %v3851
        %v3895 = vunpack.c.l.b16 %v3852
        %v3896 = vunpack.c.h.b16 %v3852
        %v3897 = vunpack.c.l.b16 %v3853
        %v3898 = vunpack.c.h.b16 %v3853
        %v3899 = vunpack.c.l.b16 %v3854
        %v3900 = vunpack.c.h.b16 %v3854
        %v3901 = vunpack.c.l.b16 %v3855
        %v3902 = vunpack.c.h.b16 %v3855
        %v3903 = vunpack.c.l.b16 %v3856
        %v3904 = vunpack.c.h.b16 %v3856
        %v3905 = vpack.c.b16 %v3875, %v3873
        %v3906 = vpack.c.b16 %v3876, %v3874
        %v3907 = vpack.c.b16 %v3879, %v3877
        %v3908 = vpack.c.b16 %v3880, %v3878
        %v3909 = vpack.c.b16 %v3883, %v3881
        %v3910 = vpack.c.b16 %v3884, %v3882
        %v3911 = vpack.c.b16 %v3887, %v3885
        %v3912 = vpack.c.b16 %v3888, %v3886
        %v3913 = vpack.c.b16 %v3891, %v3889
        %v3914 = vpack.c.b16 %v3892, %v3890
        %v3915 = vpack.c.b16 %v3895, %v3893
        %v3916 = vpack.c.b16 %v3896, %v3894
        %v3917 = vpack.c.b16 %v3899, %v3897
        %v3918 = vpack.c.b16 %v3900, %v3898
        %v3919 = vpack.c.b16 %v3903, %v3901
        %v3920 = vpack.c.b16 %v3904, %v3902
        %3937 = vmatprep.subr.bf16.mxu0 %v3920
        %3938 = vmatpush1.bf16.msra.mxu0 %v3919
        %3939 = vmatprep.subr.bf16.mxu0 %v3918
        %3940 = vmatpush1.bf16.msra.mxu0 %v3917
        %3941 = vmatprep.subr.bf16.mxu0 %v3916
        %3942 = vmatpush1.bf16.msra.mxu0 %v3915
        %3943 = vmatprep.subr.bf16.mxu0 %v3914
        %3944 = vmatpush1.bf16.msra.mxu0 %v3913
        %3945 = vmatprep.subr.bf16.mxu0 %v3912
        %3946 = vmatpush1.bf16.msra.mxu0 %v3911
        %3947 = vmatprep.subr.bf16.mxu0 %v3910
        %3948 = vmatpush1.bf16.msra.mxu0 %v3909
        %3949 = vmatprep.subr.bf16.mxu0 %v3908
        %3950 = vmatpush1.bf16.msra.mxu0 %v3907
        %3951 = vmatprep.subr.bf16.mxu0 %v3906
        %3952 = vmatpush1.bf16.msra.mxu0 %v3905
        %3953 = vmatprep.subr.bf16.mxu0 0
        %3954 = vmatpush2.bf16.msra.mxu0 0
        %3955 = vmatprep.subr.bf16.mxu0 0
        %3956 = vmatpush2.bf16.msra.mxu0 0
        %3957 = vmatprep.subr.bf16.mxu0 0
        %3958 = vmatpush2.bf16.msra.mxu0 0
        %3959 = vmatprep.subr.bf16.mxu0 0
        %3960 = vmatpush2.bf16.msra.mxu0 0
        %3961 = vmatprep.subr.bf16.mxu0 0
        %3962 = vmatpush2.bf16.msra.mxu0 0
        %3963 = vmatprep.subr.bf16.mxu0 0
        %3964 = vmatpush2.bf16.msra.mxu0 0
        %3965 = vmatprep.subr.bf16.mxu0 0
        %3966 = vmatpush2.bf16.msra.mxu0 0
        %3967 = vmatprep.subr.bf16.mxu0 0
        %3968 = vmatpush2.bf16.msra.mxu0 0
        %3969 = vmatprep.mubr.bf16.mxu0 0
        %3970 = vmatmul.mubr.bf16.gmra.mxu0 %v3839
        %v3971 = vpop.f32.mrf.mxu0
        %v3972 = vadd.f32 0.0, %v3971
        %v3973 = vpop.f32.mrf.mxu0
        %v3974 = vadd.f32 0.0, %v3973
        %v3975 = vpop.f32.mrf.mxu0
        %v3976 = vadd.f32 0.0, %v3975
        %v3977 = vpop.f32.mrf.mxu0
        %v3978 = vadd.f32 0.0, %v3977
        %3979 = vdwg.mxu0
        %v3980 = vadd.f32 %v3833, %v3972
        %v3981 = vadd.f32 %v3834, %v3974
        %v3982 = vadd.f32 %v3835, %v3976
        %v3983 = vadd.f32 %v3836, %v3978
        %v3984 = vld [vmem:[#allocation5] sm:$0x3]
        %v3986 = vlaneseq
        %v3987 = vshrl.u32 %v3986, 7
        %v3988 = vsub.s32 0, %v3987
        %v3989 = vrot.slane %v3984, %v3988
        %v3990 = vlaneseq
        %v3991 = vshrl.u32 %v3990, 7
        %v3992 = vsub.s32 1, %v3991
        %v3993 = vrot.slane %v3984, %v3992
        %v3996 = vadd.f32 %v3980, %v3989
        %v3997 = vadd.f32 %v3981, %v3993
        %v3998 = vadd.f32 %v3982, %v3989
        %v3999 = vadd.f32 %v3983, %v3993
        %v4000 = vld [vmem:[#allocation7] sm:$0x1]
        %v4001 = vpack.c.bf16 %v3996, %v3996
        %v4002 = vpack.c.bf16 %v3997, %v3997
        %v4003 = vld [vmem:[%s3] sm:$0xf]
        %v4004 = vld [vmem:[%s3 + $0x4] sm:$0xf]
        %v4005 = vld [vmem:[%s3 + $0x8] sm:$0xf]
        %v4006 = vld [vmem:[%s3 + $0xc] sm:$0xf]
        %v4007 = vld [vmem:[%s3 + $0x10] sm:$0xf]
        %v4008 = vld [vmem:[%s3 + $0x14] sm:$0xf]
        %v4009 = vld [vmem:[%s3 + $0x18] sm:$0xf]
        %v4010 = vld [vmem:[%s3 + $0x1c] sm:$0xf]
        %v4011 = vld [vmem:[%s3 + $0x20] sm:$0xf]
        %v4012 = vld [vmem:[%s3 + $0x24] sm:$0xf]
        %v4013 = vld [vmem:[%s3 + $0x28] sm:$0xf]
        %v4014 = vld [vmem:[%s3 + $0x2c] sm:$0xf]
        %v4015 = vld [vmem:[%s3 + $0x30] sm:$0xf]
        %v4016 = vld [vmem:[%s3 + $0x34] sm:$0xf]
        %v4017 = vld [vmem:[%s3 + $0x38] sm:$0xf]
        %v4018 = vld [vmem:[%s3 + $0x3c] sm:$0xf]
        %v4019 = vld [vmem:[%s3 + $0x40] sm:$0xf]
        %v4020 = vld [vmem:[%s3 + $0x44] sm:$0xf]
        %v4021 = vld [vmem:[%s3 + $0x48] sm:$0xf]
        %v4022 = vld [vmem:[%s3 + $0x4c] sm:$0xf]
        %v4023 = vld [vmem:[%s3 + $0x50] sm:$0xf]
        %v4024 = vld [vmem:[%s3 + $0x54] sm:$0xf]
        %v4025 = vld [vmem:[%s3 + $0x58] sm:$0xf]
        %v4026 = vld [vmem:[%s3 + $0x5c] sm:$0xf]
        %v4027 = vld [vmem:[%s3 + $0x60] sm:$0xf]
        %v4028 = vld [vmem:[%s3 + $0x64] sm:$0xf]
        %v4029 = vld [vmem:[%s3 + $0x68] sm:$0xf]
        %v4030 = vld [vmem:[%s3 + $0x6c] sm:$0xf]
        %v4031 = vld [vmem:[%s3 + $0x70] sm:$0xf]
        %v4032 = vld [vmem:[%s3 + $0x74] sm:$0xf]
        %v4033 = vld [vmem:[%s3 + $0x78] sm:$0xf]
        %v4034 = vld [vmem:[%s3 + $0x7c] sm:$0xf]
        %v4067 = vunpack.c.l.b16 %v4003
        %v4068 = vunpack.c.l.b16 %v4004
        %v4069 = vunpack.c.l.b16 %v4005
        %v4070 = vunpack.c.l.b16 %v4006
        %v4071 = vunpack.c.l.b16 %v4007
        %v4072 = vunpack.c.l.b16 %v4008
        %v4073 = vunpack.c.l.b16 %v4009
        %v4074 = vunpack.c.l.b16 %v4010
        %v4075 = vunpack.c.l.b16 %v4011
        %v4076 = vunpack.c.l.b16 %v4012
        %v4077 = vunpack.c.l.b16 %v4013
        %v4078 = vunpack.c.l.b16 %v4014
        %v4079 = vunpack.c.l.b16 %v4015
        %v4080 = vunpack.c.l.b16 %v4016
        %v4081 = vunpack.c.l.b16 %v4017
        %v4082 = vunpack.c.l.b16 %v4018
        %v4083 = vunpack.c.l.b16 %v4019
        %v4084 = vunpack.c.l.b16 %v4020
        %v4085 = vunpack.c.l.b16 %v4021
        %v4086 = vunpack.c.l.b16 %v4022
        %v4087 = vunpack.c.l.b16 %v4023
        %v4088 = vunpack.c.l.b16 %v4024
        %v4089 = vunpack.c.l.b16 %v4025
        %v4090 = vunpack.c.l.b16 %v4026
        %v4091 = vunpack.c.l.b16 %v4027
        %v4092 = vunpack.c.l.b16 %v4028
        %v4093 = vunpack.c.l.b16 %v4029
        %v4094 = vunpack.c.l.b16 %v4030
        %v4095 = vunpack.c.l.b16 %v4031
        %v4096 = vunpack.c.l.b16 %v4032
        %v4097 = vunpack.c.l.b16 %v4033
        %v4098 = vunpack.c.l.b16 %v4034
        %v4099 = vpack.c.b16 %v4068, %v4067
        %v4100 = vpack.c.b16 %v4070, %v4069
        %v4101 = vpack.c.b16 %v4072, %v4071
        %v4102 = vpack.c.b16 %v4074, %v4073
        %v4103 = vpack.c.b16 %v4076, %v4075
        %v4104 = vpack.c.b16 %v4078, %v4077
        %v4105 = vpack.c.b16 %v4080, %v4079
        %v4106 = vpack.c.b16 %v4082, %v4081
        %v4107 = vpack.c.b16 %v4084, %v4083
        %v4108 = vpack.c.b16 %v4086, %v4085
        %v4109 = vpack.c.b16 %v4088, %v4087
        %v4110 = vpack.c.b16 %v4090, %v4089
        %v4111 = vpack.c.b16 %v4092, %v4091
        %v4112 = vpack.c.b16 %v4094, %v4093
        %v4113 = vpack.c.b16 %v4096, %v4095
        %v4114 = vpack.c.b16 %v4098, %v4097
        %4131 = vmatprep.subr.bf16.mxu0 0
        %4132 = vmatpush1.bf16.msra.mxu0 %v4106
        %4133 = vmatprep.subr.bf16.mxu0 0
        %4134 = vmatpush1.bf16.msra.mxu0 %v4105
        %4135 = vmatprep.subr.bf16.mxu0 0
        %4136 = vmatpush1.bf16.msra.mxu0 %v4104
        %4137 = vmatprep.subr.bf16.mxu0 0
        %4138 = vmatpush1.bf16.msra.mxu0 %v4103
        %4139 = vmatprep.subr.bf16.mxu0 0
        %4140 = vmatpush1.bf16.msra.mxu0 %v4102
        %4141 = vmatprep.subr.bf16.mxu0 0
        %4142 = vmatpush1.bf16.msra.mxu0 %v4101
        %4143 = vmatprep.subr.bf16.mxu0 0
        %4144 = vmatpush1.bf16.msra.mxu0 %v4100
        %4145 = vmatprep.subr.bf16.mxu0 0
        %4146 = vmatpush1.bf16.msra.mxu0 %v4099
        %4147 = vmatprep.subr.bf16.mxu0 0
        %4148 = vmatpush2.bf16.msra.mxu0 %v4114
        %4149 = vmatprep.subr.bf16.mxu0 0
        %4150 = vmatpush2.bf16.msra.mxu0 %v4113
        %4151 = vmatprep.subr.bf16.mxu0 0
        %4152 = vmatpush2.bf16.msra.mxu0 %v4112
        %4153 = vmatprep.subr.bf16.mxu0 0
        %4154 = vmatpush2.bf16.msra.mxu0 %v4111
        %4155 = vmatprep.subr.bf16.mxu0 0
        %4156 = vmatpush2.bf16.msra.mxu0 %v4110
        %4157 = vmatprep.subr.bf16.mxu0 0
        %4158 = vmatpush2.bf16.msra.mxu0 %v4109
        %4159 = vmatprep.subr.bf16.mxu0 0
        %4160 = vmatpush2.bf16.msra.mxu0 %v4108
        %4161 = vmatprep.subr.bf16.mxu0 0
        %4162 = vmatpush2.bf16.msra.mxu0 %v4107
        %4163 = vmatprep.mubr.bf16.mxu0 %v4002
        %4164 = vmatmul.mubr.bf16.gmra.mxu0 %v4001
        %v4165 = vpop.f32.mrf.mxu0
        %v4166 = vadd.f32 0.0, %v4165
        %v4167 = vpop.f32.mrf.mxu0
        %v4168 = vpop.f32.mrf.mxu0
        %v4169 = vpop.f32.mrf.mxu0
        %4170 = vdwg.mxu0
        %v4171 = vadd.f32 %v4000, %v4166
        %s4172 = scalar_lea.vmem %s3, 128
        %v4173 = vld [vmem:[%s4172] sm:$0xf]
        %v4174 = vld [vmem:[%s4172 + $0x4] sm:$0xf]
        %v4175 = vld [vmem:[%s4172 + $0x8] sm:$0xf]
        %v4176 = vld [vmem:[%s4172 + $0xc] sm:$0xf]
        %v4177 = vld [vmem:[%s4172 + $0x10] sm:$0xf]
        %v4178 = vld [vmem:[%s4172 + $0x14] sm:$0xf]
        %v4179 = vld [vmem:[%s4172 + $0x18] sm:$0xf]
        %v4180 = vld [vmem:[%s4172 + $0x1c] sm:$0xf]
        %v4181 = vld [vmem:[%s4172 + $0x20] sm:$0xf]
        %v4182 = vld [vmem:[%s4172 + $0x24] sm:$0xf]
        %v4183 = vld [vmem:[%s4172 + $0x28] sm:$0xf]
        %v4184 = vld [vmem:[%s4172 + $0x2c] sm:$0xf]
        %v4185 = vld [vmem:[%s4172 + $0x30] sm:$0xf]
        %v4186 = vld [vmem:[%s4172 + $0x34] sm:$0xf]
        %v4187 = vld [vmem:[%s4172 + $0x38] sm:$0xf]
        %v4188 = vld [vmem:[%s4172 + $0x3c] sm:$0xf]
        %v4189 = vld [vmem:[%s4172 + $0x40] sm:$0xf]
        %v4190 = vld [vmem:[%s4172 + $0x44] sm:$0xf]
        %v4191 = vld [vmem:[%s4172 + $0x48] sm:$0xf]
        %v4192 = vld [vmem:[%s4172 + $0x4c] sm:$0xf]
        %v4193 = vld [vmem:[%s4172 + $0x50] sm:$0xf]
        %v4194 = vld [vmem:[%s4172 + $0x54] sm:$0xf]
        %v4195 = vld [vmem:[%s4172 + $0x58] sm:$0xf]
        %v4196 = vld [vmem:[%s4172 + $0x5c] sm:$0xf]
        %v4197 = vld [vmem:[%s4172 + $0x60] sm:$0xf]
        %v4198 = vld [vmem:[%s4172 + $0x64] sm:$0xf]
        %v4199 = vld [vmem:[%s4172 + $0x68] sm:$0xf]
        %v4200 = vld [vmem:[%s4172 + $0x6c] sm:$0xf]
        %v4201 = vld [vmem:[%s4172 + $0x70] sm:$0xf]
        %v4202 = vld [vmem:[%s4172 + $0x74] sm:$0xf]
        %v4203 = vld [vmem:[%s4172 + $0x78] sm:$0xf]
        %v4204 = vld [vmem:[%s4172 + $0x7c] sm:$0xf]
        %v4206 = vshrl.u32 %v4001, 16
        %v4209 = vshrl.u32 %v4002, 16
        %v4245 = vunpack.c.l.b16 %v4173
        %v4246 = vunpack.c.l.b16 %v4174
        %v4247 = vunpack.c.l.b16 %v4175
        %v4248 = vunpack.c.l.b16 %v4176
        %v4249 = vunpack.c.l.b16 %v4177
        %v4250 = vunpack.c.l.b16 %v4178
        %v4251 = vunpack.c.l.b16 %v4179
        %v4252 = vunpack.c.l.b16 %v4180
        %v4253 = vunpack.c.l.b16 %v4181
        %v4254 = vunpack.c.l.b16 %v4182
        %v4255 = vunpack.c.l.b16 %v4183
        %v4256 = vunpack.c.l.b16 %v4184
        %v4257 = vunpack.c.l.b16 %v4185
        %v4258 = vunpack.c.l.b16 %v4186
        %v4259 = vunpack.c.l.b16 %v4187
        %v4260 = vunpack.c.l.b16 %v4188
        %v4261 = vunpack.c.l.b16 %v4189
        %v4262 = vunpack.c.l.b16 %v4190
        %v4263 = vunpack.c.l.b16 %v4191
        %v4264 = vunpack.c.l.b16 %v4192
        %v4265 = vunpack.c.l.b16 %v4193
        %v4266 = vunpack.c.l.b16 %v4194
        %v4267 = vunpack.c.l.b16 %v4195
        %v4268 = vunpack.c.l.b16 %v4196
        %v4269 = vunpack.c.l.b16 %v4197
        %v4270 = vunpack.c.l.b16 %v4198
        %v4271 = vunpack.c.l.b16 %v4199
        %v4272 = vunpack.c.l.b16 %v4200
        %v4273 = vunpack.c.l.b16 %v4201
        %v4274 = vunpack.c.l.b16 %v4202
        %v4275 = vunpack.c.l.b16 %v4203
        %v4276 = vunpack.c.l.b16 %v4204
        %v4277 = vpack.c.b16 %v4246, %v4245
        %v4278 = vpack.c.b16 %v4248, %v4247
        %v4279 = vpack.c.b16 %v4250, %v4249
        %v4280 = vpack.c.b16 %v4252, %v4251
        %v4281 = vpack.c.b16 %v4254, %v4253
        %v4282 = vpack.c.b16 %v4256, %v4255
        %v4283 = vpack.c.b16 %v4258, %v4257
        %v4284 = vpack.c.b16 %v4260, %v4259
        %v4285 = vpack.c.b16 %v4262, %v4261
        %v4286 = vpack.c.b16 %v4264, %v4263
        %v4287 = vpack.c.b16 %v4266, %v4265
        %v4288 = vpack.c.b16 %v4268, %v4267
        %v4289 = vpack.c.b16 %v4270, %v4269
        %v4290 = vpack.c.b16 %v4272, %v4271
        %v4291 = vpack.c.b16 %v4274, %v4273
        %v4292 = vpack.c.b16 %v4276, %v4275
        %4309 = vmatprep.subr.bf16.mxu0 0
        %4310 = vmatpush1.bf16.msra.mxu0 %v4284
        %4311 = vmatprep.subr.bf16.mxu0 0
        %4312 = vmatpush1.bf16.msra.mxu0 %v4283
        %4313 = vmatprep.subr.bf16.mxu0 0
        %4314 = vmatpush1.bf16.msra.mxu0 %v4282
        %4315 = vmatprep.subr.bf16.mxu0 0
        %4316 = vmatpush1.bf16.msra.mxu0 %v4281
        %4317 = vmatprep.subr.bf16.mxu0 0
        %4318 = vmatpush1.bf16.msra.mxu0 %v4280
        %4319 = vmatprep.subr.bf16.mxu0 0
        %4320 = vmatpush1.bf16.msra.mxu0 %v4279
        %4321 = vmatprep.subr.bf16.mxu0 0
        %4322 = vmatpush1.bf16.msra.mxu0 %v4278
        %4323 = vmatprep.subr.bf16.mxu0 0
        %4324 = vmatpush1.bf16.msra.mxu0 %v4277
        %4325 = vmatprep.subr.bf16.mxu0 0
        %4326 = vmatpush2.bf16.msra.mxu0 %v4292
        %4327 = vmatprep.subr.bf16.mxu0 0
        %4328 = vmatpush2.bf16.msra.mxu0 %v4291
        %4329 = vmatprep.subr.bf16.mxu0 0
        %4330 = vmatpush2.bf16.msra.mxu0 %v4290
        %4331 = vmatprep.subr.bf16.mxu0 0
        %4332 = vmatpush2.bf16.msra.mxu0 %v4289
        %4333 = vmatprep.subr.bf16.mxu0 0
        %4334 = vmatpush2.bf16.msra.mxu0 %v4288
        %4335 = vmatprep.subr.bf16.mxu0 0
        %4336 = vmatpush2.bf16.msra.mxu0 %v4287
        %4337 = vmatprep.subr.bf16.mxu0 0
        %4338 = vmatpush2.bf16.msra.mxu0 %v4286
        %4339 = vmatprep.subr.bf16.mxu0 0
        %4340 = vmatpush2.bf16.msra.mxu0 %v4285
        %4341 = vmatprep.mubr.bf16.mxu0 %v4209
        %4342 = vmatmul.mubr.bf16.gmra.mxu0 %v4206
        %v4343 = vpop.f32.mrf.mxu0
        %v4344 = vadd.f32 0.0, %v4343
        %v4345 = vpop.f32.mrf.mxu0
        %v4346 = vpop.f32.mrf.mxu0
        %v4347 = vpop.f32.mrf.mxu0
        %4348 = vdwg.mxu0
        %v4349 = vadd.f32 %v4171, %v4344
        %s4350 = scalar_lea.vmem %s3, 256
        %v4351 = vld [vmem:[%s4350] sm:$0xf]
        %v4352 = vld [vmem:[%s4350 + $0x4] sm:$0xf]
        %v4353 = vld [vmem:[%s4350 + $0x8] sm:$0xf]
        %v4354 = vld [vmem:[%s4350 + $0xc] sm:$0xf]
        %v4355 = vld [vmem:[%s4350 + $0x10] sm:$0xf]
        %v4356 = vld [vmem:[%s4350 + $0x14] sm:$0xf]
        %v4357 = vld [vmem:[%s4350 + $0x18] sm:$0xf]
        %v4358 = vld [vmem:[%s4350 + $0x1c] sm:$0xf]
        %v4359 = vld [vmem:[%s4350 + $0x20] sm:$0xf]
        %v4360 = vld [vmem:[%s4350 + $0x24] sm:$0xf]
        %v4361 = vld [vmem:[%s4350 + $0x28] sm:$0xf]
        %v4362 = vld [vmem:[%s4350 + $0x2c] sm:$0xf]
        %v4363 = vld [vmem:[%s4350 + $0x30] sm:$0xf]
        %v4364 = vld [vmem:[%s4350 + $0x34] sm:$0xf]
        %v4365 = vld [vmem:[%s4350 + $0x38] sm:$0xf]
        %v4366 = vld [vmem:[%s4350 + $0x3c] sm:$0xf]
        %v4367 = vld [vmem:[%s4350 + $0x40] sm:$0xf]
        %v4368 = vld [vmem:[%s4350 + $0x44] sm:$0xf]
        %v4369 = vld [vmem:[%s4350 + $0x48] sm:$0xf]
        %v4370 = vld [vmem:[%s4350 + $0x4c] sm:$0xf]
        %v4371 = vld [vmem:[%s4350 + $0x50] sm:$0xf]
        %v4372 = vld [vmem:[%s4350 + $0x54] sm:$0xf]
        %v4373 = vld [vmem:[%s4350 + $0x58] sm:$0xf]
        %v4374 = vld [vmem:[%s4350 + $0x5c] sm:$0xf]
        %v4375 = vld [vmem:[%s4350 + $0x60] sm:$0xf]
        %v4376 = vld [vmem:[%s4350 + $0x64] sm:$0xf]
        %v4377 = vld [vmem:[%s4350 + $0x68] sm:$0xf]
        %v4378 = vld [vmem:[%s4350 + $0x6c] sm:$0xf]
        %v4379 = vld [vmem:[%s4350 + $0x70] sm:$0xf]
        %v4380 = vld [vmem:[%s4350 + $0x74] sm:$0xf]
        %v4381 = vld [vmem:[%s4350 + $0x78] sm:$0xf]
        %v4382 = vld [vmem:[%s4350 + $0x7c] sm:$0xf]
        %v4385 = vrot.slane %v4001, 1
        %v4386 = vrot.slane %v4002, 1
        %v4421 = vunpack.c.l.b16 %v4351
        %v4422 = vunpack.c.l.b16 %v4352
        %v4423 = vunpack.c.l.b16 %v4353
        %v4424 = vunpack.c.l.b16 %v4354
        %v4425 = vunpack.c.l.b16 %v4355
        %v4426 = vunpack.c.l.b16 %v4356
        %v4427 = vunpack.c.l.b16 %v4357
        %v4428 = vunpack.c.l.b16 %v4358
        %v4429 = vunpack.c.l.b16 %v4359
        %v4430 = vunpack.c.l.b16 %v4360
        %v4431 = vunpack.c.l.b16 %v4361
        %v4432 = vunpack.c.l.b16 %v4362
        %v4433 = vunpack.c.l.b16 %v4363
        %v4434 = vunpack.c.l.b16 %v4364
        %v4435 = vunpack.c.l.b16 %v4365
        %v4436 = vunpack.c.l.b16 %v4366
        %v4437 = vunpack.c.l.b16 %v4367
        %v4438 = vunpack.c.l.b16 %v4368
        %v4439 = vunpack.c.l.b16 %v4369
        %v4440 = vunpack.c.l.b16 %v4370
        %v4441 = vunpack.c.l.b16 %v4371
        %v4442 = vunpack.c.l.b16 %v4372
        %v4443 = vunpack.c.l.b16 %v4373
        %v4444 = vunpack.c.l.b16 %v4374
        %v4445 = vunpack.c.l.b16 %v4375
        %v4446 = vunpack.c.l.b16 %v4376
        %v4447 = vunpack.c.l.b16 %v4377
        %v4448 = vunpack.c.l.b16 %v4378
        %v4449 = vunpack.c.l.b16 %v4379
        %v4450 = vunpack.c.l.b16 %v4380
        %v4451 = vunpack.c.l.b16 %v4381
        %v4452 = vunpack.c.l.b16 %v4382
        %v4453 = vpack.c.b16 %v4422, %v4421
        %v4454 = vpack.c.b16 %v4424, %v4423
        %v4455 = vpack.c.b16 %v4426, %v4425
        %v4456 = vpack.c.b16 %v4428, %v4427
        %v4457 = vpack.c.b16 %v4430, %v4429
        %v4458 = vpack.c.b16 %v4432, %v4431
        %v4459 = vpack.c.b16 %v4434, %v4433
        %v4460 = vpack.c.b16 %v4436, %v4435
        %v4461 = vpack.c.b16 %v4438, %v4437
        %v4462 = vpack.c.b16 %v4440, %v4439
        %v4463 = vpack.c.b16 %v4442, %v4441
        %v4464 = vpack.c.b16 %v4444, %v4443
        %v4465 = vpack.c.b16 %v4446, %v4445
        %v4466 = vpack.c.b16 %v4448, %v4447
        %v4467 = vpack.c.b16 %v4450, %v4449
        %v4468 = vpack.c.b16 %v4452, %v4451
        %4485 = vmatprep.subr.bf16.mxu0 0
        %4486 = vmatpush1.bf16.msra.mxu0 %v4460
        %4487 = vmatprep.subr.bf16.mxu0 0
        %4488 = vmatpush1.bf16.msra.mxu0 %v4459
        %4489 = vmatprep.subr.bf16.mxu0 0
        %4490 = vmatpush1.bf16.msra.mxu0 %v4458
        %4491 = vmatprep.subr.bf16.mxu0 0
        %4492 = vmatpush1.bf16.msra.mxu0 %v4457
        %4493 = vmatprep.subr.bf16.mxu0 0
        %4494 = vmatpush1.bf16.msra.mxu0 %v4456
        %4495 = vmatprep.subr.bf16.mxu0 0
        %4496 = vmatpush1.bf16.msra.mxu0 %v4455
        %4497 = vmatprep.subr.bf16.mxu0 0
        %4498 = vmatpush1.bf16.msra.mxu0 %v4454
        %4499 = vmatprep.subr.bf16.mxu0 0
        %4500 = vmatpush1.bf16.msra.mxu0 %v4453
        %4501 = vmatprep.subr.bf16.mxu0 0
        %4502 = vmatpush2.bf16.msra.mxu0 %v4468
        %4503 = vmatprep.subr.bf16.mxu0 0
        %4504 = vmatpush2.bf16.msra.mxu0 %v4467
        %4505 = vmatprep.subr.bf16.mxu0 0
        %4506 = vmatpush2.bf16.msra.mxu0 %v4466
        %4507 = vmatprep.subr.bf16.mxu0 0
        %4508 = vmatpush2.bf16.msra.mxu0 %v4465
        %4509 = vmatprep.subr.bf16.mxu0 0
        %4510 = vmatpush2.bf16.msra.mxu0 %v4464
        %4511 = vmatprep.subr.bf16.mxu0 0
        %4512 = vmatpush2.bf16.msra.mxu0 %v4463
        %4513 = vmatprep.subr.bf16.mxu0 0
        %4514 = vmatpush2.bf16.msra.mxu0 %v4462
        %4515 = vmatprep.subr.bf16.mxu0 0
        %4516 = vmatpush2.bf16.msra.mxu0 %v4461
        %4517 = vmatprep.mubr.bf16.mxu0 %v4386
        %4518 = vmatmul.mubr.bf16.gmra.mxu0 %v4385
        %v4519 = vpop.f32.mrf.mxu0
        %v4520 = vadd.f32 0.0, %v4519
        %v4521 = vpop.f32.mrf.mxu0
        %v4522 = vpop.f32.mrf.mxu0
        %v4523 = vpop.f32.mrf.mxu0
        %4524 = vdwg.mxu0
        %v4525 = vadd.f32 %v4349, %v4520
        %s4526 = scalar_lea.vmem %s3, 384
        %v4527 = vld [vmem:[%s4526] sm:$0xf]
        %v4528 = vld [vmem:[%s4526 + $0x4] sm:$0xf]
        %v4529 = vld [vmem:[%s4526 + $0x8] sm:$0xf]
        %v4530 = vld [vmem:[%s4526 + $0xc] sm:$0xf]
        %v4531 = vld [vmem:[%s4526 + $0x10] sm:$0xf]
        %v4532 = vld [vmem:[%s4526 + $0x14] sm:$0xf]
        %v4533 = vld [vmem:[%s4526 + $0x18] sm:$0xf]
        %v4534 = vld [vmem:[%s4526 + $0x1c] sm:$0xf]
        %v4535 = vld [vmem:[%s4526 + $0x20] sm:$0xf]
        %v4536 = vld [vmem:[%s4526 + $0x24] sm:$0xf]
        %v4537 = vld [vmem:[%s4526 + $0x28] sm:$0xf]
        %v4538 = vld [vmem:[%s4526 + $0x2c] sm:$0xf]
        %v4539 = vld [vmem:[%s4526 + $0x30] sm:$0xf]
        %v4540 = vld [vmem:[%s4526 + $0x34] sm:$0xf]
        %v4541 = vld [vmem:[%s4526 + $0x38] sm:$0xf]
        %v4542 = vld [vmem:[%s4526 + $0x3c] sm:$0xf]
        %v4543 = vld [vmem:[%s4526 + $0x40] sm:$0xf]
        %v4544 = vld [vmem:[%s4526 + $0x44] sm:$0xf]
        %v4545 = vld [vmem:[%s4526 + $0x48] sm:$0xf]
        %v4546 = vld [vmem:[%s4526 + $0x4c] sm:$0xf]
        %v4547 = vld [vmem:[%s4526 + $0x50] sm:$0xf]
        %v4548 = vld [vmem:[%s4526 + $0x54] sm:$0xf]
        %v4549 = vld [vmem:[%s4526 + $0x58] sm:$0xf]
        %v4550 = vld [vmem:[%s4526 + $0x5c] sm:$0xf]
        %v4551 = vld [vmem:[%s4526 + $0x60] sm:$0xf]
        %v4552 = vld [vmem:[%s4526 + $0x64] sm:$0xf]
        %v4553 = vld [vmem:[%s4526 + $0x68] sm:$0xf]
        %v4554 = vld [vmem:[%s4526 + $0x6c] sm:$0xf]
        %v4555 = vld [vmem:[%s4526 + $0x70] sm:$0xf]
        %v4556 = vld [vmem:[%s4526 + $0x74] sm:$0xf]
        %v4557 = vld [vmem:[%s4526 + $0x78] sm:$0xf]
        %v4558 = vld [vmem:[%s4526 + $0x7c] sm:$0xf]
        %v4559 = vrot.slane %v4206, 1
        %v4560 = vrot.slane %v4209, 1
        %v4595 = vunpack.c.l.b16 %v4527
        %v4596 = vunpack.c.l.b16 %v4528
        %v4597 = vunpack.c.l.b16 %v4529
        %v4598 = vunpack.c.l.b16 %v4530
        %v4599 = vunpack.c.l.b16 %v4531
        %v4600 = vunpack.c.l.b16 %v4532
        %v4601 = vunpack.c.l.b16 %v4533
        %v4602 = vunpack.c.l.b16 %v4534
        %v4603 = vunpack.c.l.b16 %v4535
        %v4604 = vunpack.c.l.b16 %v4536
        %v4605 = vunpack.c.l.b16 %v4537
        %v4606 = vunpack.c.l.b16 %v4538
        %v4607 = vunpack.c.l.b16 %v4539
        %v4608 = vunpack.c.l.b16 %v4540
        %v4609 = vunpack.c.l.b16 %v4541
        %v4610 = vunpack.c.l.b16 %v4542
        %v4611 = vunpack.c.l.b16 %v4543
        %v4612 = vunpack.c.l.b16 %v4544
        %v4613 = vunpack.c.l.b16 %v4545
        %v4614 = vunpack.c.l.b16 %v4546
        %v4615 = vunpack.c.l.b16 %v4547
        %v4616 = vunpack.c.l.b16 %v4548
        %v4617 = vunpack.c.l.b16 %v4549
        %v4618 = vunpack.c.l.b16 %v4550
        %v4619 = vunpack.c.l.b16 %v4551
        %v4620 = vunpack.c.l.b16 %v4552
        %v4621 = vunpack.c.l.b16 %v4553
        %v4622 = vunpack.c.l.b16 %v4554
        %v4623 = vunpack.c.l.b16 %v4555
        %v4624 = vunpack.c.l.b16 %v4556
        %v4625 = vunpack.c.l.b16 %v4557
        %v4626 = vunpack.c.l.b16 %v4558
        %v4627 = vpack.c.b16 %v4596, %v4595
        %v4628 = vpack.c.b16 %v4598, %v4597
        %v4629 = vpack.c.b16 %v4600, %v4599
        %v4630 = vpack.c.b16 %v4602, %v4601
        %v4631 = vpack.c.b16 %v4604, %v4603
        %v4632 = vpack.c.b16 %v4606, %v4605
        %v4633 = vpack.c.b16 %v4608, %v4607
        %v4634 = vpack.c.b16 %v4610, %v4609
        %v4635 = vpack.c.b16 %v4612, %v4611
        %v4636 = vpack.c.b16 %v4614, %v4613
        %v4637 = vpack.c.b16 %v4616, %v4615
        %v4638 = vpack.c.b16 %v4618, %v4617
        %v4639 = vpack.c.b16 %v4620, %v4619
        %v4640 = vpack.c.b16 %v4622, %v4621
        %v4641 = vpack.c.b16 %v4624, %v4623
        %v4642 = vpack.c.b16 %v4626, %v4625
        %4659 = vmatprep.subr.bf16.mxu0 0
        %4660 = vmatpush1.bf16.msra.mxu0 %v4634
        %4661 = vmatprep.subr.bf16.mxu0 0
        %4662 = vmatpush1.bf16.msra.mxu0 %v4633
        %4663 = vmatprep.subr.bf16.mxu0 0
        %4664 = vmatpush1.bf16.msra.mxu0 %v4632
        %4665 = vmatprep.subr.bf16.mxu0 0
        %4666 = vmatpush1.bf16.msra.mxu0 %v4631
        %4667 = vmatprep.subr.bf16.mxu0 0
        %4668 = vmatpush1.bf16.msra.mxu0 %v4630
        %4669 = vmatprep.subr.bf16.mxu0 0
        %4670 = vmatpush1.bf16.msra.mxu0 %v4629
        %4671 = vmatprep.subr.bf16.mxu0 0
        %4672 = vmatpush1.bf16.msra.mxu0 %v4628
        %4673 = vmatprep.subr.bf16.mxu0 0
        %4674 = vmatpush1.bf16.msra.mxu0 %v4627
        %4675 = vmatprep.subr.bf16.mxu0 0
        %4676 = vmatpush2.bf16.msra.mxu0 %v4642
        %4677 = vmatprep.subr.bf16.mxu0 0
        %4678 = vmatpush2.bf16.msra.mxu0 %v4641
        %4679 = vmatprep.subr.bf16.mxu0 0
        %4680 = vmatpush2.bf16.msra.mxu0 %v4640
        %4681 = vmatprep.subr.bf16.mxu0 0
        %4682 = vmatpush2.bf16.msra.mxu0 %v4639
        %4683 = vmatprep.subr.bf16.mxu0 0
        %4684 = vmatpush2.bf16.msra.mxu0 %v4638
        %4685 = vmatprep.subr.bf16.mxu0 0
        %4686 = vmatpush2.bf16.msra.mxu0 %v4637
        %4687 = vmatprep.subr.bf16.mxu0 0
        %4688 = vmatpush2.bf16.msra.mxu0 %v4636
        %4689 = vmatprep.subr.bf16.mxu0 0
        %4690 = vmatpush2.bf16.msra.mxu0 %v4635
        %4691 = vmatprep.mubr.bf16.mxu0 %v4560
        %4692 = vmatmul.mubr.bf16.gmra.mxu0 %v4559
        %v4693 = vpop.f32.mrf.mxu0
        %v4694 = vadd.f32 0.0, %v4693
        %v4695 = vpop.f32.mrf.mxu0
        %v4696 = vpop.f32.mrf.mxu0
        %v4697 = vpop.f32.mrf.mxu0
        %4698 = vdwg.mxu0
        %v4699 = vadd.f32 %v4525, %v4694
        %s4700 = scalar_lea.vmem %s3, 512
        %v4701 = vld [vmem:[%s4700] sm:$0xf]
        %v4702 = vld [vmem:[%s4700 + $0x4] sm:$0xf]
        %v4703 = vld [vmem:[%s4700 + $0x8] sm:$0xf]
        %v4704 = vld [vmem:[%s4700 + $0xc] sm:$0xf]
        %v4705 = vld [vmem:[%s4700 + $0x10] sm:$0xf]
        %v4706 = vld [vmem:[%s4700 + $0x14] sm:$0xf]
        %v4707 = vld [vmem:[%s4700 + $0x18] sm:$0xf]
        %v4708 = vld [vmem:[%s4700 + $0x1c] sm:$0xf]
        %v4709 = vld [vmem:[%s4700 + $0x20] sm:$0xf]
        %v4710 = vld [vmem:[%s4700 + $0x24] sm:$0xf]
        %v4711 = vld [vmem:[%s4700 + $0x28] sm:$0xf]
        %v4712 = vld [vmem:[%s4700 + $0x2c] sm:$0xf]
        %v4713 = vld [vmem:[%s4700 + $0x30] sm:$0xf]
        %v4714 = vld [vmem:[%s4700 + $0x34] sm:$0xf]
        %v4715 = vld [vmem:[%s4700 + $0x38] sm:$0xf]
        %v4716 = vld [vmem:[%s4700 + $0x3c] sm:$0xf]
        %v4717 = vld [vmem:[%s4700 + $0x40] sm:$0xf]
        %v4718 = vld [vmem:[%s4700 + $0x44] sm:$0xf]
        %v4719 = vld [vmem:[%s4700 + $0x48] sm:$0xf]
        %v4720 = vld [vmem:[%s4700 + $0x4c] sm:$0xf]
        %v4721 = vld [vmem:[%s4700 + $0x50] sm:$0xf]
        %v4722 = vld [vmem:[%s4700 + $0x54] sm:$0xf]
        %v4723 = vld [vmem:[%s4700 + $0x58] sm:$0xf]
        %v4724 = vld [vmem:[%s4700 + $0x5c] sm:$0xf]
        %v4725 = vld [vmem:[%s4700 + $0x60] sm:$0xf]
        %v4726 = vld [vmem:[%s4700 + $0x64] sm:$0xf]
        %v4727 = vld [vmem:[%s4700 + $0x68] sm:$0xf]
        %v4728 = vld [vmem:[%s4700 + $0x6c] sm:$0xf]
        %v4729 = vld [vmem:[%s4700 + $0x70] sm:$0xf]
        %v4730 = vld [vmem:[%s4700 + $0x74] sm:$0xf]
        %v4731 = vld [vmem:[%s4700 + $0x78] sm:$0xf]
        %v4732 = vld [vmem:[%s4700 + $0x7c] sm:$0xf]
        %v4733 = vrot.slane %v4001, 2
        %v4734 = vrot.slane %v4002, 2
        %v4769 = vunpack.c.l.b16 %v4701
        %v4770 = vunpack.c.l.b16 %v4702
        %v4771 = vunpack.c.l.b16 %v4703
        %v4772 = vunpack.c.l.b16 %v4704
        %v4773 = vunpack.c.l.b16 %v4705
        %v4774 = vunpack.c.l.b16 %v4706
        %v4775 = vunpack.c.l.b16 %v4707
        %v4776 = vunpack.c.l.b16 %v4708
        %v4777 = vunpack.c.l.b16 %v4709
        %v4778 = vunpack.c.l.b16 %v4710
        %v4779 = vunpack.c.l.b16 %v4711
        %v4780 = vunpack.c.l.b16 %v4712
        %v4781 = vunpack.c.l.b16 %v4713
        %v4782 = vunpack.c.l.b16 %v4714
        %v4783 = vunpack.c.l.b16 %v4715
        %v4784 = vunpack.c.l.b16 %v4716
        %v4785 = vunpack.c.l.b16 %v4717
        %v4786 = vunpack.c.l.b16 %v4718
        %v4787 = vunpack.c.l.b16 %v4719
        %v4788 = vunpack.c.l.b16 %v4720
        %v4789 = vunpack.c.l.b16 %v4721
        %v4790 = vunpack.c.l.b16 %v4722
        %v4791 = vunpack.c.l.b16 %v4723
        %v4792 = vunpack.c.l.b16 %v4724
        %v4793 = vunpack.c.l.b16 %v4725
        %v4794 = vunpack.c.l.b16 %v4726
        %v4795 = vunpack.c.l.b16 %v4727
        %v4796 = vunpack.c.l.b16 %v4728
        %v4797 = vunpack.c.l.b16 %v4729
        %v4798 = vunpack.c.l.b16 %v4730
        %v4799 = vunpack.c.l.b16 %v4731
        %v4800 = vunpack.c.l.b16 %v4732
        %v4801 = vpack.c.b16 %v4770, %v4769
        %v4802 = vpack.c.b16 %v4772, %v4771
        %v4803 = vpack.c.b16 %v4774, %v4773
        %v4804 = vpack.c.b16 %v4776, %v4775
        %v4805 = vpack.c.b16 %v4778, %v4777
        %v4806 = vpack.c.b16 %v4780, %v4779
        %v4807 = vpack.c.b16 %v4782, %v4781
        %v4808 = vpack.c.b16 %v4784, %v4783
        %v4809 = vpack.c.b16 %v4786, %v4785
        %v4810 = vpack.c.b16 %v4788, %v4787
        %v4811 = vpack.c.b16 %v4790, %v4789
        %v4812 = vpack.c.b16 %v4792, %v4791
        %v4813 = vpack.c.b16 %v4794, %v4793
        %v4814 = vpack.c.b16 %v4796, %v4795
        %v4815 = vpack.c.b16 %v4798, %v4797
        %v4816 = vpack.c.b16 %v4800, %v4799
        %4833 = vmatprep.subr.bf16.mxu0 0
        %4834 = vmatpush1.bf16.msra.mxu0 %v4808
        %4835 = vmatprep.subr.bf16.mxu0 0
        %4836 = vmatpush1.bf16.msra.mxu0 %v4807
        %4837 = vmatprep.subr.bf16.mxu0 0
        %4838 = vmatpush1.bf16.msra.mxu0 %v4806
        %4839 = vmatprep.subr.bf16.mxu0 0
        %4840 = vmatpush1.bf16.msra.mxu0 %v4805
        %4841 = vmatprep.subr.bf16.mxu0 0
        %4842 = vmatpush1.bf16.msra.mxu0 %v4804
        %4843 = vmatprep.subr.bf16.mxu0 0
        %4844 = vmatpush1.bf16.msra.mxu0 %v4803
        %4845 = vmatprep.subr.bf16.mxu0 0
        %4846 = vmatpush1.bf16.msra.mxu0 %v4802
        %4847 = vmatprep.subr.bf16.mxu0 0
        %4848 = vmatpush1.bf16.msra.mxu0 %v4801
        %4849 = vmatprep.subr.bf16.mxu0 0
        %4850 = vmatpush2.bf16.msra.mxu0 %v4816
        %4851 = vmatprep.subr.bf16.mxu0 0
        %4852 = vmatpush2.bf16.msra.mxu0 %v4815
        %4853 = vmatprep.subr.bf16.mxu0 0
        %4854 = vmatpush2.bf16.msra.mxu0 %v4814
        %4855 = vmatprep.subr.bf16.mxu0 0
        %4856 = vmatpush2.bf16.msra.mxu0 %v4813
        %4857 = vmatprep.subr.bf16.mxu0 0
        %4858 = vmatpush2.bf16.msra.mxu0 %v4812
        %4859 = vmatprep.subr.bf16.mxu0 0
        %4860 = vmatpush2.bf16.msra.mxu0 %v4811
        %4861 = vmatprep.subr.bf16.mxu0 0
        %4862 = vmatpush2.bf16.msra.mxu0 %v4810
        %4863 = vmatprep.subr.bf16.mxu0 0
        %4864 = vmatpush2.bf16.msra.mxu0 %v4809
        %4865 = vmatprep.mubr.bf16.mxu0 %v4734
        %4866 = vmatmul.mubr.bf16.gmra.mxu0 %v4733
        %v4867 = vpop.f32.mrf.mxu0
        %v4868 = vadd.f32 0.0, %v4867
        %v4869 = vpop.f32.mrf.mxu0
        %v4870 = vpop.f32.mrf.mxu0
        %v4871 = vpop.f32.mrf.mxu0
        %4872 = vdwg.mxu0
        %v4873 = vadd.f32 %v4699, %v4868
        %s4874 = scalar_lea.vmem %s3, 640
        %v4875 = vld [vmem:[%s4874] sm:$0xf]
        %v4876 = vld [vmem:[%s4874 + $0x4] sm:$0xf]
        %v4877 = vld [vmem:[%s4874 + $0x8] sm:$0xf]
        %v4878 = vld [vmem:[%s4874 + $0xc] sm:$0xf]
        %v4879 = vld [vmem:[%s4874 + $0x10] sm:$0xf]
        %v4880 = vld [vmem:[%s4874 + $0x14] sm:$0xf]
        %v4881 = vld [vmem:[%s4874 + $0x18] sm:$0xf]
        %v4882 = vld [vmem:[%s4874 + $0x1c] sm:$0xf]
        %v4883 = vld [vmem:[%s4874 + $0x20] sm:$0xf]
        %v4884 = vld [vmem:[%s4874 + $0x24] sm:$0xf]
        %v4885 = vld [vmem:[%s4874 + $0x28] sm:$0xf]
        %v4886 = vld [vmem:[%s4874 + $0x2c] sm:$0xf]
        %v4887 = vld [vmem:[%s4874 + $0x30] sm:$0xf]
        %v4888 = vld [vmem:[%s4874 + $0x34] sm:$0xf]
        %v4889 = vld [vmem:[%s4874 + $0x38] sm:$0xf]
        %v4890 = vld [vmem:[%s4874 + $0x3c] sm:$0xf]
        %v4891 = vld [vmem:[%s4874 + $0x40] sm:$0xf]
        %v4892 = vld [vmem:[%s4874 + $0x44] sm:$0xf]
        %v4893 = vld [vmem:[%s4874 + $0x48] sm:$0xf]
        %v4894 = vld [vmem:[%s4874 + $0x4c] sm:$0xf]
        %v4895 = vld [vmem:[%s4874 + $0x50] sm:$0xf]
        %v4896 = vld [vmem:[%s4874 + $0x54] sm:$0xf]
        %v4897 = vld [vmem:[%s4874 + $0x58] sm:$0xf]
        %v4898 = vld [vmem:[%s4874 + $0x5c] sm:$0xf]
        %v4899 = vld [vmem:[%s4874 + $0x60] sm:$0xf]
        %v4900 = vld [vmem:[%s4874 + $0x64] sm:$0xf]
        %v4901 = vld [vmem:[%s4874 + $0x68] sm:$0xf]
        %v4902 = vld [vmem:[%s4874 + $0x6c] sm:$0xf]
        %v4903 = vld [vmem:[%s4874 + $0x70] sm:$0xf]
        %v4904 = vld [vmem:[%s4874 + $0x74] sm:$0xf]
        %v4905 = vld [vmem:[%s4874 + $0x78] sm:$0xf]
        %v4906 = vld [vmem:[%s4874 + $0x7c] sm:$0xf]
        %v4907 = vrot.slane %v4206, 2
        %v4908 = vrot.slane %v4209, 2
        %v4943 = vunpack.c.l.b16 %v4875
        %v4944 = vunpack.c.l.b16 %v4876
        %v4945 = vunpack.c.l.b16 %v4877
        %v4946 = vunpack.c.l.b16 %v4878
        %v4947 = vunpack.c.l.b16 %v4879
        %v4948 = vunpack.c.l.b16 %v4880
        %v4949 = vunpack.c.l.b16 %v4881
        %v4950 = vunpack.c.l.b16 %v4882
        %v4951 = vunpack.c.l.b16 %v4883
        %v4952 = vunpack.c.l.b16 %v4884
        %v4953 = vunpack.c.l.b16 %v4885
        %v4954 = vunpack.c.l.b16 %v4886
        %v4955 = vunpack.c.l.b16 %v4887
        %v4956 = vunpack.c.l.b16 %v4888
        %v4957 = vunpack.c.l.b16 %v4889
        %v4958 = vunpack.c.l.b16 %v4890
        %v4959 = vunpack.c.l.b16 %v4891
        %v4960 = vunpack.c.l.b16 %v4892
        %v4961 = vunpack.c.l.b16 %v4893
        %v4962 = vunpack.c.l.b16 %v4894
        %v4963 = vunpack.c.l.b16 %v4895
        %v4964 = vunpack.c.l.b16 %v4896
        %v4965 = vunpack.c.l.b16 %v4897
        %v4966 = vunpack.c.l.b16 %v4898
        %v4967 = vunpack.c.l.b16 %v4899
        %v4968 = vunpack.c.l.b16 %v4900
        %v4969 = vunpack.c.l.b16 %v4901
        %v4970 = vunpack.c.l.b16 %v4902
        %v4971 = vunpack.c.l.b16 %v4903
        %v4972 = vunpack.c.l.b16 %v4904
        %v4973 = vunpack.c.l.b16 %v4905
        %v4974 = vunpack.c.l.b16 %v4906
        %v4975 = vpack.c.b16 %v4944, %v4943
        %v4976 = vpack.c.b16 %v4946, %v4945
        %v4977 = vpack.c.b16 %v4948, %v4947
        %v4978 = vpack.c.b16 %v4950, %v4949
        %v4979 = vpack.c.b16 %v4952, %v4951
        %v4980 = vpack.c.b16 %v4954, %v4953
        %v4981 = vpack.c.b16 %v4956, %v4955
        %v4982 = vpack.c.b16 %v4958, %v4957
        %v4983 = vpack.c.b16 %v4960, %v4959
        %v4984 = vpack.c.b16 %v4962, %v4961
        %v4985 = vpack.c.b16 %v4964, %v4963
        %v4986 = vpack.c.b16 %v4966, %v4965
        %v4987 = vpack.c.b16 %v4968, %v4967
        %v4988 = vpack.c.b16 %v4970, %v4969
        %v4989 = vpack.c.b16 %v4972, %v4971
        %v4990 = vpack.c.b16 %v4974, %v4973
        %5007 = vmatprep.subr.bf16.mxu0 0
        %5008 = vmatpush1.bf16.msra.mxu0 %v4982
        %5009 = vmatprep.subr.bf16.mxu0 0
        %5010 = vmatpush1.bf16.msra.mxu0 %v4981
        %5011 = vmatprep.subr.bf16.mxu0 0
        %5012 = vmatpush1.bf16.msra.mxu0 %v4980
        %5013 = vmatprep.subr.bf16.mxu0 0
        %5014 = vmatpush1.bf16.msra.mxu0 %v4979
        %5015 = vmatprep.subr.bf16.mxu0 0
        %5016 = vmatpush1.bf16.msra.mxu0 %v4978
        %5017 = vmatprep.subr.bf16.mxu0 0
        %5018 = vmatpush1.bf16.msra.mxu0 %v4977
        %5019 = vmatprep.subr.bf16.mxu0 0
        %5020 = vmatpush1.bf16.msra.mxu0 %v4976
        %5021 = vmatprep.subr.bf16.mxu0 0
        %5022 = vmatpush1.bf16.msra.mxu0 %v4975
        %5023 = vmatprep.subr.bf16.mxu0 0
        %5024 = vmatpush2.bf16.msra.mxu0 %v4990
        %5025 = vmatprep.subr.bf16.mxu0 0
        %5026 = vmatpush2.bf16.msra.mxu0 %v4989
        %5027 = vmatprep.subr.bf16.mxu0 0
        %5028 = vmatpush2.bf16.msra.mxu0 %v4988
        %5029 = vmatprep.subr.bf16.mxu0 0
        %5030 = vmatpush2.bf16.msra.mxu0 %v4987
        %5031 = vmatprep.subr.bf16.mxu0 0
        %5032 = vmatpush2.bf16.msra.mxu0 %v4986
        %5033 = vmatprep.subr.bf16.mxu0 0
        %5034 = vmatpush2.bf16.msra.mxu0 %v4985
        %5035 = vmatprep.subr.bf16.mxu0 0
        %5036 = vmatpush2.bf16.msra.mxu0 %v4984
        %5037 = vmatprep.subr.bf16.mxu0 0
        %5038 = vmatpush2.bf16.msra.mxu0 %v4983
        %5039 = vmatprep.mubr.bf16.mxu0 %v4908
        %5040 = vmatmul.mubr.bf16.gmra.mxu0 %v4907
        %v5041 = vpop.f32.mrf.mxu0
        %v5042 = vadd.f32 0.0, %v5041
        %v5043 = vpop.f32.mrf.mxu0
        %v5044 = vpop.f32.mrf.mxu0
        %v5045 = vpop.f32.mrf.mxu0
        %5046 = vdwg.mxu0
        %v5047 = vadd.f32 %v4873, %v5042
        %s5048 = scalar_lea.vmem %s3, 768
        %v5049 = vld [vmem:[%s5048] sm:$0xf]
        %v5050 = vld [vmem:[%s5048 + $0x4] sm:$0xf]
        %v5051 = vld [vmem:[%s5048 + $0x8] sm:$0xf]
        %v5052 = vld [vmem:[%s5048 + $0xc] sm:$0xf]
        %v5053 = vld [vmem:[%s5048 + $0x10] sm:$0xf]
        %v5054 = vld [vmem:[%s5048 + $0x14] sm:$0xf]
        %v5055 = vld [vmem:[%s5048 + $0x18] sm:$0xf]
        %v5056 = vld [vmem:[%s5048 + $0x1c] sm:$0xf]
        %v5057 = vld [vmem:[%s5048 + $0x20] sm:$0xf]
        %v5058 = vld [vmem:[%s5048 + $0x24] sm:$0xf]
        %v5059 = vld [vmem:[%s5048 + $0x28] sm:$0xf]
        %v5060 = vld [vmem:[%s5048 + $0x2c] sm:$0xf]
        %v5061 = vld [vmem:[%s5048 + $0x30] sm:$0xf]
        %v5062 = vld [vmem:[%s5048 + $0x34] sm:$0xf]
        %v5063 = vld [vmem:[%s5048 + $0x38] sm:$0xf]
        %v5064 = vld [vmem:[%s5048 + $0x3c] sm:$0xf]
        %v5065 = vld [vmem:[%s5048 + $0x40] sm:$0xf]
        %v5066 = vld [vmem:[%s5048 + $0x44] sm:$0xf]
        %v5067 = vld [vmem:[%s5048 + $0x48] sm:$0xf]
        %v5068 = vld [vmem:[%s5048 + $0x4c] sm:$0xf]
        %v5069 = vld [vmem:[%s5048 + $0x50] sm:$0xf]
        %v5070 = vld [vmem:[%s5048 + $0x54] sm:$0xf]
        %v5071 = vld [vmem:[%s5048 + $0x58] sm:$0xf]
        %v5072 = vld [vmem:[%s5048 + $0x5c] sm:$0xf]
        %v5073 = vld [vmem:[%s5048 + $0x60] sm:$0xf]
        %v5074 = vld [vmem:[%s5048 + $0x64] sm:$0xf]
        %v5075 = vld [vmem:[%s5048 + $0x68] sm:$0xf]
        %v5076 = vld [vmem:[%s5048 + $0x6c] sm:$0xf]
        %v5077 = vld [vmem:[%s5048 + $0x70] sm:$0xf]
        %v5078 = vld [vmem:[%s5048 + $0x74] sm:$0xf]
        %v5079 = vld [vmem:[%s5048 + $0x78] sm:$0xf]
        %v5080 = vld [vmem:[%s5048 + $0x7c] sm:$0xf]
        %v5081 = vrot.slane %v4001, 3
        %v5082 = vrot.slane %v4002, 3
        %v5117 = vunpack.c.l.b16 %v5049
        %v5118 = vunpack.c.l.b16 %v5050
        %v5119 = vunpack.c.l.b16 %v5051
        %v5120 = vunpack.c.l.b16 %v5052
        %v5121 = vunpack.c.l.b16 %v5053
        %v5122 = vunpack.c.l.b16 %v5054
        %v5123 = vunpack.c.l.b16 %v5055
        %v5124 = vunpack.c.l.b16 %v5056
        %v5125 = vunpack.c.l.b16 %v5057
        %v5126 = vunpack.c.l.b16 %v5058
        %v5127 = vunpack.c.l.b16 %v5059
        %v5128 = vunpack.c.l.b16 %v5060
        %v5129 = vunpack.c.l.b16 %v5061
        %v5130 = vunpack.c.l.b16 %v5062
        %v5131 = vunpack.c.l.b16 %v5063
        %v5132 = vunpack.c.l.b16 %v5064
        %v5133 = vunpack.c.l.b16 %v5065
        %v5134 = vunpack.c.l.b16 %v5066
        %v5135 = vunpack.c.l.b16 %v5067
        %v5136 = vunpack.c.l.b16 %v5068
        %v5137 = vunpack.c.l.b16 %v5069
        %v5138 = vunpack.c.l.b16 %v5070
        %v5139 = vunpack.c.l.b16 %v5071
        %v5140 = vunpack.c.l.b16 %v5072
        %v5141 = vunpack.c.l.b16 %v5073
        %v5142 = vunpack.c.l.b16 %v5074
        %v5143 = vunpack.c.l.b16 %v5075
        %v5144 = vunpack.c.l.b16 %v5076
        %v5145 = vunpack.c.l.b16 %v5077
        %v5146 = vunpack.c.l.b16 %v5078
        %v5147 = vunpack.c.l.b16 %v5079
        %v5148 = vunpack.c.l.b16 %v5080
        %v5149 = vpack.c.b16 %v5118, %v5117
        %v5150 = vpack.c.b16 %v5120, %v5119
        %v5151 = vpack.c.b16 %v5122, %v5121
        %v5152 = vpack.c.b16 %v5124, %v5123
        %v5153 = vpack.c.b16 %v5126, %v5125
        %v5154 = vpack.c.b16 %v5128, %v5127
        %v5155 = vpack.c.b16 %v5130, %v5129
        %v5156 = vpack.c.b16 %v5132, %v5131
        %v5157 = vpack.c.b16 %v5134, %v5133
        %v5158 = vpack.c.b16 %v5136, %v5135
        %v5159 = vpack.c.b16 %v5138, %v5137
        %v5160 = vpack.c.b16 %v5140, %v5139
        %v5161 = vpack.c.b16 %v5142, %v5141
        %v5162 = vpack.c.b16 %v5144, %v5143
        %v5163 = vpack.c.b16 %v5146, %v5145
        %v5164 = vpack.c.b16 %v5148, %v5147
        %5181 = vmatprep.subr.bf16.mxu0 0
        %5182 = vmatpush1.bf16.msra.mxu0 %v5156
        %5183 = vmatprep.subr.bf16.mxu0 0
        %5184 = vmatpush1.bf16.msra.mxu0 %v5155
        %5185 = vmatprep.subr.bf16.mxu0 0
        %5186 = vmatpush1.bf16.msra.mxu0 %v5154
        %5187 = vmatprep.subr.bf16.mxu0 0
        %5188 = vmatpush1.bf16.msra.mxu0 %v5153
        %5189 = vmatprep.subr.bf16.mxu0 0
        %5190 = vmatpush1.bf16.msra.mxu0 %v5152
        %5191 = vmatprep.subr.bf16.mxu0 0
        %5192 = vmatpush1.bf16.msra.mxu0 %v5151
        %5193 = vmatprep.subr.bf16.mxu0 0
        %5194 = vmatpush1.bf16.msra.mxu0 %v5150
        %5195 = vmatprep.subr.bf16.mxu0 0
        %5196 = vmatpush1.bf16.msra.mxu0 %v5149
        %5197 = vmatprep.subr.bf16.mxu0 0
        %5198 = vmatpush2.bf16.msra.mxu0 %v5164
        %5199 = vmatprep.subr.bf16.mxu0 0
        %5200 = vmatpush2.bf16.msra.mxu0 %v5163
        %5201 = vmatprep.subr.bf16.mxu0 0
        %5202 = vmatpush2.bf16.msra.mxu0 %v5162
        %5203 = vmatprep.subr.bf16.mxu0 0
        %5204 = vmatpush2.bf16.msra.mxu0 %v5161
        %5205 = vmatprep.subr.bf16.mxu0 0
        %5206 = vmatpush2.bf16.msra.mxu0 %v5160
        %5207 = vmatprep.subr.bf16.mxu0 0
        %5208 = vmatpush2.bf16.msra.mxu0 %v5159
        %5209 = vmatprep.subr.bf16.mxu0 0
        %5210 = vmatpush2.bf16.msra.mxu0 %v5158
        %5211 = vmatprep.subr.bf16.mxu0 0
        %5212 = vmatpush2.bf16.msra.mxu0 %v5157
        %5213 = vmatprep.mubr.bf16.mxu0 %v5082
        %5214 = vmatmul.mubr.bf16.gmra.mxu0 %v5081
        %v5215 = vpop.f32.mrf.mxu0
        %v5216 = vadd.f32 0.0, %v5215
        %v5217 = vpop.f32.mrf.mxu0
        %v5218 = vpop.f32.mrf.mxu0
        %v5219 = vpop.f32.mrf.mxu0
        %5220 = vdwg.mxu0
        %v5221 = vadd.f32 %v5047, %v5216
        %s5222 = scalar_lea.vmem %s3, 896
        %v5223 = vld [vmem:[%s5222] sm:$0xf]
        %v5224 = vld [vmem:[%s5222 + $0x4] sm:$0xf]
        %v5225 = vld [vmem:[%s5222 + $0x8] sm:$0xf]
        %v5226 = vld [vmem:[%s5222 + $0xc] sm:$0xf]
        %v5227 = vld [vmem:[%s5222 + $0x10] sm:$0xf]
        %v5228 = vld [vmem:[%s5222 + $0x14] sm:$0xf]
        %v5229 = vld [vmem:[%s5222 + $0x18] sm:$0xf]
        %v5230 = vld [vmem:[%s5222 + $0x1c] sm:$0xf]
        %v5231 = vld [vmem:[%s5222 + $0x20] sm:$0xf]
        %v5232 = vld [vmem:[%s5222 + $0x24] sm:$0xf]
        %v5233 = vld [vmem:[%s5222 + $0x28] sm:$0xf]
        %v5234 = vld [vmem:[%s5222 + $0x2c] sm:$0xf]
        %v5235 = vld [vmem:[%s5222 + $0x30] sm:$0xf]
        %v5236 = vld [vmem:[%s5222 + $0x34] sm:$0xf]
        %v5237 = vld [vmem:[%s5222 + $0x38] sm:$0xf]
        %v5238 = vld [vmem:[%s5222 + $0x3c] sm:$0xf]
        %v5239 = vld [vmem:[%s5222 + $0x40] sm:$0xf]
        %v5240 = vld [vmem:[%s5222 + $0x44] sm:$0xf]
        %v5241 = vld [vmem:[%s5222 + $0x48] sm:$0xf]
        %v5242 = vld [vmem:[%s5222 + $0x4c] sm:$0xf]
        %v5243 = vld [vmem:[%s5222 + $0x50] sm:$0xf]
        %v5244 = vld [vmem:[%s5222 + $0x54] sm:$0xf]
        %v5245 = vld [vmem:[%s5222 + $0x58] sm:$0xf]
        %v5246 = vld [vmem:[%s5222 + $0x5c] sm:$0xf]
        %v5247 = vld [vmem:[%s5222 + $0x60] sm:$0xf]
        %v5248 = vld [vmem:[%s5222 + $0x64] sm:$0xf]
        %v5249 = vld [vmem:[%s5222 + $0x68] sm:$0xf]
        %v5250 = vld [vmem:[%s5222 + $0x6c] sm:$0xf]
        %v5251 = vld [vmem:[%s5222 + $0x70] sm:$0xf]
        %v5252 = vld [vmem:[%s5222 + $0x74] sm:$0xf]
        %v5253 = vld [vmem:[%s5222 + $0x78] sm:$0xf]
        %v5254 = vld [vmem:[%s5222 + $0x7c] sm:$0xf]
        %v5255 = vrot.slane %v4206, 3
        %v5256 = vrot.slane %v4209, 3
        %v5291 = vunpack.c.l.b16 %v5223
        %v5292 = vunpack.c.l.b16 %v5224
        %v5293 = vunpack.c.l.b16 %v5225
        %v5294 = vunpack.c.l.b16 %v5226
        %v5295 = vunpack.c.l.b16 %v5227
        %v5296 = vunpack.c.l.b16 %v5228
        %v5297 = vunpack.c.l.b16 %v5229
        %v5298 = vunpack.c.l.b16 %v5230
        %v5299 = vunpack.c.l.b16 %v5231
        %v5300 = vunpack.c.l.b16 %v5232
        %v5301 = vunpack.c.l.b16 %v5233
        %v5302 = vunpack.c.l.b16 %v5234
        %v5303 = vunpack.c.l.b16 %v5235
        %v5304 = vunpack.c.l.b16 %v5236
        %v5305 = vunpack.c.l.b16 %v5237
        %v5306 = vunpack.c.l.b16 %v5238
        %v5307 = vunpack.c.l.b16 %v5239
        %v5308 = vunpack.c.l.b16 %v5240
        %v5309 = vunpack.c.l.b16 %v5241
        %v5310 = vunpack.c.l.b16 %v5242
        %v5311 = vunpack.c.l.b16 %v5243
        %v5312 = vunpack.c.l.b16 %v5244
        %v5313 = vunpack.c.l.b16 %v5245
        %v5314 = vunpack.c.l.b16 %v5246
        %v5315 = vunpack.c.l.b16 %v5247
        %v5316 = vunpack.c.l.b16 %v5248
        %v5317 = vunpack.c.l.b16 %v5249
        %v5318 = vunpack.c.l.b16 %v5250
        %v5319 = vunpack.c.l.b16 %v5251
        %v5320 = vunpack.c.l.b16 %v5252
        %v5321 = vunpack.c.l.b16 %v5253
        %v5322 = vunpack.c.l.b16 %v5254
        %v5323 = vpack.c.b16 %v5292, %v5291
        %v5324 = vpack.c.b16 %v5294, %v5293
        %v5325 = vpack.c.b16 %v5296, %v5295
        %v5326 = vpack.c.b16 %v5298, %v5297
        %v5327 = vpack.c.b16 %v5300, %v5299
        %v5328 = vpack.c.b16 %v5302, %v5301
        %v5329 = vpack.c.b16 %v5304, %v5303
        %v5330 = vpack.c.b16 %v5306, %v5305
        %v5331 = vpack.c.b16 %v5308, %v5307
        %v5332 = vpack.c.b16 %v5310, %v5309
        %v5333 = vpack.c.b16 %v5312, %v5311
        %v5334 = vpack.c.b16 %v5314, %v5313
        %v5335 = vpack.c.b16 %v5316, %v5315
        %v5336 = vpack.c.b16 %v5318, %v5317
        %v5337 = vpack.c.b16 %v5320, %v5319
        %v5338 = vpack.c.b16 %v5322, %v5321
        %5355 = vmatprep.subr.bf16.mxu0 0
        %5356 = vmatpush1.bf16.msra.mxu0 %v5330
        %5357 = vmatprep.subr.bf16.mxu0 0
        %5358 = vmatpush1.bf16.msra.mxu0 %v5329
        %5359 = vmatprep.subr.bf16.mxu0 0
        %5360 = vmatpush1.bf16.msra.mxu0 %v5328
        %5361 = vmatprep.subr.bf16.mxu0 0
        %5362 = vmatpush1.bf16.msra.mxu0 %v5327
        %5363 = vmatprep.subr.bf16.mxu0 0
        %5364 = vmatpush1.bf16.msra.mxu0 %v5326
        %5365 = vmatprep.subr.bf16.mxu0 0
        %5366 = vmatpush1.bf16.msra.mxu0 %v5325
        %5367 = vmatprep.subr.bf16.mxu0 0
        %5368 = vmatpush1.bf16.msra.mxu0 %v5324
        %5369 = vmatprep.subr.bf16.mxu0 0
        %5370 = vmatpush1.bf16.msra.mxu0 %v5323
        %5371 = vmatprep.subr.bf16.mxu0 0
        %5372 = vmatpush2.bf16.msra.mxu0 %v5338
        %5373 = vmatprep.subr.bf16.mxu0 0
        %5374 = vmatpush2.bf16.msra.mxu0 %v5337
        %5375 = vmatprep.subr.bf16.mxu0 0
        %5376 = vmatpush2.bf16.msra.mxu0 %v5336
        %5377 = vmatprep.subr.bf16.mxu0 0
        %5378 = vmatpush2.bf16.msra.mxu0 %v5335
        %5379 = vmatprep.subr.bf16.mxu0 0
        %5380 = vmatpush2.bf16.msra.mxu0 %v5334
        %5381 = vmatprep.subr.bf16.mxu0 0
        %5382 = vmatpush2.bf16.msra.mxu0 %v5333
        %5383 = vmatprep.subr.bf16.mxu0 0
        %5384 = vmatpush2.bf16.msra.mxu0 %v5332
        %5385 = vmatprep.subr.bf16.mxu0 0
        %5386 = vmatpush2.bf16.msra.mxu0 %v5331
        %5387 = vmatprep.mubr.bf16.mxu0 %v5256
        %5388 = vmatmul.mubr.bf16.gmra.mxu0 %v5255
        %v5389 = vpop.f32.mrf.mxu0
        %v5390 = vadd.f32 0.0, %v5389
        %v5391 = vpop.f32.mrf.mxu0
        %v5392 = vpop.f32.mrf.mxu0
        %v5393 = vpop.f32.mrf.mxu0
        %5394 = vdwg.mxu0
        %v5395 = vadd.f32 %v5221, %v5390
        %v5396 = vpack.c.bf16 %v3998, %v3998
        %v5397 = vpack.c.bf16 %v3999, %v3999
        %s5398 = scalar_lea.vmem %s3, 1024
        %v5399 = vld [vmem:[%s5398] sm:$0xf]
        %v5400 = vld [vmem:[%s5398 + $0x4] sm:$0xf]
        %v5401 = vld [vmem:[%s5398 + $0x8] sm:$0xf]
        %v5402 = vld [vmem:[%s5398 + $0xc] sm:$0xf]
        %v5403 = vld [vmem:[%s5398 + $0x10] sm:$0xf]
        %v5404 = vld [vmem:[%s5398 + $0x14] sm:$0xf]
        %v5405 = vld [vmem:[%s5398 + $0x18] sm:$0xf]
        %v5406 = vld [vmem:[%s5398 + $0x1c] sm:$0xf]
        %v5407 = vld [vmem:[%s5398 + $0x20] sm:$0xf]
        %v5408 = vld [vmem:[%s5398 + $0x24] sm:$0xf]
        %v5409 = vld [vmem:[%s5398 + $0x28] sm:$0xf]
        %v5410 = vld [vmem:[%s5398 + $0x2c] sm:$0xf]
        %v5411 = vld [vmem:[%s5398 + $0x30] sm:$0xf]
        %v5412 = vld [vmem:[%s5398 + $0x34] sm:$0xf]
        %v5413 = vld [vmem:[%s5398 + $0x38] sm:$0xf]
        %v5414 = vld [vmem:[%s5398 + $0x3c] sm:$0xf]
        %v5415 = vld [vmem:[%s5398 + $0x40] sm:$0xf]
        %v5416 = vld [vmem:[%s5398 + $0x44] sm:$0xf]
        %v5417 = vld [vmem:[%s5398 + $0x48] sm:$0xf]
        %v5418 = vld [vmem:[%s5398 + $0x4c] sm:$0xf]
        %v5419 = vld [vmem:[%s5398 + $0x50] sm:$0xf]
        %v5420 = vld [vmem:[%s5398 + $0x54] sm:$0xf]
        %v5421 = vld [vmem:[%s5398 + $0x58] sm:$0xf]
        %v5422 = vld [vmem:[%s5398 + $0x5c] sm:$0xf]
        %v5423 = vld [vmem:[%s5398 + $0x60] sm:$0xf]
        %v5424 = vld [vmem:[%s5398 + $0x64] sm:$0xf]
        %v5425 = vld [vmem:[%s5398 + $0x68] sm:$0xf]
        %v5426 = vld [vmem:[%s5398 + $0x6c] sm:$0xf]
        %v5427 = vld [vmem:[%s5398 + $0x70] sm:$0xf]
        %v5428 = vld [vmem:[%s5398 + $0x74] sm:$0xf]
        %v5429 = vld [vmem:[%s5398 + $0x78] sm:$0xf]
        %v5430 = vld [vmem:[%s5398 + $0x7c] sm:$0xf]
        %v5463 = vunpack.c.l.b16 %v5399
        %v5464 = vunpack.c.l.b16 %v5400
        %v5465 = vunpack.c.l.b16 %v5401
        %v5466 = vunpack.c.l.b16 %v5402
        %v5467 = vunpack.c.l.b16 %v5403
        %v5468 = vunpack.c.l.b16 %v5404
        %v5469 = vunpack.c.l.b16 %v5405
        %v5470 = vunpack.c.l.b16 %v5406
        %v5471 = vunpack.c.l.b16 %v5407
        %v5472 = vunpack.c.l.b16 %v5408
        %v5473 = vunpack.c.l.b16 %v5409
        %v5474 = vunpack.c.l.b16 %v5410
        %v5475 = vunpack.c.l.b16 %v5411
        %v5476 = vunpack.c.l.b16 %v5412
        %v5477 = vunpack.c.l.b16 %v5413
        %v5478 = vunpack.c.l.b16 %v5414
        %v5479 = vunpack.c.l.b16 %v5415
        %v5480 = vunpack.c.l.b16 %v5416
        %v5481 = vunpack.c.l.b16 %v5417
        %v5482 = vunpack.c.l.b16 %v5418
        %v5483 = vunpack.c.l.b16 %v5419
        %v5484 = vunpack.c.l.b16 %v5420
        %v5485 = vunpack.c.l.b16 %v5421
        %v5486 = vunpack.c.l.b16 %v5422
        %v5487 = vunpack.c.l.b16 %v5423
        %v5488 = vunpack.c.l.b16 %v5424
        %v5489 = vunpack.c.l.b16 %v5425
        %v5490 = vunpack.c.l.b16 %v5426
        %v5491 = vunpack.c.l.b16 %v5427
        %v5492 = vunpack.c.l.b16 %v5428
        %v5493 = vunpack.c.l.b16 %v5429
        %v5494 = vunpack.c.l.b16 %v5430
        %v5495 = vpack.c.b16 %v5464, %v5463
        %v5496 = vpack.c.b16 %v5466, %v5465
        %v5497 = vpack.c.b16 %v5468, %v5467
        %v5498 = vpack.c.b16 %v5470, %v5469
        %v5499 = vpack.c.b16 %v5472, %v5471
        %v5500 = vpack.c.b16 %v5474, %v5473
        %v5501 = vpack.c.b16 %v5476, %v5475
        %v5502 = vpack.c.b16 %v5478, %v5477
        %v5503 = vpack.c.b16 %v5480, %v5479
        %v5504 = vpack.c.b16 %v5482, %v5481
        %v5505 = vpack.c.b16 %v5484, %v5483
        %v5506 = vpack.c.b16 %v5486, %v5485
        %v5507 = vpack.c.b16 %v5488, %v5487
        %v5508 = vpack.c.b16 %v5490, %v5489
        %v5509 = vpack.c.b16 %v5492, %v5491
        %v5510 = vpack.c.b16 %v5494, %v5493
        %5527 = vmatprep.subr.bf16.mxu0 0
        %5528 = vmatpush1.bf16.msra.mxu0 %v5502
        %5529 = vmatprep.subr.bf16.mxu0 0
        %5530 = vmatpush1.bf16.msra.mxu0 %v5501
        %5531 = vmatprep.subr.bf16.mxu0 0
        %5532 = vmatpush1.bf16.msra.mxu0 %v5500
        %5533 = vmatprep.subr.bf16.mxu0 0
        %5534 = vmatpush1.bf16.msra.mxu0 %v5499
        %5535 = vmatprep.subr.bf16.mxu0 0
        %5536 = vmatpush1.bf16.msra.mxu0 %v5498
        %5537 = vmatprep.subr.bf16.mxu0 0
        %5538 = vmatpush1.bf16.msra.mxu0 %v5497
        %5539 = vmatprep.subr.bf16.mxu0 0
        %5540 = vmatpush1.bf16.msra.mxu0 %v5496
        %5541 = vmatprep.subr.bf16.mxu0 0
        %5542 = vmatpush1.bf16.msra.mxu0 %v5495
        %5543 = vmatprep.subr.bf16.mxu0 0
        %5544 = vmatpush2.bf16.msra.mxu0 %v5510
        %5545 = vmatprep.subr.bf16.mxu0 0
        %5546 = vmatpush2.bf16.msra.mxu0 %v5509
        %5547 = vmatprep.subr.bf16.mxu0 0
        %5548 = vmatpush2.bf16.msra.mxu0 %v5508
        %5549 = vmatprep.subr.bf16.mxu0 0
        %5550 = vmatpush2.bf16.msra.mxu0 %v5507
        %5551 = vmatprep.subr.bf16.mxu0 0
        %5552 = vmatpush2.bf16.msra.mxu0 %v5506
        %5553 = vmatprep.subr.bf16.mxu0 0
        %5554 = vmatpush2.bf16.msra.mxu0 %v5505
        %5555 = vmatprep.subr.bf16.mxu0 0
        %5556 = vmatpush2.bf16.msra.mxu0 %v5504
        %5557 = vmatprep.subr.bf16.mxu0 0
        %5558 = vmatpush2.bf16.msra.mxu0 %v5503
        %5559 = vmatprep.mubr.bf16.mxu0 %v5397
        %5560 = vmatmul.mubr.bf16.gmra.mxu0 %v5396
        %v5561 = vpop.f32.mrf.mxu0
        %v5562 = vadd.f32 0.0, %v5561
        %v5563 = vpop.f32.mrf.mxu0
        %v5564 = vpop.f32.mrf.mxu0
        %v5565 = vpop.f32.mrf.mxu0
        %5566 = vdwg.mxu0
        %v5567 = vadd.f32 %v5395, %v5562
        %s5568 = scalar_lea.vmem %s3, 1152
        %v5569 = vld [vmem:[%s5568] sm:$0xf]
        %v5570 = vld [vmem:[%s5568 + $0x4] sm:$0xf]
        %v5571 = vld [vmem:[%s5568 + $0x8] sm:$0xf]
        %v5572 = vld [vmem:[%s5568 + $0xc] sm:$0xf]
        %v5573 = vld [vmem:[%s5568 + $0x10] sm:$0xf]
        %v5574 = vld [vmem:[%s5568 + $0x14] sm:$0xf]
        %v5575 = vld [vmem:[%s5568 + $0x18] sm:$0xf]
        %v5576 = vld [vmem:[%s5568 + $0x1c] sm:$0xf]
        %v5577 = vld [vmem:[%s5568 + $0x20] sm:$0xf]
        %v5578 = vld [vmem:[%s5568 + $0x24] sm:$0xf]
        %v5579 = vld [vmem:[%s5568 + $0x28] sm:$0xf]
        %v5580 = vld [vmem:[%s5568 + $0x2c] sm:$0xf]
        %v5581 = vld [vmem:[%s5568 + $0x30] sm:$0xf]
        %v5582 = vld [vmem:[%s5568 + $0x34] sm:$0xf]
        %v5583 = vld [vmem:[%s5568 + $0x38] sm:$0xf]
        %v5584 = vld [vmem:[%s5568 + $0x3c] sm:$0xf]
        %v5585 = vld [vmem:[%s5568 + $0x40] sm:$0xf]
        %v5586 = vld [vmem:[%s5568 + $0x44] sm:$0xf]
        %v5587 = vld [vmem:[%s5568 + $0x48] sm:$0xf]
        %v5588 = vld [vmem:[%s5568 + $0x4c] sm:$0xf]
        %v5589 = vld [vmem:[%s5568 + $0x50] sm:$0xf]
        %v5590 = vld [vmem:[%s5568 + $0x54] sm:$0xf]
        %v5591 = vld [vmem:[%s5568 + $0x58] sm:$0xf]
        %v5592 = vld [vmem:[%s5568 + $0x5c] sm:$0xf]
        %v5593 = vld [vmem:[%s5568 + $0x60] sm:$0xf]
        %v5594 = vld [vmem:[%s5568 + $0x64] sm:$0xf]
        %v5595 = vld [vmem:[%s5568 + $0x68] sm:$0xf]
        %v5596 = vld [vmem:[%s5568 + $0x6c] sm:$0xf]
        %v5597 = vld [vmem:[%s5568 + $0x70] sm:$0xf]
        %v5598 = vld [vmem:[%s5568 + $0x74] sm:$0xf]
        %v5599 = vld [vmem:[%s5568 + $0x78] sm:$0xf]
        %v5600 = vld [vmem:[%s5568 + $0x7c] sm:$0xf]
        %v5602 = vshrl.u32 %v5396, 16
        %v5605 = vshrl.u32 %v5397, 16
        %v5641 = vunpack.c.l.b16 %v5569
        %v5642 = vunpack.c.l.b16 %v5570
        %v5643 = vunpack.c.l.b16 %v5571
        %v5644 = vunpack.c.l.b16 %v5572
        %v5645 = vunpack.c.l.b16 %v5573
        %v5646 = vunpack.c.l.b16 %v5574
        %v5647 = vunpack.c.l.b16 %v5575
        %v5648 = vunpack.c.l.b16 %v5576
        %v5649 = vunpack.c.l.b16 %v5577
        %v5650 = vunpack.c.l.b16 %v5578
        %v5651 = vunpack.c.l.b16 %v5579
        %v5652 = vunpack.c.l.b16 %v5580
        %v5653 = vunpack.c.l.b16 %v5581
        %v5654 = vunpack.c.l.b16 %v5582
        %v5655 = vunpack.c.l.b16 %v5583
        %v5656 = vunpack.c.l.b16 %v5584
        %v5657 = vunpack.c.l.b16 %v5585
        %v5658 = vunpack.c.l.b16 %v5586
        %v5659 = vunpack.c.l.b16 %v5587
        %v5660 = vunpack.c.l.b16 %v5588
        %v5661 = vunpack.c.l.b16 %v5589
        %v5662 = vunpack.c.l.b16 %v5590
        %v5663 = vunpack.c.l.b16 %v5591
        %v5664 = vunpack.c.l.b16 %v5592
        %v5665 = vunpack.c.l.b16 %v5593
        %v5666 = vunpack.c.l.b16 %v5594
        %v5667 = vunpack.c.l.b16 %v5595
        %v5668 = vunpack.c.l.b16 %v5596
        %v5669 = vunpack.c.l.b16 %v5597
        %v5670 = vunpack.c.l.b16 %v5598
        %v5671 = vunpack.c.l.b16 %v5599
        %v5672 = vunpack.c.l.b16 %v5600
        %v5673 = vpack.c.b16 %v5642, %v5641
        %v5674 = vpack.c.b16 %v5644, %v5643
        %v5675 = vpack.c.b16 %v5646, %v5645
        %v5676 = vpack.c.b16 %v5648, %v5647
        %v5677 = vpack.c.b16 %v5650, %v5649
        %v5678 = vpack.c.b16 %v5652, %v5651
        %v5679 = vpack.c.b16 %v5654, %v5653
        %v5680 = vpack.c.b16 %v5656, %v5655
        %v5681 = vpack.c.b16 %v5658, %v5657
        %v5682 = vpack.c.b16 %v5660, %v5659
        %v5683 = vpack.c.b16 %v5662, %v5661
        %v5684 = vpack.c.b16 %v5664, %v5663
        %v5685 = vpack.c.b16 %v5666, %v5665
        %v5686 = vpack.c.b16 %v5668, %v5667
        %v5687 = vpack.c.b16 %v5670, %v5669
        %v5688 = vpack.c.b16 %v5672, %v5671
        %5705 = vmatprep.subr.bf16.mxu0 0
        %5706 = vmatpush1.bf16.msra.mxu0 %v5680
        %5707 = vmatprep.subr.bf16.mxu0 0
        %5708 = vmatpush1.bf16.msra.mxu0 %v5679
        %5709 = vmatprep.subr.bf16.mxu0 0
        %5710 = vmatpush1.bf16.msra.mxu0 %v5678
        %5711 = vmatprep.subr.bf16.mxu0 0
        %5712 = vmatpush1.bf16.msra.mxu0 %v5677
        %5713 = vmatprep.subr.bf16.mxu0 0
        %5714 = vmatpush1.bf16.msra.mxu0 %v5676
        %5715 = vmatprep.subr.bf16.mxu0 0
        %5716 = vmatpush1.bf16.msra.mxu0 %v5675
        %5717 = vmatprep.subr.bf16.mxu0 0
        %5718 = vmatpush1.bf16.msra.mxu0 %v5674
        %5719 = vmatprep.subr.bf16.mxu0 0
        %5720 = vmatpush1.bf16.msra.mxu0 %v5673
        %5721 = vmatprep.subr.bf16.mxu0 0
        %5722 = vmatpush2.bf16.msra.mxu0 %v5688
        %5723 = vmatprep.subr.bf16.mxu0 0
        %5724 = vmatpush2.bf16.msra.mxu0 %v5687
        %5725 = vmatprep.subr.bf16.mxu0 0
        %5726 = vmatpush2.bf16.msra.mxu0 %v5686
        %5727 = vmatprep.subr.bf16.mxu0 0
        %5728 = vmatpush2.bf16.msra.mxu0 %v5685
        %5729 = vmatprep.subr.bf16.mxu0 0
        %5730 = vmatpush2.bf16.msra.mxu0 %v5684
        %5731 = vmatprep.subr.bf16.mxu0 0
        %5732 = vmatpush2.bf16.msra.mxu0 %v5683
        %5733 = vmatprep.subr.bf16.mxu0 0
        %5734 = vmatpush2.bf16.msra.mxu0 %v5682
        %5735 = vmatprep.subr.bf16.mxu0 0
        %5736 = vmatpush2.bf16.msra.mxu0 %v5681
        %5737 = vmatprep.mubr.bf16.mxu0 %v5605
        %5738 = vmatmul.mubr.bf16.gmra.mxu0 %v5602
        %v5739 = vpop.f32.mrf.mxu0
        %v5740 = vadd.f32 0.0, %v5739
        %v5741 = vpop.f32.mrf.mxu0
        %v5742 = vpop.f32.mrf.mxu0
        %v5743 = vpop.f32.mrf.mxu0
        %5744 = vdwg.mxu0
        %v5745 = vadd.f32 %v5567, %v5740
        %v5746 = vmax.f32 %v5745, 0.0
        %v5747 = vld [vmem:[%s5] sm:$0xff]
        %v5748 = vld [vmem:[%s5 + $0x8] sm:$0xff]
        %v5749 = vld [vmem:[%s5 + $0x10] sm:$0xff]
        %v5750 = vld [vmem:[%s5 + $0x18] sm:$0xff]
        %v5751 = vld [vmem:[#allocation2] sm:$0x1]
        %vm5752 = vcmask 261120
        %v5754 = vsel %vm5752, %v5746, 0
        %5756 = vmatprep.subr.mxu0 0.0
        %5757 = vmatpush1.msra.mxu0 0.0
        %5758 = vmatprep.subr.mxu0 0.0
        %5759 = vmatpush1.msra.mxu0 0.0
        %5760 = vmatprep.subr.mxu0 0.0
        %5761 = vmatpush1.msra.mxu0 0.0
        %5762 = vmatprep.subr.mxu0 0.0
        %5763 = vmatpush1.msra.mxu0 0.0
        %5764 = vmatprep.subr.mxu0 0.0
        %5765 = vmatpush1.msra.mxu0 0.0
        %5766 = vmatprep.subr.mxu0 0.0
        %5767 = vmatpush1.msra.mxu0 0.0
        %5768 = vmatprep.subr.mxu0 0.0
        %5769 = vmatpush1.msra.mxu0 0.0
        %5770 = vmatprep.subr.mxu0 0.0
        %5771 = vmatpush1.msra.mxu0 0.0
        %5772 = vmatprep.subr.mxu0 0.0
        %5773 = vmatpush1.msra.mxu0 0.0
        %5774 = vmatprep.subr.mxu0 0.0
        %5775 = vmatpush1.msra.mxu0 0.0
        %5776 = vmatprep.subr.mxu0 0.0
        %5777 = vmatpush1.msra.mxu0 0.0
        %5778 = vmatprep.subr.mxu0 0.0
        %5779 = vmatpush1.msra.mxu0 0.0
        %5780 = vmatprep.subr.mxu0 0.0
        %5781 = vmatpush1.msra.mxu0 %v5750
        %5782 = vmatprep.subr.mxu0 0.0
        %5783 = vmatpush1.msra.mxu0 %v5749
        %5784 = vmatprep.subr.mxu0 0.0
        %5785 = vmatpush1.msra.mxu0 %v5748
        %5786 = vmatprep.subr.mxu0 0.0
        %5787 = vmatpush1.msra.mxu0 %v5747
        %5788 = vmatprep.subr.mxu0 0.0
        %5789 = vmatpush2.msra.mxu0 0.0
        %5790 = vmatprep.subr.mxu0 0.0
        %5791 = vmatpush2.msra.mxu0 0.0
        %5792 = vmatprep.subr.mxu0 0.0
        %5793 = vmatpush2.msra.mxu0 0.0
        %5794 = vmatprep.subr.mxu0 0.0
        %5795 = vmatpush2.msra.mxu0 0.0
        %5796 = vmatprep.subr.mxu0 0.0
        %5797 = vmatpush2.msra.mxu0 0.0
        %5798 = vmatprep.subr.mxu0 0.0
        %5799 = vmatpush2.msra.mxu0 0.0
        %5800 = vmatprep.subr.mxu0 0.0
        %5801 = vmatpush2.msra.mxu0 0.0
        %5802 = vmatprep.subr.mxu0 0.0
        %5803 = vmatpush2.msra.mxu0 0.0
        %5804 = vmatprep.subr.mxu0 0.0
        %5805 = vmatpush2.msra.mxu0 0.0
        %5806 = vmatprep.subr.mxu0 0.0
        %5807 = vmatpush2.msra.mxu0 0.0
        %5808 = vmatprep.subr.mxu0 0.0
        %5809 = vmatpush2.msra.mxu0 0.0
        %5810 = vmatprep.subr.mxu0 0.0
        %5811 = vmatpush2.msra.mxu0 0.0
        %5812 = vmatprep.subr.mxu0 0.0
        %5813 = vmatpush2.msra.mxu0 0.0
        %5814 = vmatprep.subr.mxu0 0.0
        %5815 = vmatpush2.msra.mxu0 0.0
        %5816 = vmatprep.subr.mxu0 0.0
        %5817 = vmatpush2.msra.mxu0 0.0
        %5818 = vmatprep.subr.mxu0 0.0
        %5819 = vmatpush2.msra.mxu0 0.0
        %5820 = vmatprep.mubr.f32.mxu0 0.0
        %5821 = vmatmul.mubr.f32.gmra.mxu0 %v5754
        %v5822 = vpop.f32.mrf.mxu0
        %v5823 = vadd.f32 %v5751, %v5822
        %v5824 = vpop.f32.mrf.mxu0
        %5825 = vdwg.mxu0
        %vm5826 = vcmask 0
        %5827 = vst.msk [vmem:[%s316] sm:$0x1] %vm5826, %v5823
        %p5828 = scmp.lt.s32.totalorder %s22, 1
        %s5829 = scalar_select %p5828, %s22, 1
        %s5830 = scalar_lea.vmem %s7, %s5829
        // Predicated region
        $region61: #{detr_loss_predictor_forward.1} parent=47 // pred_check
          %p5831 = pneg %p192
        $region62: #{detr_loss_predictor_forward.1} parent=47 // pred_check_branch
          %5833 = sbr.rel (%p5831) target = $region64
        $region63: #{detr_loss_predictor_forward.1} parent=47 // pred_region
          _
        $region64: #{detr_loss_predictor_forward.1} parent=47 // pred_fallthru
          _
      $region48: #{detr_loss_predictor_forward.1} parent=5 // pred_fallthru
        _
      %p5834 = scmp.le.s32.totalorder 2, %s17
      // Predicated region
      $region65: #{detr_loss_predictor_forward.1} parent=5 // pred_check
        %p5835 = pneg %p5834
      $region66: #{detr_loss_predictor_forward.1} parent=5 // pred_check_branch
        %5837 = sbr.rel (%p5835) target = $region68
      $region67: #{detr_loss_predictor_forward.1} parent=5 // pred_region
        %s5838 = ssub.s32 %s17, 2
        // Predicated region
        $region69: #{detr_loss_predictor_forward.1} parent=67 // pred_check
          %p5839 = pneg %p198
        $region70: #{detr_loss_predictor_forward.1} parent=67 // pred_check_branch
          %5841 = sbr.rel (%p5839) target = $region72
        $region71: #{detr_loss_predictor_forward.1} parent=67 // pred_region
          %p5842 = scmp.lt.s32.totalorder %s23, 1
          %s5843 = scalar_select %p5842, %s23, 1
          %s5844 = scalar_lea.vmem %s7, %s5843
        $region72: #{detr_loss_predictor_forward.1} parent=67 // pred_fallthru
          _
      $region68: #{detr_loss_predictor_forward.1} parent=5 // pred_fallthru
        _
    $region6: #{detr_loss_predictor_forward.1} parent=1 // loop_footer
      %s21 = sadd.s32 1, %s17
    $region7: #{detr_loss_predictor_forward.1} parent=1 // loop_footer_branch
      %16 = sbr.rel target = $region3
    $region8: #{detr_loss_predictor_forward.1} parent=1 // loop_exit
      _
    %5845 = vsyncpa [#allocation4], 1
    %s5846 = scalar_lea.sflag [#allocation4], 1
    %5847 = vsyncpa %s5846, 1
    %5848 = vsyncpa [#allocation6], 1

</llo_original>
